<compile_context>
chip_gen: v6e
topology: v6e:2x2x1
jax: 0.10.0
libtpu: 0.0.40
codegen_flags: <defaults>
</compile_context>

<pallas_src>
import numpy as np

import jax
import jax.numpy as jnp
from jax.experimental import pallas as pl
from jax.experimental.pallas import tpu as pltpu

nc = 1
ngf = 64
nz = 100
BN_EPS = 1e-5
LANE = 128   # TPU lane width: nz (100) is zero-padded to this for the first GEMM.

# TODO(synk): the original module's BatchNorm2d num_features (ngf*8, ngf*4, ngf*2)
# and the later ConvTranspose2d in_channels are inconsistent with the tensors
# actually produced (nz -> ngf*4 -> ngf*2 -> ngf -> nc) and would raise at
# runtime in PyTorch; the channel counts below follow the real data flow.
LAYER_CFG = [
    # (C_in,    C_out,   K, stride, pad, batchnorm, activation)
    (nz,       ngf * 4, 1, 2,      0,   True,      "relu"),
    (ngf * 4,  ngf * 2, 4, 2,      1,   True,      "relu"),
    (ngf * 2,  ngf,     4, 2,      1,   True,      "relu"),
    (ngf,      nc,      2, 2,      1,   False,     "tanh"),
]


def _spatial_sizes():
    sizes = [1]
    h = 1
    for (_ci, _co, k, s, p, _bn, _act) in LAYER_CFG:
        h = (h - 1) * s - 2 * p + k
        sizes.append(h)
    return sizes


SPATIAL = _spatial_sizes()        # [1, 1, 2, 4, 6]
H_OUT = SPATIAL[-1]               # 6


# --------------------------------------------------------------------------- #
# Kernel
# --------------------------------------------------------------------------- #
def generator_kernel(x_ref, w1_ref, g1_ref, b1_ref, w2_hbm, g2_ref, b2_ref,
                     w3_hbm, g3_ref, b3_ref, w4_hbm, o_ref,
                     xpad_ref, w2_vm, w3_vm, w4_vm, dma_sem):
    n = x_ref.shape[0]

    # Kick off all big-weight HBM->VMEM DMAs immediately; each is waited right
    # before its layer's GEMM so the copies hide behind earlier compute + BN.
    cp_w2 = pltpu.make_async_copy(w2_hbm, w2_vm, dma_sem.at[0])
    cp_w3 = pltpu.make_async_copy(w3_hbm, w3_vm, dma_sem.at[1])
    cp_w4 = pltpu.make_async_copy(w4_hbm, w4_vm, dma_sem.at[2])
    cp_w2.start()
    cp_w3.start()
    cp_w4.start()

    def bn_relu(act, g_ref, b_ref, n_pos, c_per_pos):
        """Training-mode BatchNorm2d + ReLU on a lane-stacked (N, n_pos*c) tile.

        g_ref/b_ref have shape (1, lane_block) where lane_block is the 128-
        aligned stats block (gamma/beta host-tiled when c_per_pos < 128).
        Single pass: sum and sum-of-squares, biased variance, all f32.
        """
        lane_block = g_ref.shape[1]
        nb = act.shape[1] // lane_block
        rsum = jnp.sum(act, axis=0, keepdims=True)          # (1, n_pos*c)
        rsq = jnp.sum(act * act, axis=0, keepdims=True)
        s = rsum[:, :lane_block]
        q = rsq[:, :lane_block]
        for b in range(1, nb):                               # 128-aligned slices
            s = s + rsum[:, b * lane_block:(b + 1) * lane_block]
            q = q + rsq[:, b * lane_block:(b + 1) * lane_block]
        if c_per_pos < lane_block:
            # channels repeat every c_per_pos lanes inside the 128-lane block:
            # fold + duplicate per-channel stats with one lane rotation (XLU).
            s = s + pltpu.roll(s, shift=c_per_pos, axis=1)
            q = q + pltpu.roll(q, shift=c_per_pos, axis=1)
        inv = 1.0 / float(n * n_pos)
        mean = s * inv
        var = q * inv - mean * mean                          # biased (training mode)
        scale = g_ref[...] * jax.lax.rsqrt(var + BN_EPS)     # (1, lane_block)
        shift = b_ref[...] - mean * scale
        if nb > 1:                                           # aligned lane concat
            scale = jnp.concatenate([scale] * nb, axis=1)
            shift = jnp.concatenate([shift] * nb, axis=1)
        return jnp.maximum(act * scale + shift, 0.0)

    # ---- Layer 1: ConvT(nz -> 256, K=1, s=2, p=0) + BN + ReLU;  1x1 -> 1x1 ----
    # Pad the latent to 128 lanes inside the kernel (masked store into scratch).
    xpad_ref[...] = jnp.zeros_like(xpad_ref)
    xpad_ref[:, :nz] = x_ref[...]
    act = jnp.dot(xpad_ref[...].astype(jnp.bfloat16), w1_ref[...],
                  preferred_element_type=jnp.float32)                 # (N, 256)
    act = bn_relu(act, g1_ref, b1_ref, n_pos=1, c_per_pos=ngf * 4)

    # ---- Layer 2: ConvT(256 -> 128, K=4, s=2, p=1) + BN + ReLU; 1x1 -> 2x2 ----
    cp_w2.wait()
    act = jnp.dot(act.astype(jnp.bfloat16), w2_vm[...],
                  preferred_element_type=jnp.float32)                 # (N, 4*128)
    act = bn_relu(act, g2_ref, b2_ref, n_pos=4, c_per_pos=ngf * 2)

    # ---- Layer 3: ConvT(128 -> 64, K=4, s=2, p=1) + BN + ReLU; 2x2 -> 4x4 ----
    cp_w3.wait()
    act = jnp.dot(act.astype(jnp.bfloat16), w3_vm[...],
                  preferred_element_type=jnp.float32)                 # (N, 16*64)
    act = bn_relu(act, g3_ref, b3_ref, n_pos=16, c_per_pos=ngf)

    # ---- Layer 4: ConvT(64 -> 1, K=2, s=2, p=1) + Tanh; 4x4 -> 6x6 ----
    cp_w4.wait()
    out = jnp.dot(act.astype(jnp.bfloat16), w4_vm[...],
                  preferred_element_type=jnp.float32)                 # (N, 36)
    o_ref[...] = jnp.tanh(out)


# --------------------------------------------------------------------------- #
# Host-side parameter construction (col2im folded into dense GEMM weights)
# --------------------------------------------------------------------------- #
def _fold_col2im(w, h_in, K, stride, pad, cin_block, cout_block):
    """Fold a ConvTranspose2d weight (C_in, C_out, K, K) + its output scatter
    into a dense (h_in*h_in*cin_block, h_out*h_out*cout_block) GEMM weight that
    maps a lane-stacked (N, n_in_pos*cin_block) activation directly to the
    lane-stacked (N, n_out_pos*cout_block) output."""
    cin, cout = w.shape[0], w.shape[1]
    h_out = (h_in - 1) * stride - 2 * pad + K
    wf = np.zeros((h_in * h_in * cin_block, h_out * h_out * cout_block), np.float32)
    for hi in range(h_in):
        for wi in range(h_in):
            pi = hi * h_in + wi
            for kh in range(K):
                ho = hi * stride - pad + kh
                if ho < 0 or ho >= h_out:
                    continue
                for kw in range(K):
                    wo = wi * stride - pad + kw
                    if wo < 0 or wo >= h_out:
                        continue
                    po = ho * h_out + wo
                    wf[pi * cin_block:pi * cin_block + cin,
                       po * cout_block:po * cout_block + cout] += w[:, :, kh, kw]
    return wf


def init_generator_params(key):
    keys = jax.random.split(key, len(LAYER_CFG))
    w_pt = []
    for k_, (cin, cout, ksz, _s, _p, _bn, _act) in zip(keys, LAYER_CFG):
        # PyTorch ConvTranspose2d weight layout (C_in, C_out, K, K); DCGAN-style N(0, 0.02).
        w_pt.append(np.asarray(0.02 * jax.random.normal(k_, (cin, cout, ksz, ksz), jnp.float32)))

    (_, c1, k1, s1, p1, _, _) = LAYER_CFG[0]
    (_, c2, k2, s2, p2, _, _) = LAYER_CFG[1]
    (_, c3, k3, s3, p3, _, _) = LAYER_CFG[2]
    (ci4, _, k4, s4, p4, _, _) = LAYER_CFG[3]

    w1 = _fold_col2im(w_pt[0], SPATIAL[0], k1, s1, p1, LANE, c1)      # (128, 256)
    w2 = _fold_col2im(w_pt[1], SPATIAL[1], k2, s2, p2, c1, c2)        # (256, 4*128)
    w3 = _fold_col2im(w_pt[2], SPATIAL[2], k3, s3, p3, c2, c3)        # (512, 16*64)
    w4 = _fold_col2im(w_pt[3], SPATIAL[3], k4, s4, p4, ci4, nc)       # (1024, 36)

    # BatchNorm2d default init (gamma=1, beta=0).  Layer-3 affine is host-tiled
    # to the 128-lane stats block (2 copies of the 64-channel gamma/beta) so it
    # lines up with the kernel's duplicated per-channel statistics.
    g3 = np.tile(np.ones((1, ngf), np.float32), (1, LANE // ngf))
    b3 = np.tile(np.zeros((1, ngf), np.float32), (1, LANE // ngf))

    return dict(
        w1=jnp.asarray(w1, jnp.bfloat16),
        g1=jnp.ones((1, c1), jnp.float32), b1=jnp.zeros((1, c1), jnp.float32),
        w2=jnp.asarray(w2, jnp.bfloat16),
        g2=jnp.ones((1, c2), jnp.float32), b2=jnp.zeros((1, c2), jnp.float32),
        w3=jnp.asarray(w3, jnp.bfloat16),
        g3=jnp.asarray(g3), b3=jnp.asarray(b3),
        w4=jnp.asarray(w4, jnp.bfloat16),
    )


# --------------------------------------------------------------------------- #
# Wrapper
# --------------------------------------------------------------------------- #
@jax.jit
def generator_forward(x_nchw, params):
    n = x_nchw.shape[0]
    x = x_nchw.reshape(n, nz).astype(jnp.float32)   # (N, nz); padded in-kernel.

    vmem = pl.BlockSpec(memory_space=pltpu.MemorySpace.VMEM)
    hbm = pl.BlockSpec(memory_space=pl.ANY)

    out_flat = pl.pallas_call(
        generator_kernel,
        out_shape=jax.ShapeDtypeStruct((n, H_OUT * H_OUT), jnp.float32),
        in_specs=[vmem, vmem, vmem, vmem,   # x, w1, g1, b1
                  hbm, vmem, vmem,          # w2 (HBM), g2, b2
                  hbm, vmem, vmem,          # w3 (HBM), g3, b3
                  hbm],                     # w4 (HBM)
        out_specs=vmem,
        scratch_shapes=[
            pltpu.VMEM((n, LANE), jnp.float32),                 # padded latent
            pltpu.VMEM(params["w2"].shape, jnp.bfloat16),       # w2 landing buffer
            pltpu.VMEM(params["w3"].shape, jnp.bfloat16),       # w3 landing buffer
            pltpu.VMEM(params["w4"].shape, jnp.bfloat16),       # w4 landing buffer
            pltpu.SemaphoreType.DMA((3,)),
        ],
    )(x, params["w1"], params["g1"], params["b1"],
      params["w2"], params["g2"], params["b2"],
      params["w3"], params["g3"], params["b3"],
      params["w4"])

    # Lane-dense (N, H*W) -> NCHW (nc == 1).
    return out_flat.reshape(n, nc, H_OUT, H_OUT)


# Pure-JAX reference of the same (folded-weight, lane-stacked) math, used only
# to validate the Pallas lowering in the self-test below.
def reference_forward(x_nchw, params):
    n = x_nchw.shape[0]
    x = x_nchw.reshape(n, nz).astype(jnp.float32)
    x = jnp.pad(x, ((0, 0), (0, LANE - nz)))

    def bn_relu(act, g, b, n_pos, c_per_pos):
        lane_block = g.shape[1]
        nb = act.shape[1] // lane_block
        a3 = act.reshape(n, nb, lane_block)
        s = jnp.sum(a3, axis=(0, 1))
        q = jnp.sum(a3 * a3, axis=(0, 1))
        if c_per_pos < lane_block:
            s = s + jnp.roll(s, c_per_pos)
            q = q + jnp.roll(q, c_per_pos)
        inv = 1.0 / float(n * n_pos)
        mean = s * inv
        var = q * inv - mean * mean
        scale = g[0] * jax.lax.rsqrt(var + BN_EPS)
        shift = b[0] - mean * scale
        scale = jnp.tile(scale, nb)
        shift = jnp.tile(shift, nb)
        return jnp.maximum(act * scale + shift, 0.0)

    act = jnp.dot(x.astype(jnp.bfloat16), params["w1"], preferred_element_type=jnp.float32)
    act = bn_relu(act, params["g1"], params["b1"], 1, ngf * 4)
    act = jnp.dot(act.astype(jnp.bfloat16), params["w2"], preferred_element_type=jnp.float32)
    act = bn_relu(act, params["g2"], params["b2"], 4, ngf * 2)
    act = jnp.dot(act.astype(jnp.bfloat16), params["w3"], preferred_element_type=jnp.float32)
    act = bn_relu(act, params["g3"], params["b3"], 16, ngf)
    out = jnp.dot(act.astype(jnp.bfloat16), params["w4"], preferred_element_type=jnp.float32)
    return jnp.tanh(out).reshape(n, nc, H_OUT, H_OUT)


if __name__ == "__main__":
    key = jax.random.PRNGKey(0)
    pkey, xkey = jax.random.split(key)
    params = init_generator_params(pkey)

    # DCGAN latent input: (N, nz, 1, 1); small batch of 2.
    x = jax.random.normal(xkey, (2, nz, 1, 1), jnp.float32)

    out = generator_forward(x, params)
    out = jax.block_until_ready(out)

    # 1x1 -> 1x1 -> 2x2 -> 4x4 -> 6x6 spatial; tanh output in [-1, 1].
    assert out.shape == (2, nc, 6, 6), out.shape
    assert bool(jnp.all(jnp.isfinite(out)))
    assert bool(jnp.all(jnp.abs(out) <= 1.0 + 1e-6))

    ref = jax.block_until_ready(reference_forward(x, params))
    max_err = float(jnp.max(jnp.abs(out - ref)))
    assert max_err < 2e-2, f"kernel/reference mismatch: {max_err}"

    print("KERNEL_OK")
</pallas_src>

<mosaic_0001>
module attributes {stable_mosaic.version = 11 : i64} {
  func.func @generator_kernel(%arg0: memref<2x100xf32, #tpu.memory_space<vmem>>, %arg1: memref<128x256xbf16, #tpu.memory_space<vmem>>, %arg2: memref<1x256xf32, #tpu.memory_space<vmem>>, %arg3: memref<1x256xf32, #tpu.memory_space<vmem>>, %arg4: memref<256x512xbf16, #tpu.memory_space<any>>, %arg5: memref<1x128xf32, #tpu.memory_space<vmem>>, %arg6: memref<1x128xf32, #tpu.memory_space<vmem>>, %arg7: memref<512x1024xbf16, #tpu.memory_space<any>>, %arg8: memref<1x128xf32, #tpu.memory_space<vmem>>, %arg9: memref<1x128xf32, #tpu.memory_space<vmem>>, %arg10: memref<1024x36xbf16, #tpu.memory_space<any>>, %arg11: memref<2x36xf32, #tpu.memory_space<vmem>>, %arg12: memref<2x128xf32, #tpu.memory_space<vmem>>, %arg13: memref<256x512xbf16, #tpu.memory_space<vmem>>, %arg14: memref<512x1024xbf16, #tpu.memory_space<vmem>>, %arg15: memref<1024x36xbf16, #tpu.memory_space<vmem>>, %arg16: memref<3x!tpu.dma_semaphore, #tpu.memory_space<semaphore_mem>>) attributes {dimension_semantics = [], scalar_prefetch = 0 : i64, scratch_operands = 5 : i64, tpu.core_type = #tpu.core_type<tc>} {
    %c0_i32 = arith.constant 0 : i32
    %0 = tpu.memref_slice %arg16[%c0_i32] : memref<3x!tpu.dma_semaphore, #tpu.memory_space<semaphore_mem>> -> memref<1x!tpu.dma_semaphore, #tpu.memory_space<semaphore_mem>>
    %1 = tpu.memref_squeeze %0 : memref<1x!tpu.dma_semaphore, #tpu.memory_space<semaphore_mem>> -> memref<!tpu.dma_semaphore, #tpu.memory_space<semaphore_mem>>
    tpu.enqueue_dma source(%arg4 : memref<256x512xbf16, #tpu.memory_space<any>>) target(%arg13 : memref<256x512xbf16, #tpu.memory_space<vmem>>) target_semaphore(%1 : memref<!tpu.dma_semaphore, #tpu.memory_space<semaphore_mem>>)
    %c1_i32 = arith.constant 1 : i32
    %2 = tpu.memref_slice %arg16[%c1_i32] : memref<3x!tpu.dma_semaphore, #tpu.memory_space<semaphore_mem>> -> memref<1x!tpu.dma_semaphore, #tpu.memory_space<semaphore_mem>>
    %3 = tpu.memref_squeeze %2 : memref<1x!tpu.dma_semaphore, #tpu.memory_space<semaphore_mem>> -> memref<!tpu.dma_semaphore, #tpu.memory_space<semaphore_mem>>
    tpu.enqueue_dma source(%arg7 : memref<512x1024xbf16, #tpu.memory_space<any>>) target(%arg14 : memref<512x1024xbf16, #tpu.memory_space<vmem>>) target_semaphore(%3 : memref<!tpu.dma_semaphore, #tpu.memory_space<semaphore_mem>>)
    %c2_i32 = arith.constant 2 : i32
    %4 = tpu.memref_slice %arg16[%c2_i32] : memref<3x!tpu.dma_semaphore, #tpu.memory_space<semaphore_mem>> -> memref<1x!tpu.dma_semaphore, #tpu.memory_space<semaphore_mem>>
    %5 = tpu.memref_squeeze %4 : memref<1x!tpu.dma_semaphore, #tpu.memory_space<semaphore_mem>> -> memref<!tpu.dma_semaphore, #tpu.memory_space<semaphore_mem>>
    tpu.enqueue_dma source(%arg10 : memref<1024x36xbf16, #tpu.memory_space<any>>) target(%arg15 : memref<1024x36xbf16, #tpu.memory_space<vmem>>) target_semaphore(%5 : memref<!tpu.dma_semaphore, #tpu.memory_space<semaphore_mem>>)
    %cst = arith.constant 0.000000e+00 : f32
    %6 = vector.broadcast %cst : f32 to vector<2x128xf32>
    %c0 = arith.constant 0 : index
    %c0_0 = arith.constant 0 : index
    %7 = vector.load %arg12[%c0, %c0_0] : memref<2x128xf32, #tpu.memory_space<vmem>>, vector<2x128xf32>
    tpu.vector_store %arg12[%c0, %c0_0], %6 {strides = array<i32>} : memref<2x128xf32, #tpu.memory_space<vmem>>, vector<2x128xf32>,
    %c0_1 = arith.constant 0 : index
    %c0_2 = arith.constant 0 : index
    %8 = vector.load %arg0[%c0_1, %c0_2] : memref<2x100xf32, #tpu.memory_space<vmem>>, vector<2x100xf32>
    %c0_3 = arith.constant 0 : index
    %c0_4 = arith.constant 0 : index
    %9 = vector.load %arg12[%c0_3, %c0_4] : memref<2x128xf32, #tpu.memory_space<vmem>>, vector<2x100xf32>
    tpu.vector_store %arg12[%c0_3, %c0_4], %8 {strides = array<i32>} : memref<2x128xf32, #tpu.memory_space<vmem>>, vector<2x100xf32>,
    %c0_5 = arith.constant 0 : index
    %c0_6 = arith.constant 0 : index
    %10 = vector.load %arg12[%c0_5, %c0_6] : memref<2x128xf32, #tpu.memory_space<vmem>>, vector<2x128xf32>
    %11 = arith.truncf %10 : vector<2x128xf32> to vector<2x128xbf16>
    %c0_7 = arith.constant 0 : index
    %c0_8 = arith.constant 0 : index
    %12 = vector.load %arg1[%c0_7, %c0_8] : memref<128x256xbf16, #tpu.memory_space<vmem>>, vector<128x256xbf16>
    %cst_9 = arith.constant dense<0.000000e+00> : vector<2x256xf32>
    %13 = tpu.matmul %11, %12, %cst_9 {dimension_numbers = #tpu.dot_dimension_numbers<[1], [0], [0], [1], [0, 0, 1, 1], [], []>} : vector<2x128xbf16>, vector<128x256xbf16>, vector<2x256xf32> -> vector<2x256xf32>
    %cst_10 = arith.constant dense<0.000000e+00> : vector<256xf32>
    %14 = vector.multi_reduction <add>, %13, %cst_10 [0] : vector<2x256xf32> to vector<256xf32>
    %15 = vector.shape_cast %14 : vector<256xf32> to vector<1x256xf32>
    %16 = arith.mulf %13, %13 : vector<2x256xf32>
    %cst_11 = arith.constant dense<0.000000e+00> : vector<256xf32>
    %17 = vector.multi_reduction <add>, %16, %cst_11 [0] : vector<2x256xf32> to vector<256xf32>
    %18 = vector.shape_cast %17 : vector<256xf32> to vector<1x256xf32>
    %cst_12 = arith.constant 5.000000e-01 : f32
    %19 = vector.broadcast %cst_12 : f32 to vector<1x256xf32>
    %20 = arith.mulf %15, %19 : vector<1x256xf32>
    %cst_13 = arith.constant 5.000000e-01 : f32
    %21 = vector.broadcast %cst_13 : f32 to vector<1x256xf32>
    %22 = arith.mulf %18, %21 : vector<1x256xf32>
    %23 = arith.mulf %20, %20 : vector<1x256xf32>
    %24 = arith.subf %22, %23 : vector<1x256xf32>
    %c0_14 = arith.constant 0 : index
    %c0_15 = arith.constant 0 : index
    %25 = vector.load %arg2[%c0_14, %c0_15] : memref<1x256xf32, #tpu.memory_space<vmem>>, vector<1x256xf32>
    %cst_16 = arith.constant 9.99999974E-6 : f32
    %26 = vector.broadcast %cst_16 : f32 to vector<1x256xf32>
    %27 = arith.addf %24, %26 : vector<1x256xf32>
    %28 = math.rsqrt %27 : vector<1x256xf32>
    %29 = arith.mulf %25, %28 : vector<1x256xf32>
    %c0_17 = arith.constant 0 : index
    %c0_18 = arith.constant 0 : index
    %30 = vector.load %arg3[%c0_17, %c0_18] : memref<1x256xf32, #tpu.memory_space<vmem>>, vector<1x256xf32>
    %31 = arith.mulf %20, %29 : vector<1x256xf32>
    %32 = arith.subf %30, %31 : vector<1x256xf32>
    %33 = vector.broadcast %29 : vector<1x256xf32> to vector<2x256xf32>
    %34 = arith.mulf %13, %33 : vector<2x256xf32>
    %35 = vector.broadcast %32 : vector<1x256xf32> to vector<2x256xf32>
    %36 = arith.addf %34, %35 : vector<2x256xf32>
    %cst_19 = arith.constant 0.000000e+00 : f32
    %37 = vector.broadcast %cst_19 : f32 to vector<2x256xf32>
    %38 = arith.maximumf %36, %37 : vector<2x256xf32>
    %c0_i32_20 = arith.constant 0 : i32
    %39 = tpu.memref_slice %arg16[%c0_i32_20] : memref<3x!tpu.dma_semaphore, #tpu.memory_space<semaphore_mem>> -> memref<1x!tpu.dma_semaphore, #tpu.memory_space<semaphore_mem>>
    %40 = tpu.memref_squeeze %39 : memref<1x!tpu.dma_semaphore, #tpu.memory_space<semaphore_mem>> -> memref<!tpu.dma_semaphore, #tpu.memory_space<semaphore_mem>>
    tpu.wait_dma2 semaphore(%40 : memref<!tpu.dma_semaphore, #tpu.memory_space<semaphore_mem>>) src(%arg4 : memref<256x512xbf16, #tpu.memory_space<any>>) dst(%arg13 : memref<256x512xbf16, #tpu.memory_space<vmem>>)
    %41 = arith.truncf %38 : vector<2x256xf32> to vector<2x256xbf16>
    %c0_21 = arith.constant 0 : index
    %c0_22 = arith.constant 0 : index
    %42 = vector.load %arg13[%c0_21, %c0_22] : memref<256x512xbf16, #tpu.memory_space<vmem>>, vector<256x512xbf16>
    %cst_23 = arith.constant dense<0.000000e+00> : vector<2x512xf32>
    %43 = tpu.matmul %41, %42, %cst_23 {dimension_numbers = #tpu.dot_dimension_numbers<[1], [0], [0], [1], [0, 0, 1, 1], [], []>} : vector<2x256xbf16>, vector<256x512xbf16>, vector<2x512xf32> -> vector<2x512xf32>
    %cst_24 = arith.constant dense<0.000000e+00> : vector<512xf32>
    %44 = vector.multi_reduction <add>, %43, %cst_24 [0] : vector<2x512xf32> to vector<512xf32>
    %45 = vector.shape_cast %44 : vector<512xf32> to vector<1x512xf32>
    %46 = arith.mulf %43, %43 : vector<2x512xf32>
    %cst_25 = arith.constant dense<0.000000e+00> : vector<512xf32>
    %47 = vector.multi_reduction <add>, %46, %cst_25 [0] : vector<2x512xf32> to vector<512xf32>
    %48 = vector.shape_cast %47 : vector<512xf32> to vector<1x512xf32>
    %49 = vector.extract_strided_slice %45 {offsets = [0, 0], sizes = [1, 128], strides = [1, 1]} : vector<1x512xf32> to vector<1x128xf32>
    %50 = vector.extract_strided_slice %48 {offsets = [0, 0], sizes = [1, 128], strides = [1, 1]} : vector<1x512xf32> to vector<1x128xf32>
    %51 = vector.extract_strided_slice %45 {offsets = [0, 128], sizes = [1, 128], strides = [1, 1]} : vector<1x512xf32> to vector<1x128xf32>
    %52 = arith.addf %49, %51 : vector<1x128xf32>
    %53 = vector.extract_strided_slice %48 {offsets = [0, 128], sizes = [1, 128], strides = [1, 1]} : vector<1x512xf32> to vector<1x128xf32>
    %54 = arith.addf %50, %53 : vector<1x128xf32>
    %55 = vector.extract_strided_slice %45 {offsets = [0, 256], sizes = [1, 128], strides = [1, 1]} : vector<1x512xf32> to vector<1x128xf32>
    %56 = arith.addf %52, %55 : vector<1x128xf32>
    %57 = vector.extract_strided_slice %48 {offsets = [0, 256], sizes = [1, 128], strides = [1, 1]} : vector<1x512xf32> to vector<1x128xf32>
    %58 = arith.addf %54, %57 : vector<1x128xf32>
    %59 = vector.extract_strided_slice %45 {offsets = [0, 384], sizes = [1, 128], strides = [1, 1]} : vector<1x512xf32> to vector<1x128xf32>
    %60 = arith.addf %56, %59 : vector<1x128xf32>
    %61 = vector.extract_strided_slice %48 {offsets = [0, 384], sizes = [1, 128], strides = [1, 1]} : vector<1x512xf32> to vector<1x128xf32>
    %62 = arith.addf %58, %61 : vector<1x128xf32>
    %cst_26 = arith.constant 1.250000e-01 : f32
    %63 = vector.broadcast %cst_26 : f32 to vector<1x128xf32>
    %64 = arith.mulf %60, %63 : vector<1x128xf32>
    %cst_27 = arith.constant 1.250000e-01 : f32
    %65 = vector.broadcast %cst_27 : f32 to vector<1x128xf32>
    %66 = arith.mulf %62, %65 : vector<1x128xf32>
    %67 = arith.mulf %64, %64 : vector<1x128xf32>
    %68 = arith.subf %66, %67 : vector<1x128xf32>
    %c0_28 = arith.constant 0 : index
    %c0_29 = arith.constant 0 : index
    %69 = vector.load %arg5[%c0_28, %c0_29] : memref<1x128xf32, #tpu.memory_space<vmem>>, vector<1x128xf32>
    %cst_30 = arith.constant 9.99999974E-6 : f32
    %70 = vector.broadcast %cst_30 : f32 to vector<1x128xf32>
    %71 = arith.addf %68, %70 : vector<1x128xf32>
    %72 = math.rsqrt %71 : vector<1x128xf32>
    %73 = arith.mulf %69, %72 : vector<1x128xf32>
    %c0_31 = arith.constant 0 : index
    %c0_32 = arith.constant 0 : index
    %74 = vector.load %arg6[%c0_31, %c0_32] : memref<1x128xf32, #tpu.memory_space<vmem>>, vector<1x128xf32>
    %75 = arith.mulf %64, %73 : vector<1x128xf32>
    %76 = arith.subf %74, %75 : vector<1x128xf32>
    %77 = tpu.concatenate %73, %73, %73, %73 in 1 : vector<1x128xf32>, vector<1x128xf32>, vector<1x128xf32>, vector<1x128xf32> -> vector<1x512xf32>
    %78 = tpu.concatenate %76, %76, %76, %76 in 1 : vector<1x128xf32>, vector<1x128xf32>, vector<1x128xf32>, vector<1x128xf32> -> vector<1x512xf32>
    %79 = vector.broadcast %77 : vector<1x512xf32> to vector<2x512xf32>
    %80 = arith.mulf %43, %79 : vector<2x512xf32>
    %81 = vector.broadcast %78 : vector<1x512xf32> to vector<2x512xf32>
    %82 = arith.addf %80, %81 : vector<2x512xf32>
    %cst_33 = arith.constant 0.000000e+00 : f32
    %83 = vector.broadcast %cst_33 : f32 to vector<2x512xf32>
    %84 = arith.maximumf %82, %83 : vector<2x512xf32>
    %c1_i32_34 = arith.constant 1 : i32
    %85 = tpu.memref_slice %arg16[%c1_i32_34] : memref<3x!tpu.dma_semaphore, #tpu.memory_space<semaphore_mem>> -> memref<1x!tpu.dma_semaphore, #tpu.memory_space<semaphore_mem>>
    %86 = tpu.memref_squeeze %85 : memref<1x!tpu.dma_semaphore, #tpu.memory_space<semaphore_mem>> -> memref<!tpu.dma_semaphore, #tpu.memory_space<semaphore_mem>>
    tpu.wait_dma2 semaphore(%86 : memref<!tpu.dma_semaphore, #tpu.memory_space<semaphore_mem>>) src(%arg7 : memref<512x1024xbf16, #tpu.memory_space<any>>) dst(%arg14 : memref<512x1024xbf16, #tpu.memory_space<vmem>>)
    %87 = arith.truncf %84 : vector<2x512xf32> to vector<2x512xbf16>
    %c0_35 = arith.constant 0 : index
    %c0_36 = arith.constant 0 : index
    %88 = vector.load %arg14[%c0_35, %c0_36] : memref<512x1024xbf16, #tpu.memory_space<vmem>>, vector<512x1024xbf16>
    %cst_37 = arith.constant dense<0.000000e+00> : vector<2x1024xf32>
    %89 = tpu.matmul %87, %88, %cst_37 {dimension_numbers = #tpu.dot_dimension_numbers<[1], [0], [0], [1], [0, 0, 1, 1], [], []>} : vector<2x512xbf16>, vector<512x1024xbf16>, vector<2x1024xf32> -> vector<2x1024xf32>
    %cst_38 = arith.constant dense<0.000000e+00> : vector<1024xf32>
    %90 = vector.multi_reduction <add>, %89, %cst_38 [0] : vector<2x1024xf32> to vector<1024xf32>
    %91 = vector.shape_cast %90 : vector<1024xf32> to vector<1x1024xf32>
    %92 = arith.mulf %89, %89 : vector<2x1024xf32>
    %cst_39 = arith.constant dense<0.000000e+00> : vector<1024xf32>
    %93 = vector.multi_reduction <add>, %92, %cst_39 [0] : vector<2x1024xf32> to vector<1024xf32>
    %94 = vector.shape_cast %93 : vector<1024xf32> to vector<1x1024xf32>
    %95 = vector.extract_strided_slice %91 {offsets = [0, 0], sizes = [1, 128], strides = [1, 1]} : vector<1x1024xf32> to vector<1x128xf32>
    %96 = vector.extract_strided_slice %94 {offsets = [0, 0], sizes = [1, 128], strides = [1, 1]} : vector<1x1024xf32> to vector<1x128xf32>
    %97 = vector.extract_strided_slice %91 {offsets = [0, 128], sizes = [1, 128], strides = [1, 1]} : vector<1x1024xf32> to vector<1x128xf32>
    %98 = arith.addf %95, %97 : vector<1x128xf32>
    %99 = vector.extract_strided_slice %94 {offsets = [0, 128], sizes = [1, 128], strides = [1, 1]} : vector<1x1024xf32> to vector<1x128xf32>
    %100 = arith.addf %96, %99 : vector<1x128xf32>
    %101 = vector.extract_strided_slice %91 {offsets = [0, 256], sizes = [1, 128], strides = [1, 1]} : vector<1x1024xf32> to vector<1x128xf32>
    %102 = arith.addf %98, %101 : vector<1x128xf32>
    %103 = vector.extract_strided_slice %94 {offsets = [0, 256], sizes = [1, 128], strides = [1, 1]} : vector<1x1024xf32> to vector<1x128xf32>
    %104 = arith.addf %100, %103 : vector<1x128xf32>
    %105 = vector.extract_strided_slice %91 {offsets = [0, 384], sizes = [1, 128], strides = [1, 1]} : vector<1x1024xf32> to vector<1x128xf32>
    %106 = arith.addf %102, %105 : vector<1x128xf32>
    %107 = vector.extract_strided_slice %94 {offsets = [0, 384], sizes = [1, 128], strides = [1, 1]} : vector<1x1024xf32> to vector<1x128xf32>
    %108 = arith.addf %104, %107 : vector<1x128xf32>
    %109 = vector.extract_strided_slice %91 {offsets = [0, 512], sizes = [1, 128], strides = [1, 1]} : vector<1x1024xf32> to vector<1x128xf32>
    %110 = arith.addf %106, %109 : vector<1x128xf32>
    %111 = vector.extract_strided_slice %94 {offsets = [0, 512], sizes = [1, 128], strides = [1, 1]} : vector<1x1024xf32> to vector<1x128xf32>
    %112 = arith.addf %108, %111 : vector<1x128xf32>
    %113 = vector.extract_strided_slice %91 {offsets = [0, 640], sizes = [1, 128], strides = [1, 1]} : vector<1x1024xf32> to vector<1x128xf32>
    %114 = arith.addf %110, %113 : vector<1x128xf32>
    %115 = vector.extract_strided_slice %94 {offsets = [0, 640], sizes = [1, 128], strides = [1, 1]} : vector<1x1024xf32> to vector<1x128xf32>
    %116 = arith.addf %112, %115 : vector<1x128xf32>
    %117 = vector.extract_strided_slice %91 {offsets = [0, 768], sizes = [1, 128], strides = [1, 1]} : vector<1x1024xf32> to vector<1x128xf32>
    %118 = arith.addf %114, %117 : vector<1x128xf32>
    %119 = vector.extract_strided_slice %94 {offsets = [0, 768], sizes = [1, 128], strides = [1, 1]} : vector<1x1024xf32> to vector<1x128xf32>
    %120 = arith.addf %116, %119 : vector<1x128xf32>
    %121 = vector.extract_strided_slice %91 {offsets = [0, 896], sizes = [1, 128], strides = [1, 1]} : vector<1x1024xf32> to vector<1x128xf32>
    %122 = arith.addf %118, %121 : vector<1x128xf32>
    %123 = vector.extract_strided_slice %94 {offsets = [0, 896], sizes = [1, 128], strides = [1, 1]} : vector<1x1024xf32> to vector<1x128xf32>
    %124 = arith.addf %120, %123 : vector<1x128xf32>
    %c64_i32 = arith.constant 64 : i32
    %125 = tpu.dynamic_rotate %122 by %c64_i32 dim 1 : vector<1x128xf32>, i32 -> vector<1x128xf32>
    %126 = arith.addf %122, %125 : vector<1x128xf32>
    %c64_i32_40 = arith.constant 64 : i32
    %127 = tpu.dynamic_rotate %124 by %c64_i32_40 dim 1 : vector<1x128xf32>, i32 -> vector<1x128xf32>
    %128 = arith.addf %124, %127 : vector<1x128xf32>
    %cst_41 = arith.constant 3.125000e-02 : f32
    %129 = vector.broadcast %cst_41 : f32 to vector<1x128xf32>
    %130 = arith.mulf %126, %129 : vector<1x128xf32>
    %cst_42 = arith.constant 3.125000e-02 : f32
    %131 = vector.broadcast %cst_42 : f32 to vector<1x128xf32>
    %132 = arith.mulf %128, %131 : vector<1x128xf32>
    %133 = arith.mulf %130, %130 : vector<1x128xf32>
    %134 = arith.subf %132, %133 : vector<1x128xf32>
    %c0_43 = arith.constant 0 : index
    %c0_44 = arith.constant 0 : index
    %135 = vector.load %arg8[%c0_43, %c0_44] : memref<1x128xf32, #tpu.memory_space<vmem>>, vector<1x128xf32>
    %cst_45 = arith.constant 9.99999974E-6 : f32
    %136 = vector.broadcast %cst_45 : f32 to vector<1x128xf32>
    %137 = arith.addf %134, %136 : vector<1x128xf32>
    %138 = math.rsqrt %137 : vector<1x128xf32>
    %139 = arith.mulf %135, %138 : vector<1x128xf32>
    %c0_46 = arith.constant 0 : index
    %c0_47 = arith.constant 0 : index
    %140 = vector.load %arg9[%c0_46, %c0_47] : memref<1x128xf32, #tpu.memory_space<vmem>>, vector<1x128xf32>
    %141 = arith.mulf %130, %139 : vector<1x128xf32>
    %142 = arith.subf %140, %141 : vector<1x128xf32>
    %143 = tpu.concatenate %139, %139, %139, %139, %139, %139, %139, %139 in 1 : vector<1x128xf32>, vector<1x128xf32>, vector<1x128xf32>, vector<1x128xf32>, vector<1x128xf32>, vector<1x128xf32>, vector<1x128xf32>, vector<1x128xf32> -> vector<1x1024xf32>
    %144 = tpu.concatenate %142, %142, %142, %142, %142, %142, %142, %142 in 1 : vector<1x128xf32>, vector<1x128xf32>, vector<1x128xf32>, vector<1x128xf32>, vector<1x128xf32>, vector<1x128xf32>, vector<1x128xf32>, vector<1x128xf32> -> vector<1x1024xf32>
    %145 = vector.broadcast %143 : vector<1x1024xf32> to vector<2x1024xf32>
    %146 = arith.mulf %89, %145 : vector<2x1024xf32>
    %147 = vector.broadcast %144 : vector<1x1024xf32> to vector<2x1024xf32>
    %148 = arith.addf %146, %147 : vector<2x1024xf32>
    %cst_48 = arith.constant 0.000000e+00 : f32
    %149 = vector.broadcast %cst_48 : f32 to vector<2x1024xf32>
    %150 = arith.maximumf %148, %149 : vector<2x1024xf32>
    %c2_i32_49 = arith.constant 2 : i32
    %151 = tpu.memref_slice %arg16[%c2_i32_49] : memref<3x!tpu.dma_semaphore, #tpu.memory_space<semaphore_mem>> -> memref<1x!tpu.dma_semaphore, #tpu.memory_space<semaphore_mem>>
    %152 = tpu.memref_squeeze %151 : memref<1x!tpu.dma_semaphore, #tpu.memory_space<semaphore_mem>> -> memref<!tpu.dma_semaphore, #tpu.memory_space<semaphore_mem>>
    tpu.wait_dma2 semaphore(%152 : memref<!tpu.dma_semaphore, #tpu.memory_space<semaphore_mem>>) src(%arg10 : memref<1024x36xbf16, #tpu.memory_space<any>>) dst(%arg15 : memref<1024x36xbf16, #tpu.memory_space<vmem>>)
    %153 = arith.truncf %150 : vector<2x1024xf32> to vector<2x1024xbf16>
    %c0_50 = arith.constant 0 : index
    %c0_51 = arith.constant 0 : index
    %154 = vector.load %arg15[%c0_50, %c0_51] : memref<1024x36xbf16, #tpu.memory_space<vmem>>, vector<1024x36xbf16>
    %cst_52 = arith.constant dense<0.000000e+00> : vector<2x36xf32>
    %155 = tpu.matmul %153, %154, %cst_52 {dimension_numbers = #tpu.dot_dimension_numbers<[1], [0], [0], [1], [0, 0, 1, 1], [], []>} : vector<2x1024xbf16>, vector<1024x36xbf16>, vector<2x36xf32> -> vector<2x36xf32>
    %156 = math.tanh %155 : vector<2x36xf32>
    %c0_53 = arith.constant 0 : index
    %c0_54 = arith.constant 0 : index
    %157 = vector.load %arg11[%c0_53, %c0_54] : memref<2x36xf32, #tpu.memory_space<vmem>>, vector<2x36xf32>
    tpu.vector_store %arg11[%c0_53, %c0_54], %156 {strides = array<i32>} : memref<2x36xf32, #tpu.memory_space<vmem>>, vector<2x36xf32>,
    return
  }
}

</mosaic_0001>

<llo_original>
// kernel: generator_forward.1
$region0: #{generator_forward.1}
  #allocation0 [shape = 'u32[]', space=smem, size = 0x4, offset = 0x4, fixed_abs, tag = 'smem constant byte address 0x4 - core index']
  #allocation1 [shape = 'u32[144,128]{1,0:T(1,128)}', space=vmem, size = 0x12000, scoped, tag = 'internal scratch']
  #allocation2 [shape = 'f32[2,128]{1,0:T(2,128)}', space=vmem, size = 0x400, scoped, tag = 'scratch operand']
  #allocation3 [shape = 'bf16[256,512]{1,0:T(8,128)(2,1)}', space=vmem, size = 0x40000, scoped, tag = 'scratch operand']
  #allocation4 [shape = 'bf16[512,1024]{1,0:T(8,128)(2,1)}', space=vmem, size = 0x100000, scoped, tag = 'scratch operand']
  #allocation5 [shape = 'bf16[1024,36]{1,0:T(8,128)(2,1)}', space=vmem, size = 0x40000, scoped, tag = 'scratch operand']
  #allocation6 [shape = 's32[3]{0}', space=sflag, size = 0xc, scoped, tag = 'scratch operand']
  #allocation7 [shape = 's32[]', space=sflag, size = 0x4, offset = 0, fixed_abs, tag = 'sflag constant byte address 0x0 - dummy sync flag']
  #allocation8 [shape = 's32[]', space=sflag, size = 0x4, offset = 0, fixed_abs, tag = 'sflag constant byte address 0x0 - dummy sync flag']
  #allocation9 [shape = 's32[]', space=sflag, size = 0x4, offset = 0, fixed_abs, tag = 'sflag constant byte address 0x0 - dummy sync flag']
  #allocation10 [shape = 'u32[]', space=smem, size = 0x4, offset = 0x44, fixed_abs, tag = 'smem constant byte address 0x44 - assertion arg 0']
  #allocation11 [shape = 'u32[]', space=smem, size = 0x4, offset = 0x48, fixed_abs, tag = 'smem constant byte address 0x48 - assertion arg 1']
  #allocation12 [shape = 's32[]', space=sflag, size = 0x4, offset = 0, fixed_abs, tag = 'sflag constant byte address 0x0 - dummy sync flag']
  %s0 = inlined_call_operand.vmem [shape: f32[2,100], index: 0, kind: input, shape index: {}]
  %s1 = inlined_call_operand.vmem [shape: bf16[128,256], index: 1, kind: input, shape index: {}]
  %s2 = inlined_call_operand.vmem [shape: f32[1,256], index: 2, kind: input, shape index: {}]
  %s3 = inlined_call_operand.vmem [shape: f32[1,256], index: 3, kind: input, shape index: {}]
  %s4 = inlined_call_operand.vmem [shape: bf16[256,512], index: 4, kind: input, shape index: {}]
  %s5 = inlined_call_operand.vmem [shape: f32[1,128], index: 5, kind: input, shape index: {}]
  %s6 = inlined_call_operand.vmem [shape: f32[1,128], index: 6, kind: input, shape index: {}]
  %s7 = inlined_call_operand.hbm [shape: bf16[512,1024], index: 7, kind: input, shape index: {}]
  %s8 = inlined_call_operand.vmem [shape: f32[1,128], index: 8, kind: input, shape index: {}]
  %s9 = inlined_call_operand.vmem [shape: f32[1,128], index: 9, kind: input, shape index: {}]
  %s10 = inlined_call_operand.vmem [shape: bf16[1024,36], index: 10, kind: input, shape index: {}]
  %s11 = inlined_call_operand.vmem [shape: f32[2,36], index: 11, kind: output, shape index: {}]
  %s12 = sld [smem:[#allocation0]]
  $region114: #{generator_forward.1} parent=0
    _
  %s14 = ssub.s32 1, %s12
  %s15 = scalar_select 0, %s14, %s12
  // Predicated region
  $region2: #{generator_forward.1} parent=0 // pred_check
    _
  $region3: #{generator_forward.1} parent=0 // pred_check_branch
    %17 = sbr.rel (0) target = $region5
  $region4: #{generator_forward.1} parent=0 // pred_region
    _
  $region5: #{generator_forward.1} parent=0 // pred_fallthru
    _
  // Predicated region
  $region6: #{generator_forward.1} parent=0 // pred_check
    _
  $region7: #{generator_forward.1} parent=0 // pred_check_branch
    %19 = sbr.rel (0) target = $region9
  $region8: #{generator_forward.1} parent=0 // pred_region
    _
  $region9: #{generator_forward.1} parent=0 // pred_fallthru
    _
  // Predicated region
  $region10: #{generator_forward.1} parent=0 // pred_check
    _
  $region11: #{generator_forward.1} parent=0 // pred_check_branch
    %21 = sbr.rel (0) target = $region13
  $region12: #{generator_forward.1} parent=0 // pred_region
    _
  $region13: #{generator_forward.1} parent=0 // pred_fallthru
    _
  // Predicated region
  $region14: #{generator_forward.1} parent=0 // pred_check
    _
  $region15: #{generator_forward.1} parent=0 // pred_check_branch
    %23 = sbr.rel (0) target = $region17
  $region16: #{generator_forward.1} parent=0 // pred_region
    _
  $region17: #{generator_forward.1} parent=0 // pred_fallthru
    _
  // Predicated region
  $region18: #{generator_forward.1} parent=0 // pred_check
    _
  $region19: #{generator_forward.1} parent=0 // pred_check_branch
    %25 = sbr.rel (0) target = $region21
  $region20: #{generator_forward.1} parent=0 // pred_region
    _
  $region21: #{generator_forward.1} parent=0 // pred_fallthru
    _
  // Predicated region
  $region22: #{generator_forward.1} parent=0 // pred_check
    _
  $region23: #{generator_forward.1} parent=0 // pred_check_branch
    %27 = sbr.rel (0) target = $region25
  $region24: #{generator_forward.1} parent=0 // pred_region
    _
  $region25: #{generator_forward.1} parent=0 // pred_fallthru
    _
  // Predicated region
  $region26: #{generator_forward.1} parent=0 // pred_check
    _
  $region27: #{generator_forward.1} parent=0 // pred_check_branch
    %29 = sbr.rel (0) target = $region29
  $region28: #{generator_forward.1} parent=0 // pred_region
    _
  $region29: #{generator_forward.1} parent=0 // pred_fallthru
    _
  // Predicated region
  $region30: #{generator_forward.1} parent=0 // pred_check
    _
  $region31: #{generator_forward.1} parent=0 // pred_check_branch
    %31 = sbr.rel (0) target = $region33
  $region32: #{generator_forward.1} parent=0 // pred_region
    _
  $region33: #{generator_forward.1} parent=0 // pred_fallthru
    _
  %p34 = scmp.lt.u32.totalorder 512, 8
  %p35 = pneg %p34
  // Predicated region
  $region34: #{generator_forward.1} parent=0 // pred_check
    _
  $region35: #{generator_forward.1} parent=0 // pred_check_branch
    %37 = sbr.rel (%p34) target = $region37
  $region36: #{generator_forward.1} parent=0 // pred_region
    %s53 = sand.u32 512, 7
    %p54 = scmp.eq.s32.totalorder %s53, 0
    // Predicated region
    $region49: #{generator_forward.1} parent=36 // pred_check
      %p55 = pneg %p54
    $region50: #{generator_forward.1} parent=36 // pred_check_branch
      %57 = sbr.rel (%p55) target = $region52
    $region51: #{generator_forward.1} parent=36 // pred_region
      loop: start=0, step=1, limit=1
      $region53: #{generator_forward.1} parent=51 // loop_pre_header
        _
      $region54: #{generator_forward.1} parent=51 // loop_header
        %s59 = sphi 0, %s63
        %p60 = scmp.ge.s32.totalorder %s59, 1
        %s64 = sphi %s4, %s4
        %s65 = sphi [#allocation3], [#allocation3]
      $region55: #{generator_forward.1} parent=51 // loop_header_branch
        %62 = sbr.rel (%p60) target = $region59
      $region56: #{generator_forward.1} parent=51 // loop_body
        %v66 = vld [vmem:[%s64] sm:$0xff]
        %67 = vst [vmem:[%s65] sm:$0xff] %v66
        %v68 = vld [vmem:[%s64 + $0x8] sm:$0xff]
        %69 = vst [vmem:[%s65 + $0x8] sm:$0xff] %v68
        %v70 = vld [vmem:[%s64 + $0x10] sm:$0xff]
        %71 = vst [vmem:[%s65 + $0x10] sm:$0xff] %v70
        %v72 = vld [vmem:[%s64 + $0x18] sm:$0xff]
        %73 = vst [vmem:[%s65 + $0x18] sm:$0xff] %v72
        %v74 = vld [vmem:[%s64 + $0x20] sm:$0xff]
        %75 = vst [vmem:[%s65 + $0x20] sm:$0xff] %v74
        %v76 = vld [vmem:[%s64 + $0x28] sm:$0xff]
        %77 = vst [vmem:[%s65 + $0x28] sm:$0xff] %v76
        %v78 = vld [vmem:[%s64 + $0x30] sm:$0xff]
        %79 = vst [vmem:[%s65 + $0x30] sm:$0xff] %v78
        %v80 = vld [vmem:[%s64 + $0x38] sm:$0xff]
        %81 = vst [vmem:[%s65 + $0x38] sm:$0xff] %v80
        %v82 = vld [vmem:[%s64 + $0x40] sm:$0xff]
        %83 = vst [vmem:[%s65 + $0x40] sm:$0xff] %v82
        %v84 = vld [vmem:[%s64 + $0x48] sm:$0xff]
        %85 = vst [vmem:[%s65 + $0x48] sm:$0xff] %v84
        %v86 = vld [vmem:[%s64 + $0x50] sm:$0xff]
        %87 = vst [vmem:[%s65 + $0x50] sm:$0xff] %v86
        %v88 = vld [vmem:[%s64 + $0x58] sm:$0xff]
        %89 = vst [vmem:[%s65 + $0x58] sm:$0xff] %v88
        %v90 = vld [vmem:[%s64 + $0x60] sm:$0xff]
        %91 = vst [vmem:[%s65 + $0x60] sm:$0xff] %v90
        %v92 = vld [vmem:[%s64 + $0x68] sm:$0xff]
        %93 = vst [vmem:[%s65 + $0x68] sm:$0xff] %v92
        %v94 = vld [vmem:[%s64 + $0x70] sm:$0xff]
        %95 = vst [vmem:[%s65 + $0x70] sm:$0xff] %v94
        %v96 = vld [vmem:[%s64 + $0x78] sm:$0xff]
        %97 = vst [vmem:[%s65 + $0x78] sm:$0xff] %v96
        %v98 = vld [vmem:[%s64 + $0x80] sm:$0xff]
        %99 = vst [vmem:[%s65 + $0x80] sm:$0xff] %v98
        %v100 = vld [vmem:[%s64 + $0x88] sm:$0xff]
        %101 = vst [vmem:[%s65 + $0x88] sm:$0xff] %v100
        %v102 = vld [vmem:[%s64 + $0x90] sm:$0xff]
        %103 = vst [vmem:[%s65 + $0x90] sm:$0xff] %v102
        %v104 = vld [vmem:[%s64 + $0x98] sm:$0xff]
        %105 = vst [vmem:[%s65 + $0x98] sm:$0xff] %v104
        %v106 = vld [vmem:[%s64 + $0xa0] sm:$0xff]
        %107 = vst [vmem:[%s65 + $0xa0] sm:$0xff] %v106
        %v108 = vld [vmem:[%s64 + $0xa8] sm:$0xff]
        %109 = vst [vmem:[%s65 + $0xa8] sm:$0xff] %v108
        %v110 = vld [vmem:[%s64 + $0xb0] sm:$0xff]
        %111 = vst [vmem:[%s65 + $0xb0] sm:$0xff] %v110
        %v112 = vld [vmem:[%s64 + $0xb8] sm:$0xff]
        %113 = vst [vmem:[%s65 + $0xb8] sm:$0xff] %v112
        %v114 = vld [vmem:[%s64 + $0xc0] sm:$0xff]
        %115 = vst [vmem:[%s65 + $0xc0] sm:$0xff] %v114
        %v116 = vld [vmem:[%s64 + $0xc8] sm:$0xff]
        %117 = vst [vmem:[%s65 + $0xc8] sm:$0xff] %v116
        %v118 = vld [vmem:[%s64 + $0xd0] sm:$0xff]
        %119 = vst [vmem:[%s65 + $0xd0] sm:$0xff] %v118
        %v120 = vld [vmem:[%s64 + $0xd8] sm:$0xff]
        %121 = vst [vmem:[%s65 + $0xd8] sm:$0xff] %v120
        %v122 = vld [vmem:[%s64 + $0xe0] sm:$0xff]
        %123 = vst [vmem:[%s65 + $0xe0] sm:$0xff] %v122
        %v124 = vld [vmem:[%s64 + $0xe8] sm:$0xff]
        %125 = vst [vmem:[%s65 + $0xe8] sm:$0xff] %v124
        %v126 = vld [vmem:[%s64 + $0xf0] sm:$0xff]
        %127 = vst [vmem:[%s65 + $0xf0] sm:$0xff] %v126
        %v128 = vld [vmem:[%s64 + $0xf8] sm:$0xff]
        %129 = vst [vmem:[%s65 + $0xf8] sm:$0xff] %v128
        %v130 = vld [vmem:[%s64 + $0x100] sm:$0xff]
        %131 = vst [vmem:[%s65 + $0x100] sm:$0xff] %v130
        %v132 = vld [vmem:[%s64 + $0x108] sm:$0xff]
        %133 = vst [vmem:[%s65 + $0x108] sm:$0xff] %v132
        %v134 = vld [vmem:[%s64 + $0x110] sm:$0xff]
        %135 = vst [vmem:[%s65 + $0x110] sm:$0xff] %v134
        %v136 = vld [vmem:[%s64 + $0x118] sm:$0xff]
        %137 = vst [vmem:[%s65 + $0x118] sm:$0xff] %v136
        %v138 = vld [vmem:[%s64 + $0x120] sm:$0xff]
        %139 = vst [vmem:[%s65 + $0x120] sm:$0xff] %v138
        %v140 = vld [vmem:[%s64 + $0x128] sm:$0xff]
        %141 = vst [vmem:[%s65 + $0x128] sm:$0xff] %v140
        %v142 = vld [vmem:[%s64 + $0x130] sm:$0xff]
        %143 = vst [vmem:[%s65 + $0x130] sm:$0xff] %v142
        %v144 = vld [vmem:[%s64 + $0x138] sm:$0xff]
        %145 = vst [vmem:[%s65 + $0x138] sm:$0xff] %v144
        %v146 = vld [vmem:[%s64 + $0x140] sm:$0xff]
        %147 = vst [vmem:[%s65 + $0x140] sm:$0xff] %v146
        %v148 = vld [vmem:[%s64 + $0x148] sm:$0xff]
        %149 = vst [vmem:[%s65 + $0x148] sm:$0xff] %v148
        %v150 = vld [vmem:[%s64 + $0x150] sm:$0xff]
        %151 = vst [vmem:[%s65 + $0x150] sm:$0xff] %v150
        %v152 = vld [vmem:[%s64 + $0x158] sm:$0xff]
        %153 = vst [vmem:[%s65 + $0x158] sm:$0xff] %v152
        %v154 = vld [vmem:[%s64 + $0x160] sm:$0xff]
        %155 = vst [vmem:[%s65 + $0x160] sm:$0xff] %v154
        %v156 = vld [vmem:[%s64 + $0x168] sm:$0xff]
        %157 = vst [vmem:[%s65 + $0x168] sm:$0xff] %v156
        %v158 = vld [vmem:[%s64 + $0x170] sm:$0xff]
        %159 = vst [vmem:[%s65 + $0x170] sm:$0xff] %v158
        %v160 = vld [vmem:[%s64 + $0x178] sm:$0xff]
        %161 = vst [vmem:[%s65 + $0x178] sm:$0xff] %v160
        %v162 = vld [vmem:[%s64 + $0x180] sm:$0xff]
        %163 = vst [vmem:[%s65 + $0x180] sm:$0xff] %v162
        %v164 = vld [vmem:[%s64 + $0x188] sm:$0xff]
        %165 = vst [vmem:[%s65 + $0x188] sm:$0xff] %v164
        %v166 = vld [vmem:[%s64 + $0x190] sm:$0xff]
        %167 = vst [vmem:[%s65 + $0x190] sm:$0xff] %v166
        %v168 = vld [vmem:[%s64 + $0x198] sm:$0xff]
        %169 = vst [vmem:[%s65 + $0x198] sm:$0xff] %v168
        %v170 = vld [vmem:[%s64 + $0x1a0] sm:$0xff]
        %171 = vst [vmem:[%s65 + $0x1a0] sm:$0xff] %v170
        %v172 = vld [vmem:[%s64 + $0x1a8] sm:$0xff]
        %173 = vst [vmem:[%s65 + $0x1a8] sm:$0xff] %v172
        %v174 = vld [vmem:[%s64 + $0x1b0] sm:$0xff]
        %175 = vst [vmem:[%s65 + $0x1b0] sm:$0xff] %v174
        %v176 = vld [vmem:[%s64 + $0x1b8] sm:$0xff]
        %177 = vst [vmem:[%s65 + $0x1b8] sm:$0xff] %v176
        %v178 = vld [vmem:[%s64 + $0x1c0] sm:$0xff]
        %179 = vst [vmem:[%s65 + $0x1c0] sm:$0xff] %v178
        %v180 = vld [vmem:[%s64 + $0x1c8] sm:$0xff]
        %181 = vst [vmem:[%s65 + $0x1c8] sm:$0xff] %v180
        %v182 = vld [vmem:[%s64 + $0x1d0] sm:$0xff]
        %183 = vst [vmem:[%s65 + $0x1d0] sm:$0xff] %v182
        %v184 = vld [vmem:[%s64 + $0x1d8] sm:$0xff]
        %185 = vst [vmem:[%s65 + $0x1d8] sm:$0xff] %v184
        %v186 = vld [vmem:[%s64 + $0x1e0] sm:$0xff]
        %187 = vst [vmem:[%s65 + $0x1e0] sm:$0xff] %v186
        %v188 = vld [vmem:[%s64 + $0x1e8] sm:$0xff]
        %189 = vst [vmem:[%s65 + $0x1e8] sm:$0xff] %v188
        %v190 = vld [vmem:[%s64 + $0x1f0] sm:$0xff]
        %191 = vst [vmem:[%s65 + $0x1f0] sm:$0xff] %v190
        %v192 = vld [vmem:[%s64 + $0x1f8] sm:$0xff]
        %193 = vst [vmem:[%s65 + $0x1f8] sm:$0xff] %v192
      $region57: #{generator_forward.1} parent=51 // loop_footer
        %s63 = sadd.s32 1, %s59
      $region58: #{generator_forward.1} parent=51 // loop_footer_branch
        %58 = sbr.rel target = $region54
      $region59: #{generator_forward.1} parent=51 // loop_exit
        _
    $region52: #{generator_forward.1} parent=36 // pred_fallthru
      _
    %p194 = pneg %p54
    // Predicated region
    $region60: #{generator_forward.1} parent=36 // pred_check
      _
    $region61: #{generator_forward.1} parent=36 // pred_check_branch
      %196 = sbr.rel (%p54) target = $region63
    $region62: #{generator_forward.1} parent=36 // pred_region
      %s197 = sand.u32 512, 7
    $region63: #{generator_forward.1} parent=36 // pred_fallthru
      _
  $region37: #{generator_forward.1} parent=0 // pred_fallthru
    _
  // Predicated region
  $region38: #{generator_forward.1} parent=0 // pred_check
    %p38 = pneg %p34
  $region39: #{generator_forward.1} parent=0 // pred_check_branch
    %40 = sbr.rel (%p38) target = $region41
  $region40: #{generator_forward.1} parent=0 // pred_region
    %s41 = sshll.u32 1, 512
    %s42 = ssub.s32 %s41, 1
    loop: start=0, step=1, limit=1
    $region42: #{generator_forward.1} parent=40 // loop_pre_header
      _
    $region43: #{generator_forward.1} parent=40 // loop_header
      %s44 = sphi 0, %s48
      %p45 = scmp.ge.s32.totalorder %s44, 1
      %s49 = sphi %s4, %s4
      %s50 = sphi [#allocation3], [#allocation3]
    $region44: #{generator_forward.1} parent=40 // loop_header_branch
      %47 = sbr.rel (%p45) target = $region48
    $region45: #{generator_forward.1} parent=40 // loop_body
      %v51 = vld [vmem:[%s49] sm:%s42]
      %52 = vst [vmem:[%s50] sm:%s42] %v51
    $region46: #{generator_forward.1} parent=40 // loop_footer
      %s48 = sadd.s32 1, %s44
    $region47: #{generator_forward.1} parent=40 // loop_footer_branch
      %43 = sbr.rel target = $region43
    $region48: #{generator_forward.1} parent=40 // loop_exit
      _
  $region41: #{generator_forward.1} parent=0 // pred_fallthru
    _
  // Predicated region
  $region64: #{generator_forward.1} parent=0 // pred_check
    _
  $region65: #{generator_forward.1} parent=0 // pred_check_branch
    %200 = sbr.rel (0) target = $region67
  $region66: #{generator_forward.1} parent=0 // pred_region
    %201 = vsyncadd [#allocation6], 8192
  $region67: #{generator_forward.1} parent=0 // pred_fallthru
    _
  %s202 = scalar_lea.sflag [#allocation6], 1
  // Predicated region
  $region68: #{generator_forward.1} parent=0 // pred_check
    _
  $region69: #{generator_forward.1} parent=0 // pred_check_branch
    %204 = sbr.rel target = $region71
  $region70: #{generator_forward.1} parent=0 // pred_region
    %205 = sst [smem:[#allocation10]] [#allocation9]
    %206 = sst [smem:[#allocation11]] [#allocation8]
  $region71: #{generator_forward.1} parent=0 // pred_fallthru
    _
  %208 = shalt.err (0)
  %s210 = sshll.u32 [#allocation4], 4
  %s211 = int_to_ptr.vmem [resolvable:$true] %s210
  %213 = dma.hbm_to_vmem [thread:$0]  %s7, 32768, %s211, %s202
  %s214 = scalar_lea.sflag [#allocation6], 2
  %p216 = scmp.lt.u32.totalorder 512, 8
  %p217 = pneg %p216
  // Predicated region
  $region72: #{generator_forward.1} parent=0 // pred_check
    _
  $region73: #{generator_forward.1} parent=0 // pred_check_branch
    %219 = sbr.rel (%p216) target = $region75
  $region74: #{generator_forward.1} parent=0 // pred_region
    %s235 = sand.u32 512, 7
    %p236 = scmp.eq.s32.totalorder %s235, 0
    // Predicated region
    $region87: #{generator_forward.1} parent=74 // pred_check
      %p237 = pneg %p236
    $region88: #{generator_forward.1} parent=74 // pred_check_branch
      %239 = sbr.rel (%p237) target = $region90
    $region89: #{generator_forward.1} parent=74 // pred_region
      loop: start=0, step=1, limit=1
      $region91: #{generator_forward.1} parent=89 // loop_pre_header
        _
      $region92: #{generator_forward.1} parent=89 // loop_header
        %s241 = sphi 0, %s245
        %p242 = scmp.ge.s32.totalorder %s241, 1
        %s246 = sphi %s10, %s10
        %s247 = sphi [#allocation5], [#allocation5]
      $region93: #{generator_forward.1} parent=89 // loop_header_branch
        %244 = sbr.rel (%p242) target = $region97
      $region94: #{generator_forward.1} parent=89 // loop_body
        %v248 = vld [vmem:[%s246] sm:$0xff]
        %249 = vst [vmem:[%s247] sm:$0xff] %v248
        %v250 = vld [vmem:[%s246 + $0x8] sm:$0xff]
        %251 = vst [vmem:[%s247 + $0x8] sm:$0xff] %v250
        %v252 = vld [vmem:[%s246 + $0x10] sm:$0xff]
        %253 = vst [vmem:[%s247 + $0x10] sm:$0xff] %v252
        %v254 = vld [vmem:[%s246 + $0x18] sm:$0xff]
        %255 = vst [vmem:[%s247 + $0x18] sm:$0xff] %v254
        %v256 = vld [vmem:[%s246 + $0x20] sm:$0xff]
        %257 = vst [vmem:[%s247 + $0x20] sm:$0xff] %v256
        %v258 = vld [vmem:[%s246 + $0x28] sm:$0xff]
        %259 = vst [vmem:[%s247 + $0x28] sm:$0xff] %v258
        %v260 = vld [vmem:[%s246 + $0x30] sm:$0xff]
        %261 = vst [vmem:[%s247 + $0x30] sm:$0xff] %v260
        %v262 = vld [vmem:[%s246 + $0x38] sm:$0xff]
        %263 = vst [vmem:[%s247 + $0x38] sm:$0xff] %v262
        %v264 = vld [vmem:[%s246 + $0x40] sm:$0xff]
        %265 = vst [vmem:[%s247 + $0x40] sm:$0xff] %v264
        %v266 = vld [vmem:[%s246 + $0x48] sm:$0xff]
        %267 = vst [vmem:[%s247 + $0x48] sm:$0xff] %v266
        %v268 = vld [vmem:[%s246 + $0x50] sm:$0xff]
        %269 = vst [vmem:[%s247 + $0x50] sm:$0xff] %v268
        %v270 = vld [vmem:[%s246 + $0x58] sm:$0xff]
        %271 = vst [vmem:[%s247 + $0x58] sm:$0xff] %v270
        %v272 = vld [vmem:[%s246 + $0x60] sm:$0xff]
        %273 = vst [vmem:[%s247 + $0x60] sm:$0xff] %v272
        %v274 = vld [vmem:[%s246 + $0x68] sm:$0xff]
        %275 = vst [vmem:[%s247 + $0x68] sm:$0xff] %v274
        %v276 = vld [vmem:[%s246 + $0x70] sm:$0xff]
        %277 = vst [vmem:[%s247 + $0x70] sm:$0xff] %v276
        %v278 = vld [vmem:[%s246 + $0x78] sm:$0xff]
        %279 = vst [vmem:[%s247 + $0x78] sm:$0xff] %v278
        %v280 = vld [vmem:[%s246 + $0x80] sm:$0xff]
        %281 = vst [vmem:[%s247 + $0x80] sm:$0xff] %v280
        %v282 = vld [vmem:[%s246 + $0x88] sm:$0xff]
        %283 = vst [vmem:[%s247 + $0x88] sm:$0xff] %v282
        %v284 = vld [vmem:[%s246 + $0x90] sm:$0xff]
        %285 = vst [vmem:[%s247 + $0x90] sm:$0xff] %v284
        %v286 = vld [vmem:[%s246 + $0x98] sm:$0xff]
        %287 = vst [vmem:[%s247 + $0x98] sm:$0xff] %v286
        %v288 = vld [vmem:[%s246 + $0xa0] sm:$0xff]
        %289 = vst [vmem:[%s247 + $0xa0] sm:$0xff] %v288
        %v290 = vld [vmem:[%s246 + $0xa8] sm:$0xff]
        %291 = vst [vmem:[%s247 + $0xa8] sm:$0xff] %v290
        %v292 = vld [vmem:[%s246 + $0xb0] sm:$0xff]
        %293 = vst [vmem:[%s247 + $0xb0] sm:$0xff] %v292
        %v294 = vld [vmem:[%s246 + $0xb8] sm:$0xff]
        %295 = vst [vmem:[%s247 + $0xb8] sm:$0xff] %v294
        %v296 = vld [vmem:[%s246 + $0xc0] sm:$0xff]
        %297 = vst [vmem:[%s247 + $0xc0] sm:$0xff] %v296
        %v298 = vld [vmem:[%s246 + $0xc8] sm:$0xff]
        %299 = vst [vmem:[%s247 + $0xc8] sm:$0xff] %v298
        %v300 = vld [vmem:[%s246 + $0xd0] sm:$0xff]
        %301 = vst [vmem:[%s247 + $0xd0] sm:$0xff] %v300
        %v302 = vld [vmem:[%s246 + $0xd8] sm:$0xff]
        %303 = vst [vmem:[%s247 + $0xd8] sm:$0xff] %v302
        %v304 = vld [vmem:[%s246 + $0xe0] sm:$0xff]
        %305 = vst [vmem:[%s247 + $0xe0] sm:$0xff] %v304
        %v306 = vld [vmem:[%s246 + $0xe8] sm:$0xff]
        %307 = vst [vmem:[%s247 + $0xe8] sm:$0xff] %v306
        %v308 = vld [vmem:[%s246 + $0xf0] sm:$0xff]
        %309 = vst [vmem:[%s247 + $0xf0] sm:$0xff] %v308
        %v310 = vld [vmem:[%s246 + $0xf8] sm:$0xff]
        %311 = vst [vmem:[%s247 + $0xf8] sm:$0xff] %v310
        %v312 = vld [vmem:[%s246 + $0x100] sm:$0xff]
        %313 = vst [vmem:[%s247 + $0x100] sm:$0xff] %v312
        %v314 = vld [vmem:[%s246 + $0x108] sm:$0xff]
        %315 = vst [vmem:[%s247 + $0x108] sm:$0xff] %v314
        %v316 = vld [vmem:[%s246 + $0x110] sm:$0xff]
        %317 = vst [vmem:[%s247 + $0x110] sm:$0xff] %v316
        %v318 = vld [vmem:[%s246 + $0x118] sm:$0xff]
        %319 = vst [vmem:[%s247 + $0x118] sm:$0xff] %v318
        %v320 = vld [vmem:[%s246 + $0x120] sm:$0xff]
        %321 = vst [vmem:[%s247 + $0x120] sm:$0xff] %v320
        %v322 = vld [vmem:[%s246 + $0x128] sm:$0xff]
        %323 = vst [vmem:[%s247 + $0x128] sm:$0xff] %v322
        %v324 = vld [vmem:[%s246 + $0x130] sm:$0xff]
        %325 = vst [vmem:[%s247 + $0x130] sm:$0xff] %v324
        %v326 = vld [vmem:[%s246 + $0x138] sm:$0xff]
        %327 = vst [vmem:[%s247 + $0x138] sm:$0xff] %v326
        %v328 = vld [vmem:[%s246 + $0x140] sm:$0xff]
        %329 = vst [vmem:[%s247 + $0x140] sm:$0xff] %v328
        %v330 = vld [vmem:[%s246 + $0x148] sm:$0xff]
        %331 = vst [vmem:[%s247 + $0x148] sm:$0xff] %v330
        %v332 = vld [vmem:[%s246 + $0x150] sm:$0xff]
        %333 = vst [vmem:[%s247 + $0x150] sm:$0xff] %v332
        %v334 = vld [vmem:[%s246 + $0x158] sm:$0xff]
        %335 = vst [vmem:[%s247 + $0x158] sm:$0xff] %v334
        %v336 = vld [vmem:[%s246 + $0x160] sm:$0xff]
        %337 = vst [vmem:[%s247 + $0x160] sm:$0xff] %v336
        %v338 = vld [vmem:[%s246 + $0x168] sm:$0xff]
        %339 = vst [vmem:[%s247 + $0x168] sm:$0xff] %v338
        %v340 = vld [vmem:[%s246 + $0x170] sm:$0xff]
        %341 = vst [vmem:[%s247 + $0x170] sm:$0xff] %v340
        %v342 = vld [vmem:[%s246 + $0x178] sm:$0xff]
        %343 = vst [vmem:[%s247 + $0x178] sm:$0xff] %v342
        %v344 = vld [vmem:[%s246 + $0x180] sm:$0xff]
        %345 = vst [vmem:[%s247 + $0x180] sm:$0xff] %v344
        %v346 = vld [vmem:[%s246 + $0x188] sm:$0xff]
        %347 = vst [vmem:[%s247 + $0x188] sm:$0xff] %v346
        %v348 = vld [vmem:[%s246 + $0x190] sm:$0xff]
        %349 = vst [vmem:[%s247 + $0x190] sm:$0xff] %v348
        %v350 = vld [vmem:[%s246 + $0x198] sm:$0xff]
        %351 = vst [vmem:[%s247 + $0x198] sm:$0xff] %v350
        %v352 = vld [vmem:[%s246 + $0x1a0] sm:$0xff]
        %353 = vst [vmem:[%s247 + $0x1a0] sm:$0xff] %v352
        %v354 = vld [vmem:[%s246 + $0x1a8] sm:$0xff]
        %355 = vst [vmem:[%s247 + $0x1a8] sm:$0xff] %v354
        %v356 = vld [vmem:[%s246 + $0x1b0] sm:$0xff]
        %357 = vst [vmem:[%s247 + $0x1b0] sm:$0xff] %v356
        %v358 = vld [vmem:[%s246 + $0x1b8] sm:$0xff]
        %359 = vst [vmem:[%s247 + $0x1b8] sm:$0xff] %v358
        %v360 = vld [vmem:[%s246 + $0x1c0] sm:$0xff]
        %361 = vst [vmem:[%s247 + $0x1c0] sm:$0xff] %v360
        %v362 = vld [vmem:[%s246 + $0x1c8] sm:$0xff]
        %363 = vst [vmem:[%s247 + $0x1c8] sm:$0xff] %v362
        %v364 = vld [vmem:[%s246 + $0x1d0] sm:$0xff]
        %365 = vst [vmem:[%s247 + $0x1d0] sm:$0xff] %v364
        %v366 = vld [vmem:[%s246 + $0x1d8] sm:$0xff]
        %367 = vst [vmem:[%s247 + $0x1d8] sm:$0xff] %v366
        %v368 = vld [vmem:[%s246 + $0x1e0] sm:$0xff]
        %369 = vst [vmem:[%s247 + $0x1e0] sm:$0xff] %v368
        %v370 = vld [vmem:[%s246 + $0x1e8] sm:$0xff]
        %371 = vst [vmem:[%s247 + $0x1e8] sm:$0xff] %v370
        %v372 = vld [vmem:[%s246 + $0x1f0] sm:$0xff]
        %373 = vst [vmem:[%s247 + $0x1f0] sm:$0xff] %v372
        %v374 = vld [vmem:[%s246 + $0x1f8] sm:$0xff]
        %375 = vst [vmem:[%s247 + $0x1f8] sm:$0xff] %v374
      $region95: #{generator_forward.1} parent=89 // loop_footer
        %s245 = sadd.s32 1, %s241
      $region96: #{generator_forward.1} parent=89 // loop_footer_branch
        %240 = sbr.rel target = $region92
      $region97: #{generator_forward.1} parent=89 // loop_exit
        _
    $region90: #{generator_forward.1} parent=74 // pred_fallthru
      _
    %p376 = pneg %p236
    // Predicated region
    $region98: #{generator_forward.1} parent=74 // pred_check
      _
    $region99: #{generator_forward.1} parent=74 // pred_check_branch
      %378 = sbr.rel (%p236) target = $region101
    $region100: #{generator_forward.1} parent=74 // pred_region
      %s379 = sand.u32 512, 7
    $region101: #{generator_forward.1} parent=74 // pred_fallthru
      _
  $region75: #{generator_forward.1} parent=0 // pred_fallthru
    _
  // Predicated region
  $region76: #{generator_forward.1} parent=0 // pred_check
    %p220 = pneg %p216
  $region77: #{generator_forward.1} parent=0 // pred_check_branch
    %222 = sbr.rel (%p220) target = $region79
  $region78: #{generator_forward.1} parent=0 // pred_region
    %s223 = sshll.u32 1, 512
    %s224 = ssub.s32 %s223, 1
    loop: start=0, step=1, limit=1
    $region80: #{generator_forward.1} parent=78 // loop_pre_header
      _
    $region81: #{generator_forward.1} parent=78 // loop_header
      %s226 = sphi 0, %s230
      %p227 = scmp.ge.s32.totalorder %s226, 1
      %s231 = sphi %s10, %s10
      %s232 = sphi [#allocation5], [#allocation5]
    $region82: #{generator_forward.1} parent=78 // loop_header_branch
      %229 = sbr.rel (%p227) target = $region86
    $region83: #{generator_forward.1} parent=78 // loop_body
      %v233 = vld [vmem:[%s231] sm:%s224]
      %234 = vst [vmem:[%s232] sm:%s224] %v233
    $region84: #{generator_forward.1} parent=78 // loop_footer
      %s230 = sadd.s32 1, %s226
    $region85: #{generator_forward.1} parent=78 // loop_footer_branch
      %225 = sbr.rel target = $region81
    $region86: #{generator_forward.1} parent=78 // loop_exit
      _
  $region79: #{generator_forward.1} parent=0 // pred_fallthru
    _
  // Predicated region
  $region102: #{generator_forward.1} parent=0 // pred_check
    _
  $region103: #{generator_forward.1} parent=0 // pred_check_branch
    %382 = sbr.rel (0) target = $region105
  $region104: #{generator_forward.1} parent=0 // pred_region
    %383 = vsyncadd %s214, 8192
  $region105: #{generator_forward.1} parent=0 // pred_fallthru
    _
  %384 = vst [vmem:[#allocation2] sm:$0x3] 0.0
  %v385 = vld [vmem:[%s0] sm:$0x3]
  %vm386 = vcmask 812032
  %387 = vst.msk [vmem:[#allocation2] sm:$0x3] %vm386, %v385
  %v388 = vld [vmem:[#allocation2] sm:$0x3]
  %v389 = vpack.c.bf16 %v388, %v388
  %v390 = vld [vmem:[%s1] sm:$0xff]
  %v391 = vld [vmem:[%s1 + $0x8] sm:$0xff]
  %v392 = vld [vmem:[%s1 + $0x10] sm:$0xff]
  %v393 = vld [vmem:[%s1 + $0x18] sm:$0xff]
  %v394 = vld [vmem:[%s1 + $0x20] sm:$0xff]
  %v395 = vld [vmem:[%s1 + $0x28] sm:$0xff]
  %v396 = vld [vmem:[%s1 + $0x30] sm:$0xff]
  %v397 = vld [vmem:[%s1 + $0x38] sm:$0xff]
  %v398 = vld [vmem:[%s1 + $0x40] sm:$0xff]
  %v399 = vld [vmem:[%s1 + $0x48] sm:$0xff]
  %v400 = vld [vmem:[%s1 + $0x50] sm:$0xff]
  %v401 = vld [vmem:[%s1 + $0x58] sm:$0xff]
  %v402 = vld [vmem:[%s1 + $0x60] sm:$0xff]
  %v403 = vld [vmem:[%s1 + $0x68] sm:$0xff]
  %v404 = vld [vmem:[%s1 + $0x70] sm:$0xff]
  %v405 = vld [vmem:[%s1 + $0x78] sm:$0xff]
  %v422 = vunpack.c.l.b16 %v390
  %v423 = vunpack.c.h.b16 %v390
  %v424 = vunpack.c.l.b16 %v391
  %v425 = vunpack.c.h.b16 %v391
  %v426 = vunpack.c.l.b16 %v392
  %v427 = vunpack.c.h.b16 %v392
  %v428 = vunpack.c.l.b16 %v393
  %v429 = vunpack.c.h.b16 %v393
  %v430 = vunpack.c.l.b16 %v394
  %v431 = vunpack.c.h.b16 %v394
  %v432 = vunpack.c.l.b16 %v395
  %v433 = vunpack.c.h.b16 %v395
  %v434 = vunpack.c.l.b16 %v396
  %v435 = vunpack.c.h.b16 %v396
  %v436 = vunpack.c.l.b16 %v397
  %v437 = vunpack.c.h.b16 %v397
  %v438 = vunpack.c.l.b16 %v398
  %v439 = vunpack.c.h.b16 %v398
  %v440 = vunpack.c.l.b16 %v399
  %v441 = vunpack.c.h.b16 %v399
  %v442 = vunpack.c.l.b16 %v400
  %v443 = vunpack.c.h.b16 %v400
  %v444 = vunpack.c.l.b16 %v401
  %v445 = vunpack.c.h.b16 %v401
  %v446 = vunpack.c.l.b16 %v402
  %v447 = vunpack.c.h.b16 %v402
  %v448 = vunpack.c.l.b16 %v403
  %v449 = vunpack.c.h.b16 %v403
  %v450 = vunpack.c.l.b16 %v404
  %v451 = vunpack.c.h.b16 %v404
  %v452 = vunpack.c.l.b16 %v405
  %v453 = vunpack.c.h.b16 %v405
  %v454 = vpack.c.b16 %v424, %v422
  %v455 = vpack.c.b16 %v425, %v423
  %v456 = vpack.c.b16 %v428, %v426
  %v457 = vpack.c.b16 %v429, %v427
  %v458 = vpack.c.b16 %v432, %v430
  %v459 = vpack.c.b16 %v433, %v431
  %v460 = vpack.c.b16 %v436, %v434
  %v461 = vpack.c.b16 %v437, %v435
  %v462 = vpack.c.b16 %v440, %v438
  %v463 = vpack.c.b16 %v441, %v439
  %v464 = vpack.c.b16 %v444, %v442
  %v465 = vpack.c.b16 %v445, %v443
  %v466 = vpack.c.b16 %v448, %v446
  %v467 = vpack.c.b16 %v449, %v447
  %v468 = vpack.c.b16 %v452, %v450
  %v469 = vpack.c.b16 %v453, %v451
  %486 = vmatprep.subr.bf16.mxu0 %v469
  %487 = vmatpush1.bf16.msra.mxu0 %v468
  %488 = vmatprep.subr.bf16.mxu0 %v467
  %489 = vmatpush1.bf16.msra.mxu0 %v466
  %490 = vmatprep.subr.bf16.mxu0 %v465
  %491 = vmatpush1.bf16.msra.mxu0 %v464
  %492 = vmatprep.subr.bf16.mxu0 %v463
  %493 = vmatpush1.bf16.msra.mxu0 %v462
  %494 = vmatprep.subr.bf16.mxu0 %v461
  %495 = vmatpush1.bf16.msra.mxu0 %v460
  %496 = vmatprep.subr.bf16.mxu0 %v459
  %497 = vmatpush1.bf16.msra.mxu0 %v458
  %498 = vmatprep.subr.bf16.mxu0 %v457
  %499 = vmatpush1.bf16.msra.mxu0 %v456
  %500 = vmatprep.subr.bf16.mxu0 %v455
  %501 = vmatpush1.bf16.msra.mxu0 %v454
  %502 = vmatprep.subr.bf16.mxu0 0
  %503 = vmatpush2.bf16.msra.mxu0 0
  %504 = vmatprep.subr.bf16.mxu0 0
  %505 = vmatpush2.bf16.msra.mxu0 0
  %506 = vmatprep.subr.bf16.mxu0 0
  %507 = vmatpush2.bf16.msra.mxu0 0
  %508 = vmatprep.subr.bf16.mxu0 0
  %509 = vmatpush2.bf16.msra.mxu0 0
  %510 = vmatprep.subr.bf16.mxu0 0
  %511 = vmatpush2.bf16.msra.mxu0 0
  %512 = vmatprep.subr.bf16.mxu0 0
  %513 = vmatpush2.bf16.msra.mxu0 0
  %514 = vmatprep.subr.bf16.mxu0 0
  %515 = vmatpush2.bf16.msra.mxu0 0
  %516 = vmatprep.subr.bf16.mxu0 0
  %517 = vmatpush2.bf16.msra.mxu0 0
  %518 = vmatprep.mubr.bf16.mxu0 0
  %519 = vmatmul.mubr.bf16.gmra.mxu0 %v389
  %v520 = vpop.f32.mrf.mxu0
  %v521 = vadd.f32 0.0, %v520
  %v522 = vpop.f32.mrf.mxu0
  %v523 = vadd.f32 0.0, %v522
  %v524 = vpop.f32.mrf.mxu0
  %v525 = vpop.f32.mrf.mxu0
  %526 = vdwg.mxu0
  %vm527 = vcmask 1041408
  %v528 = vsel %vm527, %v521, 0.0
  %v529 = vrot.slane %v528, 4
  %v530 = vadd.f32 %v528, %v529
  %v531 = vrot.slane %v530, 2
  %v532 = vadd.f32 %v530, %v531
  %v533 = vrot.slane %v532, 1
  %v534 = vadd.f32 %v532, %v533
  %v535 = vsel %vm527, %v523, 0.0
  %v536 = vrot.slane %v535, 4
  %v537 = vadd.f32 %v535, %v536
  %v538 = vrot.slane %v537, 2
  %v539 = vadd.f32 %v537, %v538
  %v540 = vrot.slane %v539, 1
  %v541 = vadd.f32 %v539, %v540
  %v542 = vmul.f32 %v521, %v521
  %v543 = vmul.f32 %v523, %v523
  %v544 = vsel %vm527, %v542, 0.0
  %v545 = vrot.slane %v544, 4
  %v546 = vadd.f32 %v544, %v545
  %v547 = vrot.slane %v546, 2
  %v548 = vadd.f32 %v546, %v547
  %v549 = vrot.slane %v548, 1
  %v550 = vadd.f32 %v548, %v549
  %v551 = vsel %vm527, %v543, 0.0
  %v552 = vrot.slane %v551, 4
  %v553 = vadd.f32 %v551, %v552
  %v554 = vrot.slane %v553, 2
  %v555 = vadd.f32 %v553, %v554
  %v556 = vrot.slane %v555, 1
  %v557 = vadd.f32 %v555, %v556
  %v558 = vmul.f32 %v534, 0.5
  %v559 = vmul.f32 %v541, 0.5
  %v560 = vmul.f32 %v550, 0.5
  %v561 = vmul.f32 %v557, 0.5
  %v562 = vmul.f32 %v558, %v558
  %v563 = vmul.f32 %v559, %v559
  %v564 = vsub.f32 %v560, %v562
  %v565 = vsub.f32 %v561, %v563
  %v566 = vld [vmem:[%s2] sm:$0x3]
  %v567 = vadd.f32 %v564, 1e-05
  %v568 = vadd.f32 %v565, 1e-05
  %v569 = vrsqrt.pop %v567
  %v570 = vrsqrt.pop %v568
  %v573 = vcombine.low %v569, %v570
  %v575 = vunpack.c.l.s4 1966171168
  %v576 = vunpack.c.0.s8 %v575
  %v577 = vlaneseq
  %v578 = vshrl.u32 %v577, 7
  %v579 = vsub.s32 %v576, %v578
  %v580 = vrot.slane %v573, %v579
  %v582 = vunpack.c.l.s4 1966171168
  %v583 = vunpack.c.0.s8 %v582
  %v584 = vlaneseq
  %v585 = vshrl.u32 %v584, 7
  %v586 = vsub.s32 %v583, %v585
  %v587 = vrot.slane %v580, %v586
  %v589 = vmul.f32 %v566, %v587
  %v590 = vld [vmem:[%s3] sm:$0x3]
  %v592 = vlaneseq
  %v593 = vshrl.u32 %v592, 7
  %v594 = vsub.s32 0, %v593
  %v595 = vrot.slane %v589, %v594
  %v596 = vlaneseq
  %v597 = vshrl.u32 %v596, 7
  %v598 = vsub.s32 1, %v597
  %v599 = vrot.slane %v589, %v598
  %v602 = vmul.f32 %v558, %v595
  %v603 = vmul.f32 %v559, %v599
  %v606 = vcombine.low %v602, %v603
  %v608 = vunpack.c.l.s4 1966171168
  %v609 = vunpack.c.0.s8 %v608
  %v610 = vlaneseq
  %v611 = vshrl.u32 %v610, 7
  %v612 = vsub.s32 %v609, %v611
  %v613 = vrot.slane %v606, %v612
  %v615 = vunpack.c.l.s4 1966171168
  %v616 = vunpack.c.0.s8 %v615
  %v617 = vlaneseq
  %v618 = vshrl.u32 %v617, 7
  %v619 = vsub.s32 %v616, %v618
  %v620 = vrot.slane %v613, %v619
  %v622 = vsub.f32 %v590, %v620
  %v623 = vmul.f32 %v521, %v595
  %v624 = vmul.f32 %v523, %v599
  %v626 = vlaneseq
  %v627 = vshrl.u32 %v626, 7
  %v628 = vsub.s32 0, %v627
  %v629 = vrot.slane %v622, %v628
  %v630 = vlaneseq
  %v631 = vshrl.u32 %v630, 7
  %v632 = vsub.s32 1, %v631
  %v633 = vrot.slane %v622, %v632
  %v636 = vadd.f32 %v623, %v629
  %v637 = vadd.f32 %v624, %v633
  %v638 = vmax.f32 %v636, 0.0
  %v639 = vmax.f32 %v637, 0.0
  %s640 = smul.u32 4, 32
  %s641 = smul.u32 %s640, 4
  %s642 = sshll.u32 %s641, 4
  %643 = dma.done [#allocation6], %s642
  %v644 = vpack.c.bf16 %v638, %v638
  %v645 = vpack.c.bf16 %v639, %v639
  %v646 = vld [vmem:[#allocation3] sm:$0xff]
  %v647 = vld [vmem:[#allocation3 + $0x8] sm:$0xff]
  %v648 = vld [vmem:[#allocation3 + $0x10] sm:$0xff]
  %v649 = vld [vmem:[#allocation3 + $0x18] sm:$0xff]
  %v650 = vld [vmem:[#allocation3 + $0x20] sm:$0xff]
  %v651 = vld [vmem:[#allocation3 + $0x28] sm:$0xff]
  %v652 = vld [vmem:[#allocation3 + $0x30] sm:$0xff]
  %v653 = vld [vmem:[#allocation3 + $0x38] sm:$0xff]
  %v654 = vld [vmem:[#allocation3 + $0x40] sm:$0xff]
  %v655 = vld [vmem:[#allocation3 + $0x48] sm:$0xff]
  %v656 = vld [vmem:[#allocation3 + $0x50] sm:$0xff]
  %v657 = vld [vmem:[#allocation3 + $0x58] sm:$0xff]
  %v658 = vld [vmem:[#allocation3 + $0x60] sm:$0xff]
  %v659 = vld [vmem:[#allocation3 + $0x68] sm:$0xff]
  %v660 = vld [vmem:[#allocation3 + $0x70] sm:$0xff]
  %v661 = vld [vmem:[#allocation3 + $0x78] sm:$0xff]
  %v662 = vld [vmem:[#allocation3 + $0x80] sm:$0xff]
  %v663 = vld [vmem:[#allocation3 + $0x88] sm:$0xff]
  %v664 = vld [vmem:[#allocation3 + $0x90] sm:$0xff]
  %v665 = vld [vmem:[#allocation3 + $0x98] sm:$0xff]
  %v666 = vld [vmem:[#allocation3 + $0xa0] sm:$0xff]
  %v667 = vld [vmem:[#allocation3 + $0xa8] sm:$0xff]
  %v668 = vld [vmem:[#allocation3 + $0xb0] sm:$0xff]
  %v669 = vld [vmem:[#allocation3 + $0xb8] sm:$0xff]
  %v670 = vld [vmem:[#allocation3 + $0xc0] sm:$0xff]
  %v671 = vld [vmem:[#allocation3 + $0xc8] sm:$0xff]
  %v672 = vld [vmem:[#allocation3 + $0xd0] sm:$0xff]
  %v673 = vld [vmem:[#allocation3 + $0xd8] sm:$0xff]
  %v674 = vld [vmem:[#allocation3 + $0xe0] sm:$0xff]
  %v675 = vld [vmem:[#allocation3 + $0xe8] sm:$0xff]
  %v676 = vld [vmem:[#allocation3 + $0xf0] sm:$0xff]
  %v677 = vld [vmem:[#allocation3 + $0xf8] sm:$0xff]
  %v678 = vld [vmem:[#allocation3 + $0x100] sm:$0xff]
  %v679 = vld [vmem:[#allocation3 + $0x108] sm:$0xff]
  %v680 = vld [vmem:[#allocation3 + $0x110] sm:$0xff]
  %v681 = vld [vmem:[#allocation3 + $0x118] sm:$0xff]
  %v682 = vld [vmem:[#allocation3 + $0x120] sm:$0xff]
  %v683 = vld [vmem:[#allocation3 + $0x128] sm:$0xff]
  %v684 = vld [vmem:[#allocation3 + $0x130] sm:$0xff]
  %v685 = vld [vmem:[#allocation3 + $0x138] sm:$0xff]
  %v686 = vld [vmem:[#allocation3 + $0x140] sm:$0xff]
  %v687 = vld [vmem:[#allocation3 + $0x148] sm:$0xff]
  %v688 = vld [vmem:[#allocation3 + $0x150] sm:$0xff]
  %v689 = vld [vmem:[#allocation3 + $0x158] sm:$0xff]
  %v690 = vld [vmem:[#allocation3 + $0x160] sm:$0xff]
  %v691 = vld [vmem:[#allocation3 + $0x168] sm:$0xff]
  %v692 = vld [vmem:[#allocation3 + $0x170] sm:$0xff]
  %v693 = vld [vmem:[#allocation3 + $0x178] sm:$0xff]
  %v694 = vld [vmem:[#allocation3 + $0x180] sm:$0xff]
  %v695 = vld [vmem:[#allocation3 + $0x188] sm:$0xff]
  %v696 = vld [vmem:[#allocation3 + $0x190] sm:$0xff]
  %v697 = vld [vmem:[#allocation3 + $0x198] sm:$0xff]
  %v698 = vld [vmem:[#allocation3 + $0x1a0] sm:$0xff]
  %v699 = vld [vmem:[#allocation3 + $0x1a8] sm:$0xff]
  %v700 = vld [vmem:[#allocation3 + $0x1b0] sm:$0xff]
  %v701 = vld [vmem:[#allocation3 + $0x1b8] sm:$0xff]
  %v702 = vld [vmem:[#allocation3 + $0x1c0] sm:$0xff]
  %v703 = vld [vmem:[#allocation3 + $0x1c8] sm:$0xff]
  %v704 = vld [vmem:[#allocation3 + $0x1d0] sm:$0xff]
  %v705 = vld [vmem:[#allocation3 + $0x1d8] sm:$0xff]
  %v706 = vld [vmem:[#allocation3 + $0x1e0] sm:$0xff]
  %v707 = vld [vmem:[#allocation3 + $0x1e8] sm:$0xff]
  %v708 = vld [vmem:[#allocation3 + $0x1f0] sm:$0xff]
  %v709 = vld [vmem:[#allocation3 + $0x1f8] sm:$0xff]
  %v774 = vunpack.c.l.b16 %v646
  %v775 = vunpack.c.h.b16 %v646
  %v776 = vunpack.c.l.b16 %v647
  %v777 = vunpack.c.h.b16 %v647
  %v778 = vunpack.c.l.b16 %v648
  %v779 = vunpack.c.h.b16 %v648
  %v780 = vunpack.c.l.b16 %v649
  %v781 = vunpack.c.h.b16 %v649
  %v782 = vunpack.c.l.b16 %v650
  %v783 = vunpack.c.h.b16 %v650
  %v784 = vunpack.c.l.b16 %v651
  %v785 = vunpack.c.h.b16 %v651
  %v786 = vunpack.c.l.b16 %v652
  %v787 = vunpack.c.h.b16 %v652
  %v788 = vunpack.c.l.b16 %v653
  %v789 = vunpack.c.h.b16 %v653
  %v790 = vunpack.c.l.b16 %v654
  %v791 = vunpack.c.h.b16 %v654
  %v792 = vunpack.c.l.b16 %v655
  %v793 = vunpack.c.h.b16 %v655
  %v794 = vunpack.c.l.b16 %v656
  %v795 = vunpack.c.h.b16 %v656
  %v796 = vunpack.c.l.b16 %v657
  %v797 = vunpack.c.h.b16 %v657
  %v798 = vunpack.c.l.b16 %v658
  %v799 = vunpack.c.h.b16 %v658
  %v800 = vunpack.c.l.b16 %v659
  %v801 = vunpack.c.h.b16 %v659
  %v802 = vunpack.c.l.b16 %v660
  %v803 = vunpack.c.h.b16 %v660
  %v804 = vunpack.c.l.b16 %v661
  %v805 = vunpack.c.h.b16 %v661
  %v806 = vunpack.c.l.b16 %v662
  %v807 = vunpack.c.h.b16 %v662
  %v808 = vunpack.c.l.b16 %v663
  %v809 = vunpack.c.h.b16 %v663
  %v810 = vunpack.c.l.b16 %v664
  %v811 = vunpack.c.h.b16 %v664
  %v812 = vunpack.c.l.b16 %v665
  %v813 = vunpack.c.h.b16 %v665
  %v814 = vunpack.c.l.b16 %v666
  %v815 = vunpack.c.h.b16 %v666
  %v816 = vunpack.c.l.b16 %v667
  %v817 = vunpack.c.h.b16 %v667
  %v818 = vunpack.c.l.b16 %v668
  %v819 = vunpack.c.h.b16 %v668
  %v820 = vunpack.c.l.b16 %v669
  %v821 = vunpack.c.h.b16 %v669
  %v822 = vunpack.c.l.b16 %v670
  %v823 = vunpack.c.h.b16 %v670
  %v824 = vunpack.c.l.b16 %v671
  %v825 = vunpack.c.h.b16 %v671
  %v826 = vunpack.c.l.b16 %v672
  %v827 = vunpack.c.h.b16 %v672
  %v828 = vunpack.c.l.b16 %v673
  %v829 = vunpack.c.h.b16 %v673
  %v830 = vunpack.c.l.b16 %v674
  %v831 = vunpack.c.h.b16 %v674
  %v832 = vunpack.c.l.b16 %v675
  %v833 = vunpack.c.h.b16 %v675
  %v834 = vunpack.c.l.b16 %v676
  %v835 = vunpack.c.h.b16 %v676
  %v836 = vunpack.c.l.b16 %v677
  %v837 = vunpack.c.h.b16 %v677
  %v838 = vunpack.c.l.b16 %v678
  %v839 = vunpack.c.h.b16 %v678
  %v840 = vunpack.c.l.b16 %v679
  %v841 = vunpack.c.h.b16 %v679
  %v842 = vunpack.c.l.b16 %v680
  %v843 = vunpack.c.h.b16 %v680
  %v844 = vunpack.c.l.b16 %v681
  %v845 = vunpack.c.h.b16 %v681
  %v846 = vunpack.c.l.b16 %v682
  %v847 = vunpack.c.h.b16 %v682
  %v848 = vunpack.c.l.b16 %v683
  %v849 = vunpack.c.h.b16 %v683
  %v850 = vunpack.c.l.b16 %v684
  %v851 = vunpack.c.h.b16 %v684
  %v852 = vunpack.c.l.b16 %v685
  %v853 = vunpack.c.h.b16 %v685
  %v854 = vunpack.c.l.b16 %v686
  %v855 = vunpack.c.h.b16 %v686
  %v856 = vunpack.c.l.b16 %v687
  %v857 = vunpack.c.h.b16 %v687
  %v858 = vunpack.c.l.b16 %v688
  %v859 = vunpack.c.h.b16 %v688
  %v860 = vunpack.c.l.b16 %v689
  %v861 = vunpack.c.h.b16 %v689
  %v862 = vunpack.c.l.b16 %v690
  %v863 = vunpack.c.h.b16 %v690
  %v864 = vunpack.c.l.b16 %v691
  %v865 = vunpack.c.h.b16 %v691
  %v866 = vunpack.c.l.b16 %v692
  %v867 = vunpack.c.h.b16 %v692
  %v868 = vunpack.c.l.b16 %v693
  %v869 = vunpack.c.h.b16 %v693
  %v870 = vunpack.c.l.b16 %v694
  %v871 = vunpack.c.h.b16 %v694
  %v872 = vunpack.c.l.b16 %v695
  %v873 = vunpack.c.h.b16 %v695
  %v874 = vunpack.c.l.b16 %v696
  %v875 = vunpack.c.h.b16 %v696
  %v876 = vunpack.c.l.b16 %v697
  %v877 = vunpack.c.h.b16 %v697
  %v878 = vunpack.c.l.b16 %v698
  %v879 = vunpack.c.h.b16 %v698
  %v880 = vunpack.c.l.b16 %v699
  %v881 = vunpack.c.h.b16 %v699
  %v882 = vunpack.c.l.b16 %v700
  %v883 = vunpack.c.h.b16 %v700
  %v884 = vunpack.c.l.b16 %v701
  %v885 = vunpack.c.h.b16 %v701
  %v886 = vunpack.c.l.b16 %v702
  %v887 = vunpack.c.h.b16 %v702
  %v888 = vunpack.c.l.b16 %v703
  %v889 = vunpack.c.h.b16 %v703
  %v890 = vunpack.c.l.b16 %v704
  %v891 = vunpack.c.h.b16 %v704
  %v892 = vunpack.c.l.b16 %v705
  %v893 = vunpack.c.h.b16 %v705
  %v894 = vunpack.c.l.b16 %v706
  %v895 = vunpack.c.h.b16 %v706
  %v896 = vunpack.c.l.b16 %v707
  %v897 = vunpack.c.h.b16 %v707
  %v898 = vunpack.c.l.b16 %v708
  %v899 = vunpack.c.h.b16 %v708
  %v900 = vunpack.c.l.b16 %v709
  %v901 = vunpack.c.h.b16 %v709
  %v902 = vpack.c.b16 %v778, %v774
  %v903 = vpack.c.b16 %v779, %v775
  %v904 = vpack.c.b16 %v780, %v776
  %v905 = vpack.c.b16 %v781, %v777
  %v906 = vpack.c.b16 %v786, %v782
  %v907 = vpack.c.b16 %v787, %v783
  %v908 = vpack.c.b16 %v788, %v784
  %v909 = vpack.c.b16 %v789, %v785
  %v910 = vpack.c.b16 %v794, %v790
  %v911 = vpack.c.b16 %v795, %v791
  %v912 = vpack.c.b16 %v796, %v792
  %v913 = vpack.c.b16 %v797, %v793
  %v914 = vpack.c.b16 %v802, %v798
  %v915 = vpack.c.b16 %v803, %v799
  %v916 = vpack.c.b16 %v804, %v800
  %v917 = vpack.c.b16 %v805, %v801
  %v918 = vpack.c.b16 %v810, %v806
  %v919 = vpack.c.b16 %v811, %v807
  %v920 = vpack.c.b16 %v812, %v808
  %v921 = vpack.c.b16 %v813, %v809
  %v922 = vpack.c.b16 %v818, %v814
  %v923 = vpack.c.b16 %v819, %v815
  %v924 = vpack.c.b16 %v820, %v816
  %v925 = vpack.c.b16 %v821, %v817
  %v926 = vpack.c.b16 %v826, %v822
  %v927 = vpack.c.b16 %v827, %v823
  %v928 = vpack.c.b16 %v828, %v824
  %v929 = vpack.c.b16 %v829, %v825
  %v930 = vpack.c.b16 %v834, %v830
  %v931 = vpack.c.b16 %v835, %v831
  %v932 = vpack.c.b16 %v836, %v832
  %v933 = vpack.c.b16 %v837, %v833
  %v934 = vpack.c.b16 %v842, %v838
  %v935 = vpack.c.b16 %v843, %v839
  %v936 = vpack.c.b16 %v844, %v840
  %v937 = vpack.c.b16 %v845, %v841
  %v938 = vpack.c.b16 %v850, %v846
  %v939 = vpack.c.b16 %v851, %v847
  %v940 = vpack.c.b16 %v852, %v848
  %v941 = vpack.c.b16 %v853, %v849
  %v942 = vpack.c.b16 %v858, %v854
  %v943 = vpack.c.b16 %v859, %v855
  %v944 = vpack.c.b16 %v860, %v856
  %v945 = vpack.c.b16 %v861, %v857
  %v946 = vpack.c.b16 %v866, %v862
  %v947 = vpack.c.b16 %v867, %v863
  %v948 = vpack.c.b16 %v868, %v864
  %v949 = vpack.c.b16 %v869, %v865
  %v950 = vpack.c.b16 %v874, %v870
  %v951 = vpack.c.b16 %v875, %v871
  %v952 = vpack.c.b16 %v876, %v872
  %v953 = vpack.c.b16 %v877, %v873
  %v954 = vpack.c.b16 %v882, %v878
  %v955 = vpack.c.b16 %v883, %v879
  %v956 = vpack.c.b16 %v884, %v880
  %v957 = vpack.c.b16 %v885, %v881
  %v958 = vpack.c.b16 %v890, %v886
  %v959 = vpack.c.b16 %v891, %v887
  %v960 = vpack.c.b16 %v892, %v888
  %v961 = vpack.c.b16 %v893, %v889
  %v962 = vpack.c.b16 %v898, %v894
  %v963 = vpack.c.b16 %v899, %v895
  %v964 = vpack.c.b16 %v900, %v896
  %v965 = vpack.c.b16 %v901, %v897
  %1030 = vmatprep.subr.bf16.mxu0 %v931
  %1031 = vmatpush1.bf16.msra.mxu0 %v930
  %1032 = vmatprep.subr.bf16.mxu0 %v927
  %1033 = vmatpush1.bf16.msra.mxu0 %v926
  %1034 = vmatprep.subr.bf16.mxu0 %v923
  %1035 = vmatpush1.bf16.msra.mxu0 %v922
  %1036 = vmatprep.subr.bf16.mxu0 %v919
  %1037 = vmatpush1.bf16.msra.mxu0 %v918
  %1038 = vmatprep.subr.bf16.mxu0 %v915
  %1039 = vmatpush1.bf16.msra.mxu0 %v914
  %1040 = vmatprep.subr.bf16.mxu0 %v911
  %1041 = vmatpush1.bf16.msra.mxu0 %v910
  %1042 = vmatprep.subr.bf16.mxu0 %v907
  %1043 = vmatpush1.bf16.msra.mxu0 %v906
  %1044 = vmatprep.subr.bf16.mxu0 %v903
  %1045 = vmatpush1.bf16.msra.mxu0 %v902
  %1046 = vmatprep.subr.bf16.mxu0 %v963
  %1047 = vmatpush2.bf16.msra.mxu0 %v962
  %1048 = vmatprep.subr.bf16.mxu0 %v959
  %1049 = vmatpush2.bf16.msra.mxu0 %v958
  %1050 = vmatprep.subr.bf16.mxu0 %v955
  %1051 = vmatpush2.bf16.msra.mxu0 %v954
  %1052 = vmatprep.subr.bf16.mxu0 %v951
  %1053 = vmatpush2.bf16.msra.mxu0 %v950
  %1054 = vmatprep.subr.bf16.mxu0 %v947
  %1055 = vmatpush2.bf16.msra.mxu0 %v946
  %1056 = vmatprep.subr.bf16.mxu0 %v943
  %1057 = vmatpush2.bf16.msra.mxu0 %v942
  %1058 = vmatprep.subr.bf16.mxu0 %v939
  %1059 = vmatpush2.bf16.msra.mxu0 %v938
  %1060 = vmatprep.subr.bf16.mxu0 %v935
  %1061 = vmatpush2.bf16.msra.mxu0 %v934
  %1062 = vmatprep.mubr.bf16.mxu0 %v645
  %1063 = vmatmul.mubr.bf16.gmra.mxu0 %v644
  %v1064 = vpop.f32.mrf.mxu0
  %v1065 = vadd.f32 0.0, %v1064
  %v1066 = vpop.f32.mrf.mxu0
  %v1067 = vadd.f32 0.0, %v1066
  %v1068 = vpop.f32.mrf.mxu0
  %v1069 = vpop.f32.mrf.mxu0
  %1070 = vdwg.mxu0
  %1071 = vmatprep.subr.bf16.mxu0 %v933
  %1072 = vmatpush1.bf16.msra.mxu0 %v932
  %1073 = vmatprep.subr.bf16.mxu0 %v929
  %1074 = vmatpush1.bf16.msra.mxu0 %v928
  %1075 = vmatprep.subr.bf16.mxu0 %v925
  %1076 = vmatpush1.bf16.msra.mxu0 %v924
  %1077 = vmatprep.subr.bf16.mxu0 %v921
  %1078 = vmatpush1.bf16.msra.mxu0 %v920
  %1079 = vmatprep.subr.bf16.mxu0 %v917
  %1080 = vmatpush1.bf16.msra.mxu0 %v916
  %1081 = vmatprep.subr.bf16.mxu0 %v913
  %1082 = vmatpush1.bf16.msra.mxu0 %v912
  %1083 = vmatprep.subr.bf16.mxu0 %v909
  %1084 = vmatpush1.bf16.msra.mxu0 %v908
  %1085 = vmatprep.subr.bf16.mxu0 %v905
  %1086 = vmatpush1.bf16.msra.mxu0 %v904
  %1087 = vmatprep.subr.bf16.mxu0 %v965
  %1088 = vmatpush2.bf16.msra.mxu0 %v964
  %1089 = vmatprep.subr.bf16.mxu0 %v961
  %1090 = vmatpush2.bf16.msra.mxu0 %v960
  %1091 = vmatprep.subr.bf16.mxu0 %v957
  %1092 = vmatpush2.bf16.msra.mxu0 %v956
  %1093 = vmatprep.subr.bf16.mxu0 %v953
  %1094 = vmatpush2.bf16.msra.mxu0 %v952
  %1095 = vmatprep.subr.bf16.mxu0 %v949
  %1096 = vmatpush2.bf16.msra.mxu0 %v948
  %1097 = vmatprep.subr.bf16.mxu0 %v945
  %1098 = vmatpush2.bf16.msra.mxu0 %v944
  %1099 = vmatprep.subr.bf16.mxu0 %v941
  %1100 = vmatpush2.bf16.msra.mxu0 %v940
  %1101 = vmatprep.subr.bf16.mxu0 %v937
  %1102 = vmatpush2.bf16.msra.mxu0 %v936
  %1103 = vmatprep.mubr.bf16.mxu0 %v645
  %1104 = vmatmul.mubr.bf16.gmra.mxu0 %v644
  %v1105 = vpop.f32.mrf.mxu0
  %v1106 = vadd.f32 0.0, %v1105
  %v1107 = vpop.f32.mrf.mxu0
  %v1108 = vadd.f32 0.0, %v1107
  %v1109 = vpop.f32.mrf.mxu0
  %v1110 = vpop.f32.mrf.mxu0
  %1111 = vdwg.mxu0
  %v1112 = vsel %vm527, %v1065, 0.0
  %v1113 = vrot.slane %v1112, 4
  %v1114 = vadd.f32 %v1112, %v1113
  %v1115 = vrot.slane %v1114, 2
  %v1116 = vadd.f32 %v1114, %v1115
  %v1117 = vrot.slane %v1116, 1
  %v1118 = vadd.f32 %v1116, %v1117
  %v1119 = vsel %vm527, %v1067, 0.0
  %v1120 = vrot.slane %v1119, 4
  %v1121 = vadd.f32 %v1119, %v1120
  %v1122 = vrot.slane %v1121, 2
  %v1123 = vadd.f32 %v1121, %v1122
  %v1124 = vrot.slane %v1123, 1
  %v1125 = vadd.f32 %v1123, %v1124
  %v1126 = vsel %vm527, %v1106, 0.0
  %v1127 = vrot.slane %v1126, 4
  %v1128 = vadd.f32 %v1126, %v1127
  %v1129 = vrot.slane %v1128, 2
  %v1130 = vadd.f32 %v1128, %v1129
  %v1131 = vrot.slane %v1130, 1
  %v1132 = vadd.f32 %v1130, %v1131
  %v1133 = vsel %vm527, %v1108, 0.0
  %v1134 = vrot.slane %v1133, 4
  %v1135 = vadd.f32 %v1133, %v1134
  %v1136 = vrot.slane %v1135, 2
  %v1137 = vadd.f32 %v1135, %v1136
  %v1138 = vrot.slane %v1137, 1
  %v1139 = vadd.f32 %v1137, %v1138
  %v1140 = vmul.f32 %v1065, %v1065
  %v1141 = vmul.f32 %v1067, %v1067
  %v1142 = vmul.f32 %v1106, %v1106
  %v1143 = vmul.f32 %v1108, %v1108
  %v1144 = vsel %vm527, %v1140, 0.0
  %v1145 = vrot.slane %v1144, 4
  %v1146 = vadd.f32 %v1144, %v1145
  %v1147 = vrot.slane %v1146, 2
  %v1148 = vadd.f32 %v1146, %v1147
  %v1149 = vrot.slane %v1148, 1
  %v1150 = vadd.f32 %v1148, %v1149
  %v1151 = vsel %vm527, %v1141, 0.0
  %v1152 = vrot.slane %v1151, 4
  %v1153 = vadd.f32 %v1151, %v1152
  %v1154 = vrot.slane %v1153, 2
  %v1155 = vadd.f32 %v1153, %v1154
  %v1156 = vrot.slane %v1155, 1
  %v1157 = vadd.f32 %v1155, %v1156
  %v1158 = vsel %vm527, %v1142, 0.0
  %v1159 = vrot.slane %v1158, 4
  %v1160 = vadd.f32 %v1158, %v1159
  %v1161 = vrot.slane %v1160, 2
  %v1162 = vadd.f32 %v1160, %v1161
  %v1163 = vrot.slane %v1162, 1
  %v1164 = vadd.f32 %v1162, %v1163
  %v1165 = vsel %vm527, %v1143, 0.0
  %v1166 = vrot.slane %v1165, 4
  %v1167 = vadd.f32 %v1165, %v1166
  %v1168 = vrot.slane %v1167, 2
  %v1169 = vadd.f32 %v1167, %v1168
  %v1170 = vrot.slane %v1169, 1
  %v1171 = vadd.f32 %v1169, %v1170
  %v1172 = vadd.f32 %v1118, %v1125
  %v1173 = vadd.f32 %v1150, %v1157
  %v1174 = vadd.f32 %v1172, %v1132
  %v1175 = vadd.f32 %v1173, %v1164
  %v1176 = vadd.f32 %v1174, %v1139
  %v1177 = vadd.f32 %v1175, %v1171
  %v1178 = vmul.f32 %v1176, 0.125
  %v1179 = vmul.f32 %v1177, 0.125
  %v1180 = vmul.f32 %v1178, %v1178
  %v1181 = vsub.f32 %v1179, %v1180
  %v1182 = vld [vmem:[%s5] sm:$0x1]
  %v1183 = vadd.f32 %v1181, 1e-05
  %v1184 = vrsqrt.pop %v1183
  %v1185 = vmul.f32 %v1182, %v1184
  %v1186 = vld [vmem:[%s6] sm:$0x1]
  %v1187 = vmul.f32 %v1178, %v1185
  %v1188 = vsub.f32 %v1186, %v1187
  %v1189 = vlaneseq
  %v1190 = vshrl.u32 %v1189, 7
  %v1191 = vsub.s32 0, %v1190
  %v1192 = vrot.slane %v1185, %v1191
  %v1193 = vmul.f32 %v1065, %v1192
  %v1194 = vmul.f32 %v1067, %v1192
  %v1195 = vmul.f32 %v1106, %v1192
  %v1196 = vmul.f32 %v1108, %v1192
  %v1197 = vlaneseq
  %v1198 = vshrl.u32 %v1197, 7
  %v1199 = vsub.s32 0, %v1198
  %v1200 = vrot.slane %v1188, %v1199
  %v1201 = vadd.f32 %v1193, %v1200
  %v1202 = vadd.f32 %v1194, %v1200
  %v1203 = vadd.f32 %v1195, %v1200
  %v1204 = vadd.f32 %v1196, %v1200
  %v1205 = vmax.f32 %v1201, 0.0
  %v1206 = vmax.f32 %v1202, 0.0
  %v1207 = vmax.f32 %v1203, 0.0
  %v1208 = vmax.f32 %v1204, 0.0
  %s1209 = smul.u32 4, 64
  %s1210 = smul.u32 %s1209, 8
  %s1211 = sshll.u32 %s1210, 4
  %1212 = dma.done %s202, %s1211
  %v1213 = vpack.c.bf16 %v1205, %v1205
  %v1214 = vpack.c.bf16 %v1206, %v1206
  %v1215 = vpack.c.bf16 %v1207, %v1207
  %v1216 = vpack.c.bf16 %v1208, %v1208
  %v1217 = vld [vmem:[#allocation4] sm:$0xff]
  %v1218 = vld [vmem:[#allocation4 + $0x8] sm:$0xff]
  %v1219 = vld [vmem:[#allocation4 + $0x10] sm:$0xff]
  %v1220 = vld [vmem:[#allocation4 + $0x18] sm:$0xff]
  %v1221 = vld [vmem:[#allocation4 + $0x20] sm:$0xff]
  %v1222 = vld [vmem:[#allocation4 + $0x28] sm:$0xff]
  %v1223 = vld [vmem:[#allocation4 + $0x30] sm:$0xff]
  %v1224 = vld [vmem:[#allocation4 + $0x38] sm:$0xff]
  %v1225 = vld [vmem:[#allocation4 + $0x40] sm:$0xff]
  %v1226 = vld [vmem:[#allocation4 + $0x48] sm:$0xff]
  %v1227 = vld [vmem:[#allocation4 + $0x50] sm:$0xff]
  %v1228 = vld [vmem:[#allocation4 + $0x58] sm:$0xff]
  %v1229 = vld [vmem:[#allocation4 + $0x60] sm:$0xff]
  %v1230 = vld [vmem:[#allocation4 + $0x68] sm:$0xff]
  %v1231 = vld [vmem:[#allocation4 + $0x70] sm:$0xff]
  %v1232 = vld [vmem:[#allocation4 + $0x78] sm:$0xff]
  %v1233 = vld [vmem:[#allocation4 + $0x80] sm:$0xff]
  %v1234 = vld [vmem:[#allocation4 + $0x88] sm:$0xff]
  %v1235 = vld [vmem:[#allocation4 + $0x90] sm:$0xff]
  %v1236 = vld [vmem:[#allocation4 + $0x98] sm:$0xff]
  %v1237 = vld [vmem:[#allocation4 + $0xa0] sm:$0xff]
  %v1238 = vld [vmem:[#allocation4 + $0xa8] sm:$0xff]
  %v1239 = vld [vmem:[#allocation4 + $0xb0] sm:$0xff]
  %v1240 = vld [vmem:[#allocation4 + $0xb8] sm:$0xff]
  %v1241 = vld [vmem:[#allocation4 + $0xc0] sm:$0xff]
  %v1242 = vld [vmem:[#allocation4 + $0xc8] sm:$0xff]
  %v1243 = vld [vmem:[#allocation4 + $0xd0] sm:$0xff]
  %v1244 = vld [vmem:[#allocation4 + $0xd8] sm:$0xff]
  %v1245 = vld [vmem:[#allocation4 + $0xe0] sm:$0xff]
  %v1246 = vld [vmem:[#allocation4 + $0xe8] sm:$0xff]
  %v1247 = vld [vmem:[#allocation4 + $0xf0] sm:$0xff]
  %v1248 = vld [vmem:[#allocation4 + $0xf8] sm:$0xff]
  %v1249 = vld [vmem:[#allocation4 + $0x100] sm:$0xff]
  %v1250 = vld [vmem:[#allocation4 + $0x108] sm:$0xff]
  %v1251 = vld [vmem:[#allocation4 + $0x110] sm:$0xff]
  %v1252 = vld [vmem:[#allocation4 + $0x118] sm:$0xff]
  %v1253 = vld [vmem:[#allocation4 + $0x120] sm:$0xff]
  %v1254 = vld [vmem:[#allocation4 + $0x128] sm:$0xff]
  %v1255 = vld [vmem:[#allocation4 + $0x130] sm:$0xff]
  %v1256 = vld [vmem:[#allocation4 + $0x138] sm:$0xff]
  %v1257 = vld [vmem:[#allocation4 + $0x140] sm:$0xff]
  %v1258 = vld [vmem:[#allocation4 + $0x148] sm:$0xff]
  %v1259 = vld [vmem:[#allocation4 + $0x150] sm:$0xff]
  %v1260 = vld [vmem:[#allocation4 + $0x158] sm:$0xff]
  %v1261 = vld [vmem:[#allocation4 + $0x160] sm:$0xff]
  %v1262 = vld [vmem:[#allocation4 + $0x168] sm:$0xff]
  %v1263 = vld [vmem:[#allocation4 + $0x170] sm:$0xff]
  %v1264 = vld [vmem:[#allocation4 + $0x178] sm:$0xff]
  %v1265 = vld [vmem:[#allocation4 + $0x180] sm:$0xff]
  %v1266 = vld [vmem:[#allocation4 + $0x188] sm:$0xff]
  %v1267 = vld [vmem:[#allocation4 + $0x190] sm:$0xff]
  %v1268 = vld [vmem:[#allocation4 + $0x198] sm:$0xff]
  %v1269 = vld [vmem:[#allocation4 + $0x1a0] sm:$0xff]
  %v1270 = vld [vmem:[#allocation4 + $0x1a8] sm:$0xff]
  %v1271 = vld [vmem:[#allocation4 + $0x1b0] sm:$0xff]
  %v1272 = vld [vmem:[#allocation4 + $0x1b8] sm:$0xff]
  %v1273 = vld [vmem:[#allocation4 + $0x1c0] sm:$0xff]
  %v1274 = vld [vmem:[#allocation4 + $0x1c8] sm:$0xff]
  %v1275 = vld [vmem:[#allocation4 + $0x1d0] sm:$0xff]
  %v1276 = vld [vmem:[#allocation4 + $0x1d8] sm:$0xff]
  %v1277 = vld [vmem:[#allocation4 + $0x1e0] sm:$0xff]
  %v1278 = vld [vmem:[#allocation4 + $0x1e8] sm:$0xff]
  %v1279 = vld [vmem:[#allocation4 + $0x1f0] sm:$0xff]
  %v1280 = vld [vmem:[#allocation4 + $0x1f8] sm:$0xff]
  %v1281 = vld [vmem:[#allocation4 + $0x200] sm:$0xff]
  %v1282 = vld [vmem:[#allocation4 + $0x208] sm:$0xff]
  %v1283 = vld [vmem:[#allocation4 + $0x210] sm:$0xff]
  %v1284 = vld [vmem:[#allocation4 + $0x218] sm:$0xff]
  %v1285 = vld [vmem:[#allocation4 + $0x220] sm:$0xff]
  %v1286 = vld [vmem:[#allocation4 + $0x228] sm:$0xff]
  %v1287 = vld [vmem:[#allocation4 + $0x230] sm:$0xff]
  %v1288 = vld [vmem:[#allocation4 + $0x238] sm:$0xff]
  %v1289 = vld [vmem:[#allocation4 + $0x240] sm:$0xff]
  %v1290 = vld [vmem:[#allocation4 + $0x248] sm:$0xff]
  %v1291 = vld [vmem:[#allocation4 + $0x250] sm:$0xff]
  %v1292 = vld [vmem:[#allocation4 + $0x258] sm:$0xff]
  %v1293 = vld [vmem:[#allocation4 + $0x260] sm:$0xff]
  %v1294 = vld [vmem:[#allocation4 + $0x268] sm:$0xff]
  %v1295 = vld [vmem:[#allocation4 + $0x270] sm:$0xff]
  %v1296 = vld [vmem:[#allocation4 + $0x278] sm:$0xff]
  %v1297 = vld [vmem:[#allocation4 + $0x280] sm:$0xff]
  %v1298 = vld [vmem:[#allocation4 + $0x288] sm:$0xff]
  %v1299 = vld [vmem:[#allocation4 + $0x290] sm:$0xff]
  %v1300 = vld [vmem:[#allocation4 + $0x298] sm:$0xff]
  %v1301 = vld [vmem:[#allocation4 + $0x2a0] sm:$0xff]
  %v1302 = vld [vmem:[#allocation4 + $0x2a8] sm:$0xff]
  %v1303 = vld [vmem:[#allocation4 + $0x2b0] sm:$0xff]
  %v1304 = vld [vmem:[#allocation4 + $0x2b8] sm:$0xff]
  %v1305 = vld [vmem:[#allocation4 + $0x2c0] sm:$0xff]
  %v1306 = vld [vmem:[#allocation4 + $0x2c8] sm:$0xff]
  %v1307 = vld [vmem:[#allocation4 + $0x2d0] sm:$0xff]
  %v1308 = vld [vmem:[#allocation4 + $0x2d8] sm:$0xff]
  %v1309 = vld [vmem:[#allocation4 + $0x2e0] sm:$0xff]
  %v1310 = vld [vmem:[#allocation4 + $0x2e8] sm:$0xff]
  %v1311 = vld [vmem:[#allocation4 + $0x2f0] sm:$0xff]
  %v1312 = vld [vmem:[#allocation4 + $0x2f8] sm:$0xff]
  %v1313 = vld [vmem:[#allocation4 + $0x300] sm:$0xff]
  %v1314 = vld [vmem:[#allocation4 + $0x308] sm:$0xff]
  %v1315 = vld [vmem:[#allocation4 + $0x310] sm:$0xff]
  %v1316 = vld [vmem:[#allocation4 + $0x318] sm:$0xff]
  %v1317 = vld [vmem:[#allocation4 + $0x320] sm:$0xff]
  %v1318 = vld [vmem:[#allocation4 + $0x328] sm:$0xff]
  %v1319 = vld [vmem:[#allocation4 + $0x330] sm:$0xff]
  %v1320 = vld [vmem:[#allocation4 + $0x338] sm:$0xff]
  %v1321 = vld [vmem:[#allocation4 + $0x340] sm:$0xff]
  %v1322 = vld [vmem:[#allocation4 + $0x348] sm:$0xff]
  %v1323 = vld [vmem:[#allocation4 + $0x350] sm:$0xff]
  %v1324 = vld [vmem:[#allocation4 + $0x358] sm:$0xff]
  %v1325 = vld [vmem:[#allocation4 + $0x360] sm:$0xff]
  %v1326 = vld [vmem:[#allocation4 + $0x368] sm:$0xff]
  %v1327 = vld [vmem:[#allocation4 + $0x370] sm:$0xff]
  %v1328 = vld [vmem:[#allocation4 + $0x378] sm:$0xff]
  %v1329 = vld [vmem:[#allocation4 + $0x380] sm:$0xff]
  %v1330 = vld [vmem:[#allocation4 + $0x388] sm:$0xff]
  %v1331 = vld [vmem:[#allocation4 + $0x390] sm:$0xff]
  %v1332 = vld [vmem:[#allocation4 + $0x398] sm:$0xff]
  %v1333 = vld [vmem:[#allocation4 + $0x3a0] sm:$0xff]
  %v1334 = vld [vmem:[#allocation4 + $0x3a8] sm:$0xff]
  %v1335 = vld [vmem:[#allocation4 + $0x3b0] sm:$0xff]
  %v1336 = vld [vmem:[#allocation4 + $0x3b8] sm:$0xff]
  %v1337 = vld [vmem:[#allocation4 + $0x3c0] sm:$0xff]
  %v1338 = vld [vmem:[#allocation4 + $0x3c8] sm:$0xff]
  %v1339 = vld [vmem:[#allocation4 + $0x3d0] sm:$0xff]
  %v1340 = vld [vmem:[#allocation4 + $0x3d8] sm:$0xff]
  %v1341 = vld [vmem:[#allocation4 + $0x3e0] sm:$0xff]
  %v1342 = vld [vmem:[#allocation4 + $0x3e8] sm:$0xff]
  %v1343 = vld [vmem:[#allocation4 + $0x3f0] sm:$0xff]
  %v1344 = vld [vmem:[#allocation4 + $0x3f8] sm:$0xff]
  %v1345 = vld [vmem:[#allocation4 + $0x400] sm:$0xff]
  %v1346 = vld [vmem:[#allocation4 + $0x408] sm:$0xff]
  %v1347 = vld [vmem:[#allocation4 + $0x410] sm:$0xff]
  %v1348 = vld [vmem:[#allocation4 + $0x418] sm:$0xff]
  %v1349 = vld [vmem:[#allocation4 + $0x420] sm:$0xff]
  %v1350 = vld [vmem:[#allocation4 + $0x428] sm:$0xff]
  %v1351 = vld [vmem:[#allocation4 + $0x430] sm:$0xff]
  %v1352 = vld [vmem:[#allocation4 + $0x438] sm:$0xff]
  %v1353 = vld [vmem:[#allocation4 + $0x440] sm:$0xff]
  %v1354 = vld [vmem:[#allocation4 + $0x448] sm:$0xff]
  %v1355 = vld [vmem:[#allocation4 + $0x450] sm:$0xff]
  %v1356 = vld [vmem:[#allocation4 + $0x458] sm:$0xff]
  %v1357 = vld [vmem:[#allocation4 + $0x460] sm:$0xff]
  %v1358 = vld [vmem:[#allocation4 + $0x468] sm:$0xff]
  %v1359 = vld [vmem:[#allocation4 + $0x470] sm:$0xff]
  %v1360 = vld [vmem:[#allocation4 + $0x478] sm:$0xff]
  %v1361 = vld [vmem:[#allocation4 + $0x480] sm:$0xff]
  %v1362 = vld [vmem:[#allocation4 + $0x488] sm:$0xff]
  %v1363 = vld [vmem:[#allocation4 + $0x490] sm:$0xff]
  %v1364 = vld [vmem:[#allocation4 + $0x498] sm:$0xff]
  %v1365 = vld [vmem:[#allocation4 + $0x4a0] sm:$0xff]
  %v1366 = vld [vmem:[#allocation4 + $0x4a8] sm:$0xff]
  %v1367 = vld [vmem:[#allocation4 + $0x4b0] sm:$0xff]
  %v1368 = vld [vmem:[#allocation4 + $0x4b8] sm:$0xff]
  %v1369 = vld [vmem:[#allocation4 + $0x4c0] sm:$0xff]
  %v1370 = vld [vmem:[#allocation4 + $0x4c8] sm:$0xff]
  %v1371 = vld [vmem:[#allocation4 + $0x4d0] sm:$0xff]
  %v1372 = vld [vmem:[#allocation4 + $0x4d8] sm:$0xff]
  %v1373 = vld [vmem:[#allocation4 + $0x4e0] sm:$0xff]
  %v1374 = vld [vmem:[#allocation4 + $0x4e8] sm:$0xff]
  %v1375 = vld [vmem:[#allocation4 + $0x4f0] sm:$0xff]
  %v1376 = vld [vmem:[#allocation4 + $0x4f8] sm:$0xff]
  %v1377 = vld [vmem:[#allocation4 + $0x500] sm:$0xff]
  %v1378 = vld [vmem:[#allocation4 + $0x508] sm:$0xff]
  %v1379 = vld [vmem:[#allocation4 + $0x510] sm:$0xff]
  %v1380 = vld [vmem:[#allocation4 + $0x518] sm:$0xff]
  %v1381 = vld [vmem:[#allocation4 + $0x520] sm:$0xff]
  %v1382 = vld [vmem:[#allocation4 + $0x528] sm:$0xff]
  %v1383 = vld [vmem:[#allocation4 + $0x530] sm:$0xff]
  %v1384 = vld [vmem:[#allocation4 + $0x538] sm:$0xff]
  %v1385 = vld [vmem:[#allocation4 + $0x540] sm:$0xff]
  %v1386 = vld [vmem:[#allocation4 + $0x548] sm:$0xff]
  %v1387 = vld [vmem:[#allocation4 + $0x550] sm:$0xff]
  %v1388 = vld [vmem:[#allocation4 + $0x558] sm:$0xff]
  %v1389 = vld [vmem:[#allocation4 + $0x560] sm:$0xff]
  %v1390 = vld [vmem:[#allocation4 + $0x568] sm:$0xff]
  %v1391 = vld [vmem:[#allocation4 + $0x570] sm:$0xff]
  %v1392 = vld [vmem:[#allocation4 + $0x578] sm:$0xff]
  %v1393 = vld [vmem:[#allocation4 + $0x580] sm:$0xff]
  %v1394 = vld [vmem:[#allocation4 + $0x588] sm:$0xff]
  %v1395 = vld [vmem:[#allocation4 + $0x590] sm:$0xff]
  %v1396 = vld [vmem:[#allocation4 + $0x598] sm:$0xff]
  %v1397 = vld [vmem:[#allocation4 + $0x5a0] sm:$0xff]
  %v1398 = vld [vmem:[#allocation4 + $0x5a8] sm:$0xff]
  %v1399 = vld [vmem:[#allocation4 + $0x5b0] sm:$0xff]
  %v1400 = vld [vmem:[#allocation4 + $0x5b8] sm:$0xff]
  %v1401 = vld [vmem:[#allocation4 + $0x5c0] sm:$0xff]
  %v1402 = vld [vmem:[#allocation4 + $0x5c8] sm:$0xff]
  %v1403 = vld [vmem:[#allocation4 + $0x5d0] sm:$0xff]
  %v1404 = vld [vmem:[#allocation4 + $0x5d8] sm:$0xff]
  %v1405 = vld [vmem:[#allocation4 + $0x5e0] sm:$0xff]
  %v1406 = vld [vmem:[#allocation4 + $0x5e8] sm:$0xff]
  %v1407 = vld [vmem:[#allocation4 + $0x5f0] sm:$0xff]
  %v1408 = vld [vmem:[#allocation4 + $0x5f8] sm:$0xff]
  %v1409 = vld [vmem:[#allocation4 + $0x600] sm:$0xff]
  %v1410 = vld [vmem:[#allocation4 + $0x608] sm:$0xff]
  %v1411 = vld [vmem:[#allocation4 + $0x610] sm:$0xff]
  %v1412 = vld [vmem:[#allocation4 + $0x618] sm:$0xff]
  %v1413 = vld [vmem:[#allocation4 + $0x620] sm:$0xff]
  %v1414 = vld [vmem:[#allocation4 + $0x628] sm:$0xff]
  %v1415 = vld [vmem:[#allocation4 + $0x630] sm:$0xff]
  %v1416 = vld [vmem:[#allocation4 + $0x638] sm:$0xff]
  %v1417 = vld [vmem:[#allocation4 + $0x640] sm:$0xff]
  %v1418 = vld [vmem:[#allocation4 + $0x648] sm:$0xff]
  %v1419 = vld [vmem:[#allocation4 + $0x650] sm:$0xff]
  %v1420 = vld [vmem:[#allocation4 + $0x658] sm:$0xff]
  %v1421 = vld [vmem:[#allocation4 + $0x660] sm:$0xff]
  %v1422 = vld [vmem:[#allocation4 + $0x668] sm:$0xff]
  %v1423 = vld [vmem:[#allocation4 + $0x670] sm:$0xff]
  %v1424 = vld [vmem:[#allocation4 + $0x678] sm:$0xff]
  %v1425 = vld [vmem:[#allocation4 + $0x680] sm:$0xff]
  %v1426 = vld [vmem:[#allocation4 + $0x688] sm:$0xff]
  %v1427 = vld [vmem:[#allocation4 + $0x690] sm:$0xff]
  %v1428 = vld [vmem:[#allocation4 + $0x698] sm:$0xff]
  %v1429 = vld [vmem:[#allocation4 + $0x6a0] sm:$0xff]
  %v1430 = vld [vmem:[#allocation4 + $0x6a8] sm:$0xff]
  %v1431 = vld [vmem:[#allocation4 + $0x6b0] sm:$0xff]
  %v1432 = vld [vmem:[#allocation4 + $0x6b8] sm:$0xff]
  %v1433 = vld [vmem:[#allocation4 + $0x6c0] sm:$0xff]
  %v1434 = vld [vmem:[#allocation4 + $0x6c8] sm:$0xff]
  %v1435 = vld [vmem:[#allocation4 + $0x6d0] sm:$0xff]
  %v1436 = vld [vmem:[#allocation4 + $0x6d8] sm:$0xff]
  %v1437 = vld [vmem:[#allocation4 + $0x6e0] sm:$0xff]
  %v1438 = vld [vmem:[#allocation4 + $0x6e8] sm:$0xff]
  %v1439 = vld [vmem:[#allocation4 + $0x6f0] sm:$0xff]
  %v1440 = vld [vmem:[#allocation4 + $0x6f8] sm:$0xff]
  %v1441 = vld [vmem:[#allocation4 + $0x700] sm:$0xff]
  %v1442 = vld [vmem:[#allocation4 + $0x708] sm:$0xff]
  %v1443 = vld [vmem:[#allocation4 + $0x710] sm:$0xff]
  %v1444 = vld [vmem:[#allocation4 + $0x718] sm:$0xff]
  %v1445 = vld [vmem:[#allocation4 + $0x720] sm:$0xff]
  %v1446 = vld [vmem:[#allocation4 + $0x728] sm:$0xff]
  %v1447 = vld [vmem:[#allocation4 + $0x730] sm:$0xff]
  %v1448 = vld [vmem:[#allocation4 + $0x738] sm:$0xff]
  %v1449 = vld [vmem:[#allocation4 + $0x740] sm:$0xff]
  %v1450 = vld [vmem:[#allocation4 + $0x748] sm:$0xff]
  %v1451 = vld [vmem:[#allocation4 + $0x750] sm:$0xff]
  %v1452 = vld [vmem:[#allocation4 + $0x758] sm:$0xff]
  %v1453 = vld [vmem:[#allocation4 + $0x760] sm:$0xff]
  %v1454 = vld [vmem:[#allocation4 + $0x768] sm:$0xff]
  %v1455 = vld [vmem:[#allocation4 + $0x770] sm:$0xff]
  %v1456 = vld [vmem:[#allocation4 + $0x778] sm:$0xff]
  %v1457 = vld [vmem:[#allocation4 + $0x780] sm:$0xff]
  %v1458 = vld [vmem:[#allocation4 + $0x788] sm:$0xff]
  %v1459 = vld [vmem:[#allocation4 + $0x790] sm:$0xff]
  %v1460 = vld [vmem:[#allocation4 + $0x798] sm:$0xff]
  %v1461 = vld [vmem:[#allocation4 + $0x7a0] sm:$0xff]
  %v1462 = vld [vmem:[#allocation4 + $0x7a8] sm:$0xff]
  %v1463 = vld [vmem:[#allocation4 + $0x7b0] sm:$0xff]
  %v1464 = vld [vmem:[#allocation4 + $0x7b8] sm:$0xff]
  %v1465 = vld [vmem:[#allocation4 + $0x7c0] sm:$0xff]
  %v1466 = vld [vmem:[#allocation4 + $0x7c8] sm:$0xff]
  %v1467 = vld [vmem:[#allocation4 + $0x7d0] sm:$0xff]
  %v1468 = vld [vmem:[#allocation4 + $0x7d8] sm:$0xff]
  %v1469 = vld [vmem:[#allocation4 + $0x7e0] sm:$0xff]
  %v1470 = vld [vmem:[#allocation4 + $0x7e8] sm:$0xff]
  %v1471 = vld [vmem:[#allocation4 + $0x7f0] sm:$0xff]
  %v1472 = vld [vmem:[#allocation4 + $0x7f8] sm:$0xff]
  %v1729 = vunpack.c.l.b16 %v1217
  %v1730 = vunpack.c.h.b16 %v1217
  %v1731 = vunpack.c.l.b16 %v1218
  %v1732 = vunpack.c.h.b16 %v1218
  %v1733 = vunpack.c.l.b16 %v1219
  %v1734 = vunpack.c.h.b16 %v1219
  %v1735 = vunpack.c.l.b16 %v1220
  %v1736 = vunpack.c.h.b16 %v1220
  %v1737 = vunpack.c.l.b16 %v1221
  %v1738 = vunpack.c.h.b16 %v1221
  %v1739 = vunpack.c.l.b16 %v1222
  %v1740 = vunpack.c.h.b16 %v1222
  %v1741 = vunpack.c.l.b16 %v1223
  %v1742 = vunpack.c.h.b16 %v1223
  %v1743 = vunpack.c.l.b16 %v1224
  %v1744 = vunpack.c.h.b16 %v1224
  %v1745 = vunpack.c.l.b16 %v1225
  %v1746 = vunpack.c.h.b16 %v1225
  %v1747 = vunpack.c.l.b16 %v1226
  %v1748 = vunpack.c.h.b16 %v1226
  %v1749 = vunpack.c.l.b16 %v1227
  %v1750 = vunpack.c.h.b16 %v1227
  %v1751 = vunpack.c.l.b16 %v1228
  %v1752 = vunpack.c.h.b16 %v1228
  %v1753 = vunpack.c.l.b16 %v1229
  %v1754 = vunpack.c.h.b16 %v1229
  %v1755 = vunpack.c.l.b16 %v1230
  %v1756 = vunpack.c.h.b16 %v1230
  %v1757 = vunpack.c.l.b16 %v1231
  %v1758 = vunpack.c.h.b16 %v1231
  %v1759 = vunpack.c.l.b16 %v1232
  %v1760 = vunpack.c.h.b16 %v1232
  %v1761 = vunpack.c.l.b16 %v1233
  %v1762 = vunpack.c.h.b16 %v1233
  %v1763 = vunpack.c.l.b16 %v1234
  %v1764 = vunpack.c.h.b16 %v1234
  %v1765 = vunpack.c.l.b16 %v1235
  %v1766 = vunpack.c.h.b16 %v1235
  %v1767 = vunpack.c.l.b16 %v1236
  %v1768 = vunpack.c.h.b16 %v1236
  %v1769 = vunpack.c.l.b16 %v1237
  %v1770 = vunpack.c.h.b16 %v1237
  %v1771 = vunpack.c.l.b16 %v1238
  %v1772 = vunpack.c.h.b16 %v1238
  %v1773 = vunpack.c.l.b16 %v1239
  %v1774 = vunpack.c.h.b16 %v1239
  %v1775 = vunpack.c.l.b16 %v1240
  %v1776 = vunpack.c.h.b16 %v1240
  %v1777 = vunpack.c.l.b16 %v1241
  %v1778 = vunpack.c.h.b16 %v1241
  %v1779 = vunpack.c.l.b16 %v1242
  %v1780 = vunpack.c.h.b16 %v1242
  %v1781 = vunpack.c.l.b16 %v1243
  %v1782 = vunpack.c.h.b16 %v1243
  %v1783 = vunpack.c.l.b16 %v1244
  %v1784 = vunpack.c.h.b16 %v1244
  %v1785 = vunpack.c.l.b16 %v1245
  %v1786 = vunpack.c.h.b16 %v1245
  %v1787 = vunpack.c.l.b16 %v1246
  %v1788 = vunpack.c.h.b16 %v1246
  %v1789 = vunpack.c.l.b16 %v1247
  %v1790 = vunpack.c.h.b16 %v1247
  %v1791 = vunpack.c.l.b16 %v1248
  %v1792 = vunpack.c.h.b16 %v1248
  %v1793 = vunpack.c.l.b16 %v1249
  %v1794 = vunpack.c.h.b16 %v1249
  %v1795 = vunpack.c.l.b16 %v1250
  %v1796 = vunpack.c.h.b16 %v1250
  %v1797 = vunpack.c.l.b16 %v1251
  %v1798 = vunpack.c.h.b16 %v1251
  %v1799 = vunpack.c.l.b16 %v1252
  %v1800 = vunpack.c.h.b16 %v1252
  %v1801 = vunpack.c.l.b16 %v1253
  %v1802 = vunpack.c.h.b16 %v1253
  %v1803 = vunpack.c.l.b16 %v1254
  %v1804 = vunpack.c.h.b16 %v1254
  %v1805 = vunpack.c.l.b16 %v1255
  %v1806 = vunpack.c.h.b16 %v1255
  %v1807 = vunpack.c.l.b16 %v1256
  %v1808 = vunpack.c.h.b16 %v1256
  %v1809 = vunpack.c.l.b16 %v1257
  %v1810 = vunpack.c.h.b16 %v1257
  %v1811 = vunpack.c.l.b16 %v1258
  %v1812 = vunpack.c.h.b16 %v1258
  %v1813 = vunpack.c.l.b16 %v1259
  %v1814 = vunpack.c.h.b16 %v1259
  %v1815 = vunpack.c.l.b16 %v1260
  %v1816 = vunpack.c.h.b16 %v1260
  %v1817 = vunpack.c.l.b16 %v1261
  %v1818 = vunpack.c.h.b16 %v1261
  %v1819 = vunpack.c.l.b16 %v1262
  %v1820 = vunpack.c.h.b16 %v1262
  %v1821 = vunpack.c.l.b16 %v1263
  %v1822 = vunpack.c.h.b16 %v1263
  %v1823 = vunpack.c.l.b16 %v1264
  %v1824 = vunpack.c.h.b16 %v1264
  %v1825 = vunpack.c.l.b16 %v1265
  %v1826 = vunpack.c.h.b16 %v1265
  %v1827 = vunpack.c.l.b16 %v1266
  %v1828 = vunpack.c.h.b16 %v1266
  %v1829 = vunpack.c.l.b16 %v1267
  %v1830 = vunpack.c.h.b16 %v1267
  %v1831 = vunpack.c.l.b16 %v1268
  %v1832 = vunpack.c.h.b16 %v1268
  %v1833 = vunpack.c.l.b16 %v1269
  %v1834 = vunpack.c.h.b16 %v1269
  %v1835 = vunpack.c.l.b16 %v1270
  %v1836 = vunpack.c.h.b16 %v1270
  %v1837 = vunpack.c.l.b16 %v1271
  %v1838 = vunpack.c.h.b16 %v1271
  %v1839 = vunpack.c.l.b16 %v1272
  %v1840 = vunpack.c.h.b16 %v1272
  %v1841 = vunpack.c.l.b16 %v1273
  %v1842 = vunpack.c.h.b16 %v1273
  %v1843 = vunpack.c.l.b16 %v1274
  %v1844 = vunpack.c.h.b16 %v1274
  %v1845 = vunpack.c.l.b16 %v1275
  %v1846 = vunpack.c.h.b16 %v1275
  %v1847 = vunpack.c.l.b16 %v1276
  %v1848 = vunpack.c.h.b16 %v1276
  %v1849 = vunpack.c.l.b16 %v1277
  %v1850 = vunpack.c.h.b16 %v1277
  %v1851 = vunpack.c.l.b16 %v1278
  %v1852 = vunpack.c.h.b16 %v1278
  %v1853 = vunpack.c.l.b16 %v1279
  %v1854 = vunpack.c.h.b16 %v1279
  %v1855 = vunpack.c.l.b16 %v1280
  %v1856 = vunpack.c.h.b16 %v1280
  %v1857 = vunpack.c.l.b16 %v1281
  %v1858 = vunpack.c.h.b16 %v1281
  %v1859 = vunpack.c.l.b16 %v1282
  %v1860 = vunpack.c.h.b16 %v1282
  %v1861 = vunpack.c.l.b16 %v1283
  %v1862 = vunpack.c.h.b16 %v1283
  %v1863 = vunpack.c.l.b16 %v1284
  %v1864 = vunpack.c.h.b16 %v1284
  %v1865 = vunpack.c.l.b16 %v1285
  %v1866 = vunpack.c.h.b16 %v1285
  %v1867 = vunpack.c.l.b16 %v1286
  %v1868 = vunpack.c.h.b16 %v1286
  %v1869 = vunpack.c.l.b16 %v1287
  %v1870 = vunpack.c.h.b16 %v1287
  %v1871 = vunpack.c.l.b16 %v1288
  %v1872 = vunpack.c.h.b16 %v1288
  %v1873 = vunpack.c.l.b16 %v1289
  %v1874 = vunpack.c.h.b16 %v1289
  %v1875 = vunpack.c.l.b16 %v1290
  %v1876 = vunpack.c.h.b16 %v1290
  %v1877 = vunpack.c.l.b16 %v1291
  %v1878 = vunpack.c.h.b16 %v1291
  %v1879 = vunpack.c.l.b16 %v1292
  %v1880 = vunpack.c.h.b16 %v1292
  %v1881 = vunpack.c.l.b16 %v1293
  %v1882 = vunpack.c.h.b16 %v1293
  %v1883 = vunpack.c.l.b16 %v1294
  %v1884 = vunpack.c.h.b16 %v1294
  %v1885 = vunpack.c.l.b16 %v1295
  %v1886 = vunpack.c.h.b16 %v1295
  %v1887 = vunpack.c.l.b16 %v1296
  %v1888 = vunpack.c.h.b16 %v1296
  %v1889 = vunpack.c.l.b16 %v1297
  %v1890 = vunpack.c.h.b16 %v1297
  %v1891 = vunpack.c.l.b16 %v1298
  %v1892 = vunpack.c.h.b16 %v1298
  %v1893 = vunpack.c.l.b16 %v1299
  %v1894 = vunpack.c.h.b16 %v1299
  %v1895 = vunpack.c.l.b16 %v1300
  %v1896 = vunpack.c.h.b16 %v1300
  %v1897 = vunpack.c.l.b16 %v1301
  %v1898 = vunpack.c.h.b16 %v1301
  %v1899 = vunpack.c.l.b16 %v1302
  %v1900 = vunpack.c.h.b16 %v1302
  %v1901 = vunpack.c.l.b16 %v1303
  %v1902 = vunpack.c.h.b16 %v1303
  %v1903 = vunpack.c.l.b16 %v1304
  %v1904 = vunpack.c.h.b16 %v1304
  %v1905 = vunpack.c.l.b16 %v1305
  %v1906 = vunpack.c.h.b16 %v1305
  %v1907 = vunpack.c.l.b16 %v1306
  %v1908 = vunpack.c.h.b16 %v1306
  %v1909 = vunpack.c.l.b16 %v1307
  %v1910 = vunpack.c.h.b16 %v1307
  %v1911 = vunpack.c.l.b16 %v1308
  %v1912 = vunpack.c.h.b16 %v1308
  %v1913 = vunpack.c.l.b16 %v1309
  %v1914 = vunpack.c.h.b16 %v1309
  %v1915 = vunpack.c.l.b16 %v1310
  %v1916 = vunpack.c.h.b16 %v1310
  %v1917 = vunpack.c.l.b16 %v1311
  %v1918 = vunpack.c.h.b16 %v1311
  %v1919 = vunpack.c.l.b16 %v1312
  %v1920 = vunpack.c.h.b16 %v1312
  %v1921 = vunpack.c.l.b16 %v1313
  %v1922 = vunpack.c.h.b16 %v1313
  %v1923 = vunpack.c.l.b16 %v1314
  %v1924 = vunpack.c.h.b16 %v1314
  %v1925 = vunpack.c.l.b16 %v1315
  %v1926 = vunpack.c.h.b16 %v1315
  %v1927 = vunpack.c.l.b16 %v1316
  %v1928 = vunpack.c.h.b16 %v1316
  %v1929 = vunpack.c.l.b16 %v1317
  %v1930 = vunpack.c.h.b16 %v1317
  %v1931 = vunpack.c.l.b16 %v1318
  %v1932 = vunpack.c.h.b16 %v1318
  %v1933 = vunpack.c.l.b16 %v1319
  %v1934 = vunpack.c.h.b16 %v1319
  %v1935 = vunpack.c.l.b16 %v1320
  %v1936 = vunpack.c.h.b16 %v1320
  %v1937 = vunpack.c.l.b16 %v1321
  %v1938 = vunpack.c.h.b16 %v1321
  %v1939 = vunpack.c.l.b16 %v1322
  %v1940 = vunpack.c.h.b16 %v1322
  %v1941 = vunpack.c.l.b16 %v1323
  %v1942 = vunpack.c.h.b16 %v1323
  %v1943 = vunpack.c.l.b16 %v1324
  %v1944 = vunpack.c.h.b16 %v1324
  %v1945 = vunpack.c.l.b16 %v1325
  %v1946 = vunpack.c.h.b16 %v1325
  %v1947 = vunpack.c.l.b16 %v1326
  %v1948 = vunpack.c.h.b16 %v1326
  %v1949 = vunpack.c.l.b16 %v1327
  %v1950 = vunpack.c.h.b16 %v1327
  %v1951 = vunpack.c.l.b16 %v1328
  %v1952 = vunpack.c.h.b16 %v1328
  %v1953 = vunpack.c.l.b16 %v1329
  %v1954 = vunpack.c.h.b16 %v1329
  %v1955 = vunpack.c.l.b16 %v1330
  %v1956 = vunpack.c.h.b16 %v1330
  %v1957 = vunpack.c.l.b16 %v1331
  %v1958 = vunpack.c.h.b16 %v1331
  %v1959 = vunpack.c.l.b16 %v1332
  %v1960 = vunpack.c.h.b16 %v1332
  %v1961 = vunpack.c.l.b16 %v1333
  %v1962 = vunpack.c.h.b16 %v1333
  %v1963 = vunpack.c.l.b16 %v1334
  %v1964 = vunpack.c.h.b16 %v1334
  %v1965 = vunpack.c.l.b16 %v1335
  %v1966 = vunpack.c.h.b16 %v1335
  %v1967 = vunpack.c.l.b16 %v1336
  %v1968 = vunpack.c.h.b16 %v1336
  %v1969 = vunpack.c.l.b16 %v1337
  %v1970 = vunpack.c.h.b16 %v1337
  %v1971 = vunpack.c.l.b16 %v1338
  %v1972 = vunpack.c.h.b16 %v1338
  %v1973 = vunpack.c.l.b16 %v1339
  %v1974 = vunpack.c.h.b16 %v1339
  %v1975 = vunpack.c.l.b16 %v1340
  %v1976 = vunpack.c.h.b16 %v1340
  %v1977 = vunpack.c.l.b16 %v1341
  %v1978 = vunpack.c.h.b16 %v1341
  %v1979 = vunpack.c.l.b16 %v1342
  %v1980 = vunpack.c.h.b16 %v1342
  %v1981 = vunpack.c.l.b16 %v1343
  %v1982 = vunpack.c.h.b16 %v1343
  %v1983 = vunpack.c.l.b16 %v1344
  %v1984 = vunpack.c.h.b16 %v1344
  %v1985 = vunpack.c.l.b16 %v1345
  %v1986 = vunpack.c.h.b16 %v1345
  %v1987 = vunpack.c.l.b16 %v1346
  %v1988 = vunpack.c.h.b16 %v1346
  %v1989 = vunpack.c.l.b16 %v1347
  %v1990 = vunpack.c.h.b16 %v1347
  %v1991 = vunpack.c.l.b16 %v1348
  %v1992 = vunpack.c.h.b16 %v1348
  %v1993 = vunpack.c.l.b16 %v1349
  %v1994 = vunpack.c.h.b16 %v1349
  %v1995 = vunpack.c.l.b16 %v1350
  %v1996 = vunpack.c.h.b16 %v1350
  %v1997 = vunpack.c.l.b16 %v1351
  %v1998 = vunpack.c.h.b16 %v1351
  %v1999 = vunpack.c.l.b16 %v1352
  %v2000 = vunpack.c.h.b16 %v1352
  %v2001 = vunpack.c.l.b16 %v1353
  %v2002 = vunpack.c.h.b16 %v1353
  %v2003 = vunpack.c.l.b16 %v1354
  %v2004 = vunpack.c.h.b16 %v1354
  %v2005 = vunpack.c.l.b16 %v1355
  %v2006 = vunpack.c.h.b16 %v1355
  %v2007 = vunpack.c.l.b16 %v1356
  %v2008 = vunpack.c.h.b16 %v1356
  %v2009 = vunpack.c.l.b16 %v1357
  %v2010 = vunpack.c.h.b16 %v1357
  %v2011 = vunpack.c.l.b16 %v1358
  %v2012 = vunpack.c.h.b16 %v1358
  %v2013 = vunpack.c.l.b16 %v1359
  %v2014 = vunpack.c.h.b16 %v1359
  %v2015 = vunpack.c.l.b16 %v1360
  %v2016 = vunpack.c.h.b16 %v1360
  %v2017 = vunpack.c.l.b16 %v1361
  %v2018 = vunpack.c.h.b16 %v1361
  %v2019 = vunpack.c.l.b16 %v1362
  %v2020 = vunpack.c.h.b16 %v1362
  %v2021 = vunpack.c.l.b16 %v1363
  %v2022 = vunpack.c.h.b16 %v1363
  %v2023 = vunpack.c.l.b16 %v1364
  %v2024 = vunpack.c.h.b16 %v1364
  %v2025 = vunpack.c.l.b16 %v1365
  %v2026 = vunpack.c.h.b16 %v1365
  %v2027 = vunpack.c.l.b16 %v1366
  %v2028 = vunpack.c.h.b16 %v1366
  %v2029 = vunpack.c.l.b16 %v1367
  %v2030 = vunpack.c.h.b16 %v1367
  %v2031 = vunpack.c.l.b16 %v1368
  %v2032 = vunpack.c.h.b16 %v1368
  %v2033 = vunpack.c.l.b16 %v1369
  %v2034 = vunpack.c.h.b16 %v1369
  %v2035 = vunpack.c.l.b16 %v1370
  %v2036 = vunpack.c.h.b16 %v1370
  %v2037 = vunpack.c.l.b16 %v1371
  %v2038 = vunpack.c.h.b16 %v1371
  %v2039 = vunpack.c.l.b16 %v1372
  %v2040 = vunpack.c.h.b16 %v1372
  %v2041 = vunpack.c.l.b16 %v1373
  %v2042 = vunpack.c.h.b16 %v1373
  %v2043 = vunpack.c.l.b16 %v1374
  %v2044 = vunpack.c.h.b16 %v1374
  %v2045 = vunpack.c.l.b16 %v1375
  %v2046 = vunpack.c.h.b16 %v1375
  %v2047 = vunpack.c.l.b16 %v1376
  %v2048 = vunpack.c.h.b16 %v1376
  %v2049 = vunpack.c.l.b16 %v1377
  %v2050 = vunpack.c.h.b16 %v1377
  %v2051 = vunpack.c.l.b16 %v1378
  %v2052 = vunpack.c.h.b16 %v1378
  %v2053 = vunpack.c.l.b16 %v1379
  %v2054 = vunpack.c.h.b16 %v1379
  %v2055 = vunpack.c.l.b16 %v1380
  %v2056 = vunpack.c.h.b16 %v1380
  %v2057 = vunpack.c.l.b16 %v1381
  %v2058 = vunpack.c.h.b16 %v1381
  %v2059 = vunpack.c.l.b16 %v1382
  %v2060 = vunpack.c.h.b16 %v1382
  %v2061 = vunpack.c.l.b16 %v1383
  %v2062 = vunpack.c.h.b16 %v1383
  %v2063 = vunpack.c.l.b16 %v1384
  %v2064 = vunpack.c.h.b16 %v1384
  %v2065 = vunpack.c.l.b16 %v1385
  %v2066 = vunpack.c.h.b16 %v1385
  %v2067 = vunpack.c.l.b16 %v1386
  %v2068 = vunpack.c.h.b16 %v1386
  %v2069 = vunpack.c.l.b16 %v1387
  %v2070 = vunpack.c.h.b16 %v1387
  %v2071 = vunpack.c.l.b16 %v1388
  %v2072 = vunpack.c.h.b16 %v1388
  %v2073 = vunpack.c.l.b16 %v1389
  %v2074 = vunpack.c.h.b16 %v1389
  %v2075 = vunpack.c.l.b16 %v1390
  %v2076 = vunpack.c.h.b16 %v1390
  %v2077 = vunpack.c.l.b16 %v1391
  %v2078 = vunpack.c.h.b16 %v1391
  %v2079 = vunpack.c.l.b16 %v1392
  %v2080 = vunpack.c.h.b16 %v1392
  %v2081 = vunpack.c.l.b16 %v1393
  %v2082 = vunpack.c.h.b16 %v1393
  %v2083 = vunpack.c.l.b16 %v1394
  %v2084 = vunpack.c.h.b16 %v1394
  %v2085 = vunpack.c.l.b16 %v1395
  %v2086 = vunpack.c.h.b16 %v1395
  %v2087 = vunpack.c.l.b16 %v1396
  %v2088 = vunpack.c.h.b16 %v1396
  %v2089 = vunpack.c.l.b16 %v1397
  %v2090 = vunpack.c.h.b16 %v1397
  %v2091 = vunpack.c.l.b16 %v1398
  %v2092 = vunpack.c.h.b16 %v1398
  %v2093 = vunpack.c.l.b16 %v1399
  %v2094 = vunpack.c.h.b16 %v1399
  %v2095 = vunpack.c.l.b16 %v1400
  %v2096 = vunpack.c.h.b16 %v1400
  %v2097 = vunpack.c.l.b16 %v1401
  %v2098 = vunpack.c.h.b16 %v1401
  %v2099 = vunpack.c.l.b16 %v1402
  %v2100 = vunpack.c.h.b16 %v1402
  %v2101 = vunpack.c.l.b16 %v1403
  %v2102 = vunpack.c.h.b16 %v1403
  %v2103 = vunpack.c.l.b16 %v1404
  %v2104 = vunpack.c.h.b16 %v1404
  %v2105 = vunpack.c.l.b16 %v1405
  %v2106 = vunpack.c.h.b16 %v1405
  %v2107 = vunpack.c.l.b16 %v1406
  %v2108 = vunpack.c.h.b16 %v1406
  %v2109 = vunpack.c.l.b16 %v1407
  %v2110 = vunpack.c.h.b16 %v1407
  %v2111 = vunpack.c.l.b16 %v1408
  %v2112 = vunpack.c.h.b16 %v1408
  %v2113 = vunpack.c.l.b16 %v1409
  %v2114 = vunpack.c.h.b16 %v1409
  %v2115 = vunpack.c.l.b16 %v1410
  %v2116 = vunpack.c.h.b16 %v1410
  %v2117 = vunpack.c.l.b16 %v1411
  %v2118 = vunpack.c.h.b16 %v1411
  %v2119 = vunpack.c.l.b16 %v1412
  %v2120 = vunpack.c.h.b16 %v1412
  %v2121 = vunpack.c.l.b16 %v1413
  %v2122 = vunpack.c.h.b16 %v1413
  %v2123 = vunpack.c.l.b16 %v1414
  %v2124 = vunpack.c.h.b16 %v1414
  %v2125 = vunpack.c.l.b16 %v1415
  %v2126 = vunpack.c.h.b16 %v1415
  %v2127 = vunpack.c.l.b16 %v1416
  %v2128 = vunpack.c.h.b16 %v1416
  %v2129 = vunpack.c.l.b16 %v1417
  %v2130 = vunpack.c.h.b16 %v1417
  %v2131 = vunpack.c.l.b16 %v1418
  %v2132 = vunpack.c.h.b16 %v1418
  %v2133 = vunpack.c.l.b16 %v1419
  %v2134 = vunpack.c.h.b16 %v1419
  %v2135 = vunpack.c.l.b16 %v1420
  %v2136 = vunpack.c.h.b16 %v1420
  %v2137 = vunpack.c.l.b16 %v1421
  %v2138 = vunpack.c.h.b16 %v1421
  %v2139 = vunpack.c.l.b16 %v1422
  %v2140 = vunpack.c.h.b16 %v1422
  %v2141 = vunpack.c.l.b16 %v1423
  %v2142 = vunpack.c.h.b16 %v1423
  %v2143 = vunpack.c.l.b16 %v1424
  %v2144 = vunpack.c.h.b16 %v1424
  %v2145 = vunpack.c.l.b16 %v1425
  %v2146 = vunpack.c.h.b16 %v1425
  %v2147 = vunpack.c.l.b16 %v1426
  %v2148 = vunpack.c.h.b16 %v1426
  %v2149 = vunpack.c.l.b16 %v1427
  %v2150 = vunpack.c.h.b16 %v1427
  %v2151 = vunpack.c.l.b16 %v1428
  %v2152 = vunpack.c.h.b16 %v1428
  %v2153 = vunpack.c.l.b16 %v1429
  %v2154 = vunpack.c.h.b16 %v1429
  %v2155 = vunpack.c.l.b16 %v1430
  %v2156 = vunpack.c.h.b16 %v1430
  %v2157 = vunpack.c.l.b16 %v1431
  %v2158 = vunpack.c.h.b16 %v1431
  %v2159 = vunpack.c.l.b16 %v1432
  %v2160 = vunpack.c.h.b16 %v1432
  %v2161 = vunpack.c.l.b16 %v1433
  %v2162 = vunpack.c.h.b16 %v1433
  %v2163 = vunpack.c.l.b16 %v1434
  %v2164 = vunpack.c.h.b16 %v1434
  %v2165 = vunpack.c.l.b16 %v1435
  %v2166 = vunpack.c.h.b16 %v1435
  %v2167 = vunpack.c.l.b16 %v1436
  %v2168 = vunpack.c.h.b16 %v1436
  %v2169 = vunpack.c.l.b16 %v1437
  %v2170 = vunpack.c.h.b16 %v1437
  %v2171 = vunpack.c.l.b16 %v1438
  %v2172 = vunpack.c.h.b16 %v1438
  %v2173 = vunpack.c.l.b16 %v1439
  %v2174 = vunpack.c.h.b16 %v1439
  %v2175 = vunpack.c.l.b16 %v1440
  %v2176 = vunpack.c.h.b16 %v1440
  %v2177 = vunpack.c.l.b16 %v1441
  %v2178 = vunpack.c.h.b16 %v1441
  %v2179 = vunpack.c.l.b16 %v1442
  %v2180 = vunpack.c.h.b16 %v1442
  %v2181 = vunpack.c.l.b16 %v1443
  %v2182 = vunpack.c.h.b16 %v1443
  %v2183 = vunpack.c.l.b16 %v1444
  %v2184 = vunpack.c.h.b16 %v1444
  %v2185 = vunpack.c.l.b16 %v1445
  %v2186 = vunpack.c.h.b16 %v1445
  %v2187 = vunpack.c.l.b16 %v1446
  %v2188 = vunpack.c.h.b16 %v1446
  %v2189 = vunpack.c.l.b16 %v1447
  %v2190 = vunpack.c.h.b16 %v1447
  %v2191 = vunpack.c.l.b16 %v1448
  %v2192 = vunpack.c.h.b16 %v1448
  %v2193 = vunpack.c.l.b16 %v1449
  %v2194 = vunpack.c.h.b16 %v1449
  %v2195 = vunpack.c.l.b16 %v1450
  %v2196 = vunpack.c.h.b16 %v1450
  %v2197 = vunpack.c.l.b16 %v1451
  %v2198 = vunpack.c.h.b16 %v1451
  %v2199 = vunpack.c.l.b16 %v1452
  %v2200 = vunpack.c.h.b16 %v1452
  %v2201 = vunpack.c.l.b16 %v1453
  %v2202 = vunpack.c.h.b16 %v1453
  %v2203 = vunpack.c.l.b16 %v1454
  %v2204 = vunpack.c.h.b16 %v1454
  %v2205 = vunpack.c.l.b16 %v1455
  %v2206 = vunpack.c.h.b16 %v1455
  %v2207 = vunpack.c.l.b16 %v1456
  %v2208 = vunpack.c.h.b16 %v1456
  %v2209 = vunpack.c.l.b16 %v1457
  %v2210 = vunpack.c.h.b16 %v1457
  %v2211 = vunpack.c.l.b16 %v1458
  %v2212 = vunpack.c.h.b16 %v1458
  %v2213 = vunpack.c.l.b16 %v1459
  %v2214 = vunpack.c.h.b16 %v1459
  %v2215 = vunpack.c.l.b16 %v1460
  %v2216 = vunpack.c.h.b16 %v1460
  %v2217 = vunpack.c.l.b16 %v1461
  %v2218 = vunpack.c.h.b16 %v1461
  %v2219 = vunpack.c.l.b16 %v1462
  %v2220 = vunpack.c.h.b16 %v1462
  %v2221 = vunpack.c.l.b16 %v1463
  %v2222 = vunpack.c.h.b16 %v1463
  %v2223 = vunpack.c.l.b16 %v1464
  %v2224 = vunpack.c.h.b16 %v1464
  %v2225 = vunpack.c.l.b16 %v1465
  %v2226 = vunpack.c.h.b16 %v1465
  %v2227 = vunpack.c.l.b16 %v1466
  %v2228 = vunpack.c.h.b16 %v1466
  %v2229 = vunpack.c.l.b16 %v1467
  %v2230 = vunpack.c.h.b16 %v1467
  %v2231 = vunpack.c.l.b16 %v1468
  %v2232 = vunpack.c.h.b16 %v1468
  %v2233 = vunpack.c.l.b16 %v1469
  %v2234 = vunpack.c.h.b16 %v1469
  %v2235 = vunpack.c.l.b16 %v1470
  %v2236 = vunpack.c.h.b16 %v1470
  %v2237 = vunpack.c.l.b16 %v1471
  %v2238 = vunpack.c.h.b16 %v1471
  %v2239 = vunpack.c.l.b16 %v1472
  %v2240 = vunpack.c.h.b16 %v1472
  %v2241 = vpack.c.b16 %v1737, %v1729
  %v2242 = vpack.c.b16 %v1738, %v1730
  %v2243 = vpack.c.b16 %v1739, %v1731
  %v2244 = vpack.c.b16 %v1740, %v1732
  %v2245 = vpack.c.b16 %v1741, %v1733
  %v2246 = vpack.c.b16 %v1742, %v1734
  %v2247 = vpack.c.b16 %v1743, %v1735
  %v2248 = vpack.c.b16 %v1744, %v1736
  %v2249 = vpack.c.b16 %v1753, %v1745
  %v2250 = vpack.c.b16 %v1754, %v1746
  %v2251 = vpack.c.b16 %v1755, %v1747
  %v2252 = vpack.c.b16 %v1756, %v1748
  %v2253 = vpack.c.b16 %v1757, %v1749
  %v2254 = vpack.c.b16 %v1758, %v1750
  %v2255 = vpack.c.b16 %v1759, %v1751
  %v2256 = vpack.c.b16 %v1760, %v1752
  %v2257 = vpack.c.b16 %v1769, %v1761
  %v2258 = vpack.c.b16 %v1770, %v1762
  %v2259 = vpack.c.b16 %v1771, %v1763
  %v2260 = vpack.c.b16 %v1772, %v1764
  %v2261 = vpack.c.b16 %v1773, %v1765
  %v2262 = vpack.c.b16 %v1774, %v1766
  %v2263 = vpack.c.b16 %v1775, %v1767
  %v2264 = vpack.c.b16 %v1776, %v1768
  %v2265 = vpack.c.b16 %v1785, %v1777
  %v2266 = vpack.c.b16 %v1786, %v1778
  %v2267 = vpack.c.b16 %v1787, %v1779
  %v2268 = vpack.c.b16 %v1788, %v1780
  %v2269 = vpack.c.b16 %v1789, %v1781
  %v2270 = vpack.c.b16 %v1790, %v1782
  %v2271 = vpack.c.b16 %v1791, %v1783
  %v2272 = vpack.c.b16 %v1792, %v1784
  %v2273 = vpack.c.b16 %v1801, %v1793
  %v2274 = vpack.c.b16 %v1802, %v1794
  %v2275 = vpack.c.b16 %v1803, %v1795
  %v2276 = vpack.c.b16 %v1804, %v1796
  %v2277 = vpack.c.b16 %v1805, %v1797
  %v2278 = vpack.c.b16 %v1806, %v1798
  %v2279 = vpack.c.b16 %v1807, %v1799
  %v2280 = vpack.c.b16 %v1808, %v1800
  %v2281 = vpack.c.b16 %v1817, %v1809
  %v2282 = vpack.c.b16 %v1818, %v1810
  %v2283 = vpack.c.b16 %v1819, %v1811
  %v2284 = vpack.c.b16 %v1820, %v1812
  %v2285 = vpack.c.b16 %v1821, %v1813
  %v2286 = vpack.c.b16 %v1822, %v1814
  %v2287 = vpack.c.b16 %v1823, %v1815
  %v2288 = vpack.c.b16 %v1824, %v1816
  %v2289 = vpack.c.b16 %v1833, %v1825
  %v2290 = vpack.c.b16 %v1834, %v1826
  %v2291 = vpack.c.b16 %v1835, %v1827
  %v2292 = vpack.c.b16 %v1836, %v1828
  %v2293 = vpack.c.b16 %v1837, %v1829
  %v2294 = vpack.c.b16 %v1838, %v1830
  %v2295 = vpack.c.b16 %v1839, %v1831
  %v2296 = vpack.c.b16 %v1840, %v1832
  %v2297 = vpack.c.b16 %v1849, %v1841
  %v2298 = vpack.c.b16 %v1850, %v1842
  %v2299 = vpack.c.b16 %v1851, %v1843
  %v2300 = vpack.c.b16 %v1852, %v1844
  %v2301 = vpack.c.b16 %v1853, %v1845
  %v2302 = vpack.c.b16 %v1854, %v1846
  %v2303 = vpack.c.b16 %v1855, %v1847
  %v2304 = vpack.c.b16 %v1856, %v1848
  %v2305 = vpack.c.b16 %v1865, %v1857
  %v2306 = vpack.c.b16 %v1866, %v1858
  %v2307 = vpack.c.b16 %v1867, %v1859
  %v2308 = vpack.c.b16 %v1868, %v1860
  %v2309 = vpack.c.b16 %v1869, %v1861
  %v2310 = vpack.c.b16 %v1870, %v1862
  %v2311 = vpack.c.b16 %v1871, %v1863
  %v2312 = vpack.c.b16 %v1872, %v1864
  %v2313 = vpack.c.b16 %v1881, %v1873
  %v2314 = vpack.c.b16 %v1882, %v1874
  %v2315 = vpack.c.b16 %v1883, %v1875
  %v2316 = vpack.c.b16 %v1884, %v1876
  %v2317 = vpack.c.b16 %v1885, %v1877
  %v2318 = vpack.c.b16 %v1886, %v1878
  %v2319 = vpack.c.b16 %v1887, %v1879
  %v2320 = vpack.c.b16 %v1888, %v1880
  %v2321 = vpack.c.b16 %v1897, %v1889
  %v2322 = vpack.c.b16 %v1898, %v1890
  %v2323 = vpack.c.b16 %v1899, %v1891
  %v2324 = vpack.c.b16 %v1900, %v1892
  %v2325 = vpack.c.b16 %v1901, %v1893
  %v2326 = vpack.c.b16 %v1902, %v1894
  %v2327 = vpack.c.b16 %v1903, %v1895
  %v2328 = vpack.c.b16 %v1904, %v1896
  %v2329 = vpack.c.b16 %v1913, %v1905
  %v2330 = vpack.c.b16 %v1914, %v1906
  %v2331 = vpack.c.b16 %v1915, %v1907
  %v2332 = vpack.c.b16 %v1916, %v1908
  %v2333 = vpack.c.b16 %v1917, %v1909
  %v2334 = vpack.c.b16 %v1918, %v1910
  %v2335 = vpack.c.b16 %v1919, %v1911
  %v2336 = vpack.c.b16 %v1920, %v1912
  %v2337 = vpack.c.b16 %v1929, %v1921
  %v2338 = vpack.c.b16 %v1930, %v1922
  %v2339 = vpack.c.b16 %v1931, %v1923
  %v2340 = vpack.c.b16 %v1932, %v1924
  %v2341 = vpack.c.b16 %v1933, %v1925
  %v2342 = vpack.c.b16 %v1934, %v1926
  %v2343 = vpack.c.b16 %v1935, %v1927
  %v2344 = vpack.c.b16 %v1936, %v1928
  %v2345 = vpack.c.b16 %v1945, %v1937
  %v2346 = vpack.c.b16 %v1946, %v1938
  %v2347 = vpack.c.b16 %v1947, %v1939
  %v2348 = vpack.c.b16 %v1948, %v1940
  %v2349 = vpack.c.b16 %v1949, %v1941
  %v2350 = vpack.c.b16 %v1950, %v1942
  %v2351 = vpack.c.b16 %v1951, %v1943
  %v2352 = vpack.c.b16 %v1952, %v1944
  %v2353 = vpack.c.b16 %v1961, %v1953
  %v2354 = vpack.c.b16 %v1962, %v1954
  %v2355 = vpack.c.b16 %v1963, %v1955
  %v2356 = vpack.c.b16 %v1964, %v1956
  %v2357 = vpack.c.b16 %v1965, %v1957
  %v2358 = vpack.c.b16 %v1966, %v1958
  %v2359 = vpack.c.b16 %v1967, %v1959
  %v2360 = vpack.c.b16 %v1968, %v1960
  %v2361 = vpack.c.b16 %v1977, %v1969
  %v2362 = vpack.c.b16 %v1978, %v1970
  %v2363 = vpack.c.b16 %v1979, %v1971
  %v2364 = vpack.c.b16 %v1980, %v1972
  %v2365 = vpack.c.b16 %v1981, %v1973
  %v2366 = vpack.c.b16 %v1982, %v1974
  %v2367 = vpack.c.b16 %v1983, %v1975
  %v2368 = vpack.c.b16 %v1984, %v1976
  %v2369 = vpack.c.b16 %v1993, %v1985
  %v2370 = vpack.c.b16 %v1994, %v1986
  %v2371 = vpack.c.b16 %v1995, %v1987
  %v2372 = vpack.c.b16 %v1996, %v1988
  %v2373 = vpack.c.b16 %v1997, %v1989
  %v2374 = vpack.c.b16 %v1998, %v1990
  %v2375 = vpack.c.b16 %v1999, %v1991
  %v2376 = vpack.c.b16 %v2000, %v1992
  %v2377 = vpack.c.b16 %v2009, %v2001
  %v2378 = vpack.c.b16 %v2010, %v2002
  %v2379 = vpack.c.b16 %v2011, %v2003
  %v2380 = vpack.c.b16 %v2012, %v2004
  %v2381 = vpack.c.b16 %v2013, %v2005
  %v2382 = vpack.c.b16 %v2014, %v2006
  %v2383 = vpack.c.b16 %v2015, %v2007
  %v2384 = vpack.c.b16 %v2016, %v2008
  %v2385 = vpack.c.b16 %v2025, %v2017
  %v2386 = vpack.c.b16 %v2026, %v2018
  %v2387 = vpack.c.b16 %v2027, %v2019
  %v2388 = vpack.c.b16 %v2028, %v2020
  %v2389 = vpack.c.b16 %v2029, %v2021
  %v2390 = vpack.c.b16 %v2030, %v2022
  %v2391 = vpack.c.b16 %v2031, %v2023
  %v2392 = vpack.c.b16 %v2032, %v2024
  %v2393 = vpack.c.b16 %v2041, %v2033
  %v2394 = vpack.c.b16 %v2042, %v2034
  %v2395 = vpack.c.b16 %v2043, %v2035
  %v2396 = vpack.c.b16 %v2044, %v2036
  %v2397 = vpack.c.b16 %v2045, %v2037
  %v2398 = vpack.c.b16 %v2046, %v2038
  %v2399 = vpack.c.b16 %v2047, %v2039
  %v2400 = vpack.c.b16 %v2048, %v2040
  %v2401 = vpack.c.b16 %v2057, %v2049
  %v2402 = vpack.c.b16 %v2058, %v2050
  %v2403 = vpack.c.b16 %v2059, %v2051
  %v2404 = vpack.c.b16 %v2060, %v2052
  %v2405 = vpack.c.b16 %v2061, %v2053
  %v2406 = vpack.c.b16 %v2062, %v2054
  %v2407 = vpack.c.b16 %v2063, %v2055
  %v2408 = vpack.c.b16 %v2064, %v2056
  %v2409 = vpack.c.b16 %v2073, %v2065
  %v2410 = vpack.c.b16 %v2074, %v2066
  %v2411 = vpack.c.b16 %v2075, %v2067
  %v2412 = vpack.c.b16 %v2076, %v2068
  %v2413 = vpack.c.b16 %v2077, %v2069
  %v2414 = vpack.c.b16 %v2078, %v2070
  %v2415 = vpack.c.b16 %v2079, %v2071
  %v2416 = vpack.c.b16 %v2080, %v2072
  %v2417 = vpack.c.b16 %v2089, %v2081
  %v2418 = vpack.c.b16 %v2090, %v2082
  %v2419 = vpack.c.b16 %v2091, %v2083
  %v2420 = vpack.c.b16 %v2092, %v2084
  %v2421 = vpack.c.b16 %v2093, %v2085
  %v2422 = vpack.c.b16 %v2094, %v2086
  %v2423 = vpack.c.b16 %v2095, %v2087
  %v2424 = vpack.c.b16 %v2096, %v2088
  %v2425 = vpack.c.b16 %v2105, %v2097
  %v2426 = vpack.c.b16 %v2106, %v2098
  %v2427 = vpack.c.b16 %v2107, %v2099
  %v2428 = vpack.c.b16 %v2108, %v2100
  %v2429 = vpack.c.b16 %v2109, %v2101
  %v2430 = vpack.c.b16 %v2110, %v2102
  %v2431 = vpack.c.b16 %v2111, %v2103
  %v2432 = vpack.c.b16 %v2112, %v2104
  %v2433 = vpack.c.b16 %v2121, %v2113
  %v2434 = vpack.c.b16 %v2122, %v2114
  %v2435 = vpack.c.b16 %v2123, %v2115
  %v2436 = vpack.c.b16 %v2124, %v2116
  %v2437 = vpack.c.b16 %v2125, %v2117
  %v2438 = vpack.c.b16 %v2126, %v2118
  %v2439 = vpack.c.b16 %v2127, %v2119
  %v2440 = vpack.c.b16 %v2128, %v2120
  %v2441 = vpack.c.b16 %v2137, %v2129
  %v2442 = vpack.c.b16 %v2138, %v2130
  %v2443 = vpack.c.b16 %v2139, %v2131
  %v2444 = vpack.c.b16 %v2140, %v2132
  %v2445 = vpack.c.b16 %v2141, %v2133
  %v2446 = vpack.c.b16 %v2142, %v2134
  %v2447 = vpack.c.b16 %v2143, %v2135
  %v2448 = vpack.c.b16 %v2144, %v2136
  %v2449 = vpack.c.b16 %v2153, %v2145
  %v2450 = vpack.c.b16 %v2154, %v2146
  %v2451 = vpack.c.b16 %v2155, %v2147
  %v2452 = vpack.c.b16 %v2156, %v2148
  %v2453 = vpack.c.b16 %v2157, %v2149
  %v2454 = vpack.c.b16 %v2158, %v2150
  %v2455 = vpack.c.b16 %v2159, %v2151
  %v2456 = vpack.c.b16 %v2160, %v2152
  %v2457 = vpack.c.b16 %v2169, %v2161
  %v2458 = vpack.c.b16 %v2170, %v2162
  %v2459 = vpack.c.b16 %v2171, %v2163
  %v2460 = vpack.c.b16 %v2172, %v2164
  %v2461 = vpack.c.b16 %v2173, %v2165
  %v2462 = vpack.c.b16 %v2174, %v2166
  %v2463 = vpack.c.b16 %v2175, %v2167
  %v2464 = vpack.c.b16 %v2176, %v2168
  %v2465 = vpack.c.b16 %v2185, %v2177
  %v2466 = vpack.c.b16 %v2186, %v2178
  %v2467 = vpack.c.b16 %v2187, %v2179
  %v2468 = vpack.c.b16 %v2188, %v2180
  %v2469 = vpack.c.b16 %v2189, %v2181
  %v2470 = vpack.c.b16 %v2190, %v2182
  %v2471 = vpack.c.b16 %v2191, %v2183
  %v2472 = vpack.c.b16 %v2192, %v2184
  %v2473 = vpack.c.b16 %v2201, %v2193
  %v2474 = vpack.c.b16 %v2202, %v2194
  %v2475 = vpack.c.b16 %v2203, %v2195
  %v2476 = vpack.c.b16 %v2204, %v2196
  %v2477 = vpack.c.b16 %v2205, %v2197
  %v2478 = vpack.c.b16 %v2206, %v2198
  %v2479 = vpack.c.b16 %v2207, %v2199
  %v2480 = vpack.c.b16 %v2208, %v2200
  %v2481 = vpack.c.b16 %v2217, %v2209
  %v2482 = vpack.c.b16 %v2218, %v2210
  %v2483 = vpack.c.b16 %v2219, %v2211
  %v2484 = vpack.c.b16 %v2220, %v2212
  %v2485 = vpack.c.b16 %v2221, %v2213
  %v2486 = vpack.c.b16 %v2222, %v2214
  %v2487 = vpack.c.b16 %v2223, %v2215
  %v2488 = vpack.c.b16 %v2224, %v2216
  %v2489 = vpack.c.b16 %v2233, %v2225
  %v2490 = vpack.c.b16 %v2234, %v2226
  %v2491 = vpack.c.b16 %v2235, %v2227
  %v2492 = vpack.c.b16 %v2236, %v2228
  %v2493 = vpack.c.b16 %v2237, %v2229
  %v2494 = vpack.c.b16 %v2238, %v2230
  %v2495 = vpack.c.b16 %v2239, %v2231
  %v2496 = vpack.c.b16 %v2240, %v2232
  %2753 = vmatprep.subr.bf16.mxu0 %v2298
  %2754 = vmatpush1.bf16.msra.mxu0 %v2297
  %2755 = vmatprep.subr.bf16.mxu0 %v2290
  %2756 = vmatpush1.bf16.msra.mxu0 %v2289
  %2757 = vmatprep.subr.bf16.mxu0 %v2282
  %2758 = vmatpush1.bf16.msra.mxu0 %v2281
  %2759 = vmatprep.subr.bf16.mxu0 %v2274
  %2760 = vmatpush1.bf16.msra.mxu0 %v2273
  %2761 = vmatprep.subr.bf16.mxu0 %v2266
  %2762 = vmatpush1.bf16.msra.mxu0 %v2265
  %2763 = vmatprep.subr.bf16.mxu0 %v2258
  %2764 = vmatpush1.bf16.msra.mxu0 %v2257
  %2765 = vmatprep.subr.bf16.mxu0 %v2250
  %2766 = vmatpush1.bf16.msra.mxu0 %v2249
  %2767 = vmatprep.subr.bf16.mxu0 %v2242
  %2768 = vmatpush1.bf16.msra.mxu0 %v2241
  %2769 = vmatprep.subr.bf16.mxu0 %v2362
  %2770 = vmatpush2.bf16.msra.mxu0 %v2361
  %2771 = vmatprep.subr.bf16.mxu0 %v2354
  %2772 = vmatpush2.bf16.msra.mxu0 %v2353
  %2773 = vmatprep.subr.bf16.mxu0 %v2346
  %2774 = vmatpush2.bf16.msra.mxu0 %v2345
  %2775 = vmatprep.subr.bf16.mxu0 %v2338
  %2776 = vmatpush2.bf16.msra.mxu0 %v2337
  %2777 = vmatprep.subr.bf16.mxu0 %v2330
  %2778 = vmatpush2.bf16.msra.mxu0 %v2329
  %2779 = vmatprep.subr.bf16.mxu0 %v2322
  %2780 = vmatpush2.bf16.msra.mxu0 %v2321
  %2781 = vmatprep.subr.bf16.mxu0 %v2314
  %2782 = vmatpush2.bf16.msra.mxu0 %v2313
  %2783 = vmatprep.subr.bf16.mxu0 %v2306
  %2784 = vmatpush2.bf16.msra.mxu0 %v2305
  %2785 = vmatprep.mubr.bf16.mxu0 %v1214
  %2786 = vmatmul.mubr.bf16.gmra.mxu0 %v1213
  %v2787 = vpop.f32.mrf.mxu0
  %v2788 = vadd.f32 0.0, %v2787
  %v2789 = vpop.f32.mrf.mxu0
  %v2790 = vadd.f32 0.0, %v2789
  %v2791 = vpop.f32.mrf.mxu0
  %v2792 = vpop.f32.mrf.mxu0
  %2793 = vdwg.mxu0
  %2794 = vmatprep.subr.bf16.mxu0 %v2426
  %2795 = vmatpush1.bf16.msra.mxu0 %v2425
  %2796 = vmatprep.subr.bf16.mxu0 %v2418
  %2797 = vmatpush1.bf16.msra.mxu0 %v2417
  %2798 = vmatprep.subr.bf16.mxu0 %v2410
  %2799 = vmatpush1.bf16.msra.mxu0 %v2409
  %2800 = vmatprep.subr.bf16.mxu0 %v2402
  %2801 = vmatpush1.bf16.msra.mxu0 %v2401
  %2802 = vmatprep.subr.bf16.mxu0 %v2394
  %2803 = vmatpush1.bf16.msra.mxu0 %v2393
  %2804 = vmatprep.subr.bf16.mxu0 %v2386
  %2805 = vmatpush1.bf16.msra.mxu0 %v2385
  %2806 = vmatprep.subr.bf16.mxu0 %v2378
  %2807 = vmatpush1.bf16.msra.mxu0 %v2377
  %2808 = vmatprep.subr.bf16.mxu0 %v2370
  %2809 = vmatpush1.bf16.msra.mxu0 %v2369
  %2810 = vmatprep.subr.bf16.mxu0 %v2490
  %2811 = vmatpush2.bf16.msra.mxu0 %v2489
  %2812 = vmatprep.subr.bf16.mxu0 %v2482
  %2813 = vmatpush2.bf16.msra.mxu0 %v2481
  %2814 = vmatprep.subr.bf16.mxu0 %v2474
  %2815 = vmatpush2.bf16.msra.mxu0 %v2473
  %2816 = vmatprep.subr.bf16.mxu0 %v2466
  %2817 = vmatpush2.bf16.msra.mxu0 %v2465
  %2818 = vmatprep.subr.bf16.mxu0 %v2458
  %2819 = vmatpush2.bf16.msra.mxu0 %v2457
  %2820 = vmatprep.subr.bf16.mxu0 %v2450
  %2821 = vmatpush2.bf16.msra.mxu0 %v2449
  %2822 = vmatprep.subr.bf16.mxu0 %v2442
  %2823 = vmatpush2.bf16.msra.mxu0 %v2441
  %2824 = vmatprep.subr.bf16.mxu0 %v2434
  %2825 = vmatpush2.bf16.msra.mxu0 %v2433
  %2826 = vmatprep.mubr.bf16.mxu0 %v1216
  %2827 = vmatmul.mubr.bf16.gmra.mxu0 %v1215
  %v2828 = vpop.f32.mrf.mxu0
  %v2829 = vadd.f32 %v2788, %v2828
  %v2830 = vpop.f32.mrf.mxu0
  %v2831 = vadd.f32 %v2790, %v2830
  %v2832 = vpop.f32.mrf.mxu0
  %v2833 = vpop.f32.mrf.mxu0
  %2834 = vdwg.mxu0
  %2835 = vmatprep.subr.bf16.mxu0 %v2300
  %2836 = vmatpush1.bf16.msra.mxu0 %v2299
  %2837 = vmatprep.subr.bf16.mxu0 %v2292
  %2838 = vmatpush1.bf16.msra.mxu0 %v2291
  %2839 = vmatprep.subr.bf16.mxu0 %v2284
  %2840 = vmatpush1.bf16.msra.mxu0 %v2283
  %2841 = vmatprep.subr.bf16.mxu0 %v2276
  %2842 = vmatpush1.bf16.msra.mxu0 %v2275
  %2843 = vmatprep.subr.bf16.mxu0 %v2268
  %2844 = vmatpush1.bf16.msra.mxu0 %v2267
  %2845 = vmatprep.subr.bf16.mxu0 %v2260
  %2846 = vmatpush1.bf16.msra.mxu0 %v2259
  %2847 = vmatprep.subr.bf16.mxu0 %v2252
  %2848 = vmatpush1.bf16.msra.mxu0 %v2251
  %2849 = vmatprep.subr.bf16.mxu0 %v2244
  %2850 = vmatpush1.bf16.msra.mxu0 %v2243
  %2851 = vmatprep.subr.bf16.mxu0 %v2364
  %2852 = vmatpush2.bf16.msra.mxu0 %v2363
  %2853 = vmatprep.subr.bf16.mxu0 %v2356
  %2854 = vmatpush2.bf16.msra.mxu0 %v2355
  %2855 = vmatprep.subr.bf16.mxu0 %v2348
  %2856 = vmatpush2.bf16.msra.mxu0 %v2347
  %2857 = vmatprep.subr.bf16.mxu0 %v2340
  %2858 = vmatpush2.bf16.msra.mxu0 %v2339
  %2859 = vmatprep.subr.bf16.mxu0 %v2332
  %2860 = vmatpush2.bf16.msra.mxu0 %v2331
  %2861 = vmatprep.subr.bf16.mxu0 %v2324
  %2862 = vmatpush2.bf16.msra.mxu0 %v2323
  %2863 = vmatprep.subr.bf16.mxu0 %v2316
  %2864 = vmatpush2.bf16.msra.mxu0 %v2315
  %2865 = vmatprep.subr.bf16.mxu0 %v2308
  %2866 = vmatpush2.bf16.msra.mxu0 %v2307
  %2867 = vmatprep.mubr.bf16.mxu0 %v1214
  %2868 = vmatmul.mubr.bf16.gmra.mxu0 %v1213
  %v2869 = vpop.f32.mrf.mxu0
  %v2870 = vadd.f32 0.0, %v2869
  %v2871 = vpop.f32.mrf.mxu0
  %v2872 = vadd.f32 0.0, %v2871
  %v2873 = vpop.f32.mrf.mxu0
  %v2874 = vpop.f32.mrf.mxu0
  %2875 = vdwg.mxu0
  %2876 = vmatprep.subr.bf16.mxu0 %v2428
  %2877 = vmatpush1.bf16.msra.mxu0 %v2427
  %2878 = vmatprep.subr.bf16.mxu0 %v2420
  %2879 = vmatpush1.bf16.msra.mxu0 %v2419
  %2880 = vmatprep.subr.bf16.mxu0 %v2412
  %2881 = vmatpush1.bf16.msra.mxu0 %v2411
  %2882 = vmatprep.subr.bf16.mxu0 %v2404
  %2883 = vmatpush1.bf16.msra.mxu0 %v2403
  %2884 = vmatprep.subr.bf16.mxu0 %v2396
  %2885 = vmatpush1.bf16.msra.mxu0 %v2395
  %2886 = vmatprep.subr.bf16.mxu0 %v2388
  %2887 = vmatpush1.bf16.msra.mxu0 %v2387
  %2888 = vmatprep.subr.bf16.mxu0 %v2380
  %2889 = vmatpush1.bf16.msra.mxu0 %v2379
  %2890 = vmatprep.subr.bf16.mxu0 %v2372
  %2891 = vmatpush1.bf16.msra.mxu0 %v2371
  %2892 = vmatprep.subr.bf16.mxu0 %v2492
  %2893 = vmatpush2.bf16.msra.mxu0 %v2491
  %2894 = vmatprep.subr.bf16.mxu0 %v2484
  %2895 = vmatpush2.bf16.msra.mxu0 %v2483
  %2896 = vmatprep.subr.bf16.mxu0 %v2476
  %2897 = vmatpush2.bf16.msra.mxu0 %v2475
  %2898 = vmatprep.subr.bf16.mxu0 %v2468
  %2899 = vmatpush2.bf16.msra.mxu0 %v2467
  %2900 = vmatprep.subr.bf16.mxu0 %v2460
  %2901 = vmatpush2.bf16.msra.mxu0 %v2459
  %2902 = vmatprep.subr.bf16.mxu0 %v2452
  %2903 = vmatpush2.bf16.msra.mxu0 %v2451
  %2904 = vmatprep.subr.bf16.mxu0 %v2444
  %2905 = vmatpush2.bf16.msra.mxu0 %v2443
  %2906 = vmatprep.subr.bf16.mxu0 %v2436
  %2907 = vmatpush2.bf16.msra.mxu0 %v2435
  %2908 = vmatprep.mubr.bf16.mxu0 %v1216
  %2909 = vmatmul.mubr.bf16.gmra.mxu0 %v1215
  %v2910 = vpop.f32.mrf.mxu0
  %v2911 = vadd.f32 %v2870, %v2910
  %v2912 = vpop.f32.mrf.mxu0
  %v2913 = vadd.f32 %v2872, %v2912
  %v2914 = vpop.f32.mrf.mxu0
  %v2915 = vpop.f32.mrf.mxu0
  %2916 = vdwg.mxu0
  %2917 = vmatprep.subr.bf16.mxu0 %v2302
  %2918 = vmatpush1.bf16.msra.mxu0 %v2301
  %2919 = vmatprep.subr.bf16.mxu0 %v2294
  %2920 = vmatpush1.bf16.msra.mxu0 %v2293
  %2921 = vmatprep.subr.bf16.mxu0 %v2286
  %2922 = vmatpush1.bf16.msra.mxu0 %v2285
  %2923 = vmatprep.subr.bf16.mxu0 %v2278
  %2924 = vmatpush1.bf16.msra.mxu0 %v2277
  %2925 = vmatprep.subr.bf16.mxu0 %v2270
  %2926 = vmatpush1.bf16.msra.mxu0 %v2269
  %2927 = vmatprep.subr.bf16.mxu0 %v2262
  %2928 = vmatpush1.bf16.msra.mxu0 %v2261
  %2929 = vmatprep.subr.bf16.mxu0 %v2254
  %2930 = vmatpush1.bf16.msra.mxu0 %v2253
  %2931 = vmatprep.subr.bf16.mxu0 %v2246
  %2932 = vmatpush1.bf16.msra.mxu0 %v2245
  %2933 = vmatprep.subr.bf16.mxu0 %v2366
  %2934 = vmatpush2.bf16.msra.mxu0 %v2365
  %2935 = vmatprep.subr.bf16.mxu0 %v2358
  %2936 = vmatpush2.bf16.msra.mxu0 %v2357
  %2937 = vmatprep.subr.bf16.mxu0 %v2350
  %2938 = vmatpush2.bf16.msra.mxu0 %v2349
  %2939 = vmatprep.subr.bf16.mxu0 %v2342
  %2940 = vmatpush2.bf16.msra.mxu0 %v2341
  %2941 = vmatprep.subr.bf16.mxu0 %v2334
  %2942 = vmatpush2.bf16.msra.mxu0 %v2333
  %2943 = vmatprep.subr.bf16.mxu0 %v2326
  %2944 = vmatpush2.bf16.msra.mxu0 %v2325
  %2945 = vmatprep.subr.bf16.mxu0 %v2318
  %2946 = vmatpush2.bf16.msra.mxu0 %v2317
  %2947 = vmatprep.subr.bf16.mxu0 %v2310
  %2948 = vmatpush2.bf16.msra.mxu0 %v2309
  %2949 = vmatprep.mubr.bf16.mxu0 %v1214
  %2950 = vmatmul.mubr.bf16.gmra.mxu0 %v1213
  %v2951 = vpop.f32.mrf.mxu0
  %v2952 = vadd.f32 0.0, %v2951
  %v2953 = vpop.f32.mrf.mxu0
  %v2954 = vadd.f32 0.0, %v2953
  %v2955 = vpop.f32.mrf.mxu0
  %v2956 = vpop.f32.mrf.mxu0
  %2957 = vdwg.mxu0
  %2958 = vmatprep.subr.bf16.mxu0 %v2430
  %2959 = vmatpush1.bf16.msra.mxu0 %v2429
  %2960 = vmatprep.subr.bf16.mxu0 %v2422
  %2961 = vmatpush1.bf16.msra.mxu0 %v2421
  %2962 = vmatprep.subr.bf16.mxu0 %v2414
  %2963 = vmatpush1.bf16.msra.mxu0 %v2413
  %2964 = vmatprep.subr.bf16.mxu0 %v2406
  %2965 = vmatpush1.bf16.msra.mxu0 %v2405
  %2966 = vmatprep.subr.bf16.mxu0 %v2398
  %2967 = vmatpush1.bf16.msra.mxu0 %v2397
  %2968 = vmatprep.subr.bf16.mxu0 %v2390
  %2969 = vmatpush1.bf16.msra.mxu0 %v2389
  %2970 = vmatprep.subr.bf16.mxu0 %v2382
  %2971 = vmatpush1.bf16.msra.mxu0 %v2381
  %2972 = vmatprep.subr.bf16.mxu0 %v2374
  %2973 = vmatpush1.bf16.msra.mxu0 %v2373
  %2974 = vmatprep.subr.bf16.mxu0 %v2494
  %2975 = vmatpush2.bf16.msra.mxu0 %v2493
  %2976 = vmatprep.subr.bf16.mxu0 %v2486
  %2977 = vmatpush2.bf16.msra.mxu0 %v2485
  %2978 = vmatprep.subr.bf16.mxu0 %v2478
  %2979 = vmatpush2.bf16.msra.mxu0 %v2477
  %2980 = vmatprep.subr.bf16.mxu0 %v2470
  %2981 = vmatpush2.bf16.msra.mxu0 %v2469
  %2982 = vmatprep.subr.bf16.mxu0 %v2462
  %2983 = vmatpush2.bf16.msra.mxu0 %v2461
  %2984 = vmatprep.subr.bf16.mxu0 %v2454
  %2985 = vmatpush2.bf16.msra.mxu0 %v2453
  %2986 = vmatprep.subr.bf16.mxu0 %v2446
  %2987 = vmatpush2.bf16.msra.mxu0 %v2445
  %2988 = vmatprep.subr.bf16.mxu0 %v2438
  %2989 = vmatpush2.bf16.msra.mxu0 %v2437
  %2990 = vmatprep.mubr.bf16.mxu0 %v1216
  %2991 = vmatmul.mubr.bf16.gmra.mxu0 %v1215
  %v2992 = vpop.f32.mrf.mxu0
  %v2993 = vadd.f32 %v2952, %v2992
  %v2994 = vpop.f32.mrf.mxu0
  %v2995 = vadd.f32 %v2954, %v2994
  %v2996 = vpop.f32.mrf.mxu0
  %v2997 = vpop.f32.mrf.mxu0
  %2998 = vdwg.mxu0
  %2999 = vmatprep.subr.bf16.mxu0 %v2304
  %3000 = vmatpush1.bf16.msra.mxu0 %v2303
  %3001 = vmatprep.subr.bf16.mxu0 %v2296
  %3002 = vmatpush1.bf16.msra.mxu0 %v2295
  %3003 = vmatprep.subr.bf16.mxu0 %v2288
  %3004 = vmatpush1.bf16.msra.mxu0 %v2287
  %3005 = vmatprep.subr.bf16.mxu0 %v2280
  %3006 = vmatpush1.bf16.msra.mxu0 %v2279
  %3007 = vmatprep.subr.bf16.mxu0 %v2272
  %3008 = vmatpush1.bf16.msra.mxu0 %v2271
  %3009 = vmatprep.subr.bf16.mxu0 %v2264
  %3010 = vmatpush1.bf16.msra.mxu0 %v2263
  %3011 = vmatprep.subr.bf16.mxu0 %v2256
  %3012 = vmatpush1.bf16.msra.mxu0 %v2255
  %3013 = vmatprep.subr.bf16.mxu0 %v2248
  %3014 = vmatpush1.bf16.msra.mxu0 %v2247
  %3015 = vmatprep.subr.bf16.mxu0 %v2368
  %3016 = vmatpush2.bf16.msra.mxu0 %v2367
  %3017 = vmatprep.subr.bf16.mxu0 %v2360
  %3018 = vmatpush2.bf16.msra.mxu0 %v2359
  %3019 = vmatprep.subr.bf16.mxu0 %v2352
  %3020 = vmatpush2.bf16.msra.mxu0 %v2351
  %3021 = vmatprep.subr.bf16.mxu0 %v2344
  %3022 = vmatpush2.bf16.msra.mxu0 %v2343
  %3023 = vmatprep.subr.bf16.mxu0 %v2336
  %3024 = vmatpush2.bf16.msra.mxu0 %v2335
  %3025 = vmatprep.subr.bf16.mxu0 %v2328
  %3026 = vmatpush2.bf16.msra.mxu0 %v2327
  %3027 = vmatprep.subr.bf16.mxu0 %v2320
  %3028 = vmatpush2.bf16.msra.mxu0 %v2319
  %3029 = vmatprep.subr.bf16.mxu0 %v2312
  %3030 = vmatpush2.bf16.msra.mxu0 %v2311
  %3031 = vmatprep.mubr.bf16.mxu0 %v1214
  %3032 = vmatmul.mubr.bf16.gmra.mxu0 %v1213
  %v3033 = vpop.f32.mrf.mxu0
  %v3034 = vadd.f32 0.0, %v3033
  %v3035 = vpop.f32.mrf.mxu0
  %v3036 = vadd.f32 0.0, %v3035
  %v3037 = vpop.f32.mrf.mxu0
  %v3038 = vpop.f32.mrf.mxu0
  %3039 = vdwg.mxu0
  %3040 = vmatprep.subr.bf16.mxu0 %v2432
  %3041 = vmatpush1.bf16.msra.mxu0 %v2431
  %3042 = vmatprep.subr.bf16.mxu0 %v2424
  %3043 = vmatpush1.bf16.msra.mxu0 %v2423
  %3044 = vmatprep.subr.bf16.mxu0 %v2416
  %3045 = vmatpush1.bf16.msra.mxu0 %v2415
  %3046 = vmatprep.subr.bf16.mxu0 %v2408
  %3047 = vmatpush1.bf16.msra.mxu0 %v2407
  %3048 = vmatprep.subr.bf16.mxu0 %v2400
  %3049 = vmatpush1.bf16.msra.mxu0 %v2399
  %3050 = vmatprep.subr.bf16.mxu0 %v2392
  %3051 = vmatpush1.bf16.msra.mxu0 %v2391
  %3052 = vmatprep.subr.bf16.mxu0 %v2384
  %3053 = vmatpush1.bf16.msra.mxu0 %v2383
  %3054 = vmatprep.subr.bf16.mxu0 %v2376
  %3055 = vmatpush1.bf16.msra.mxu0 %v2375
  %3056 = vmatprep.subr.bf16.mxu0 %v2496
  %3057 = vmatpush2.bf16.msra.mxu0 %v2495
  %3058 = vmatprep.subr.bf16.mxu0 %v2488
  %3059 = vmatpush2.bf16.msra.mxu0 %v2487
  %3060 = vmatprep.subr.bf16.mxu0 %v2480
  %3061 = vmatpush2.bf16.msra.mxu0 %v2479
  %3062 = vmatprep.subr.bf16.mxu0 %v2472
  %3063 = vmatpush2.bf16.msra.mxu0 %v2471
  %3064 = vmatprep.subr.bf16.mxu0 %v2464
  %3065 = vmatpush2.bf16.msra.mxu0 %v2463
  %3066 = vmatprep.subr.bf16.mxu0 %v2456
  %3067 = vmatpush2.bf16.msra.mxu0 %v2455
  %3068 = vmatprep.subr.bf16.mxu0 %v2448
  %3069 = vmatpush2.bf16.msra.mxu0 %v2447
  %3070 = vmatprep.subr.bf16.mxu0 %v2440
  %3071 = vmatpush2.bf16.msra.mxu0 %v2439
  %3072 = vmatprep.mubr.bf16.mxu0 %v1216
  %3073 = vmatmul.mubr.bf16.gmra.mxu0 %v1215
  %v3074 = vpop.f32.mrf.mxu0
  %v3075 = vadd.f32 %v3034, %v3074
  %v3076 = vpop.f32.mrf.mxu0
  %v3077 = vadd.f32 %v3036, %v3076
  %v3078 = vpop.f32.mrf.mxu0
  %v3079 = vpop.f32.mrf.mxu0
  %3080 = vdwg.mxu0
  %v3081 = vsel %vm527, %v2829, 0.0
  %v3082 = vrot.slane %v3081, 4
  %v3083 = vadd.f32 %v3081, %v3082
  %v3084 = vrot.slane %v3083, 2
  %v3085 = vadd.f32 %v3083, %v3084
  %v3086 = vrot.slane %v3085, 1
  %v3087 = vadd.f32 %v3085, %v3086
  %v3088 = vsel %vm527, %v2831, 0.0
  %v3089 = vrot.slane %v3088, 4
  %v3090 = vadd.f32 %v3088, %v3089
  %v3091 = vrot.slane %v3090, 2
  %v3092 = vadd.f32 %v3090, %v3091
  %v3093 = vrot.slane %v3092, 1
  %v3094 = vadd.f32 %v3092, %v3093
  %v3095 = vsel %vm527, %v2911, 0.0
  %v3096 = vrot.slane %v3095, 4
  %v3097 = vadd.f32 %v3095, %v3096
  %v3098 = vrot.slane %v3097, 2
  %v3099 = vadd.f32 %v3097, %v3098
  %v3100 = vrot.slane %v3099, 1
  %v3101 = vadd.f32 %v3099, %v3100
  %v3102 = vsel %vm527, %v2913, 0.0
  %v3103 = vrot.slane %v3102, 4
  %v3104 = vadd.f32 %v3102, %v3103
  %v3105 = vrot.slane %v3104, 2
  %v3106 = vadd.f32 %v3104, %v3105
  %v3107 = vrot.slane %v3106, 1
  %v3108 = vadd.f32 %v3106, %v3107
  %v3109 = vsel %vm527, %v2993, 0.0
  %v3110 = vrot.slane %v3109, 4
  %v3111 = vadd.f32 %v3109, %v3110
  %v3112 = vrot.slane %v3111, 2
  %v3113 = vadd.f32 %v3111, %v3112
  %v3114 = vrot.slane %v3113, 1
  %v3115 = vadd.f32 %v3113, %v3114
  %v3116 = vsel %vm527, %v2995, 0.0
  %v3117 = vrot.slane %v3116, 4
  %v3118 = vadd.f32 %v3116, %v3117
  %v3119 = vrot.slane %v3118, 2
  %v3120 = vadd.f32 %v3118, %v3119
  %v3121 = vrot.slane %v3120, 1
  %v3122 = vadd.f32 %v3120, %v3121
  %v3123 = vsel %vm527, %v3075, 0.0
  %v3124 = vrot.slane %v3123, 4
  %v3125 = vadd.f32 %v3123, %v3124
  %v3126 = vrot.slane %v3125, 2
  %v3127 = vadd.f32 %v3125, %v3126
  %v3128 = vrot.slane %v3127, 1
  %v3129 = vadd.f32 %v3127, %v3128
  %v3130 = vsel %vm527, %v3077, 0.0
  %v3131 = vrot.slane %v3130, 4
  %v3132 = vadd.f32 %v3130, %v3131
  %v3133 = vrot.slane %v3132, 2
  %v3134 = vadd.f32 %v3132, %v3133
  %v3135 = vrot.slane %v3134, 1
  %v3136 = vadd.f32 %v3134, %v3135
  %v3137 = vmul.f32 %v2829, %v2829
  %v3138 = vmul.f32 %v2831, %v2831
  %v3139 = vmul.f32 %v2911, %v2911
  %v3140 = vmul.f32 %v2913, %v2913
  %v3141 = vmul.f32 %v2993, %v2993
  %v3142 = vmul.f32 %v2995, %v2995
  %v3143 = vmul.f32 %v3075, %v3075
  %v3144 = vmul.f32 %v3077, %v3077
  %v3145 = vsel %vm527, %v3137, 0.0
  %v3146 = vrot.slane %v3145, 4
  %v3147 = vadd.f32 %v3145, %v3146
  %v3148 = vrot.slane %v3147, 2
  %v3149 = vadd.f32 %v3147, %v3148
  %v3150 = vrot.slane %v3149, 1
  %v3151 = vadd.f32 %v3149, %v3150
  %v3152 = vsel %vm527, %v3138, 0.0
  %v3153 = vrot.slane %v3152, 4
  %v3154 = vadd.f32 %v3152, %v3153
  %v3155 = vrot.slane %v3154, 2
  %v3156 = vadd.f32 %v3154, %v3155
  %v3157 = vrot.slane %v3156, 1
  %v3158 = vadd.f32 %v3156, %v3157
  %v3159 = vsel %vm527, %v3139, 0.0
  %v3160 = vrot.slane %v3159, 4
  %v3161 = vadd.f32 %v3159, %v3160
  %v3162 = vrot.slane %v3161, 2
  %v3163 = vadd.f32 %v3161, %v3162
  %v3164 = vrot.slane %v3163, 1
  %v3165 = vadd.f32 %v3163, %v3164
  %v3166 = vsel %vm527, %v3140, 0.0
  %v3167 = vrot.slane %v3166, 4
  %v3168 = vadd.f32 %v3166, %v3167
  %v3169 = vrot.slane %v3168, 2
  %v3170 = vadd.f32 %v3168, %v3169
  %v3171 = vrot.slane %v3170, 1
  %v3172 = vadd.f32 %v3170, %v3171
  %v3173 = vsel %vm527, %v3141, 0.0
  %v3174 = vrot.slane %v3173, 4
  %v3175 = vadd.f32 %v3173, %v3174
  %v3176 = vrot.slane %v3175, 2
  %v3177 = vadd.f32 %v3175, %v3176
  %v3178 = vrot.slane %v3177, 1
  %v3179 = vadd.f32 %v3177, %v3178
  %v3180 = vsel %vm527, %v3142, 0.0
  %v3181 = vrot.slane %v3180, 4
  %v3182 = vadd.f32 %v3180, %v3181
  %v3183 = vrot.slane %v3182, 2
  %v3184 = vadd.f32 %v3182, %v3183
  %v3185 = vrot.slane %v3184, 1
  %v3186 = vadd.f32 %v3184, %v3185
  %v3187 = vsel %vm527, %v3143, 0.0
  %v3188 = vrot.slane %v3187, 4
  %v3189 = vadd.f32 %v3187, %v3188
  %v3190 = vrot.slane %v3189, 2
  %v3191 = vadd.f32 %v3189, %v3190
  %v3192 = vrot.slane %v3191, 1
  %v3193 = vadd.f32 %v3191, %v3192
  %v3194 = vsel %vm527, %v3144, 0.0
  %v3195 = vrot.slane %v3194, 4
  %v3196 = vadd.f32 %v3194, %v3195
  %v3197 = vrot.slane %v3196, 2
  %v3198 = vadd.f32 %v3196, %v3197
  %v3199 = vrot.slane %v3198, 1
  %v3200 = vadd.f32 %v3198, %v3199
  %v3201 = vadd.f32 %v3087, %v3094
  %v3202 = vadd.f32 %v3151, %v3158
  %v3203 = vadd.f32 %v3201, %v3101
  %v3204 = vadd.f32 %v3202, %v3165
  %v3205 = vadd.f32 %v3203, %v3108
  %v3206 = vadd.f32 %v3204, %v3172
  %v3207 = vadd.f32 %v3205, %v3115
  %v3208 = vadd.f32 %v3206, %v3179
  %v3209 = vadd.f32 %v3207, %v3122
  %v3210 = vadd.f32 %v3208, %v3186
  %v3211 = vadd.f32 %v3209, %v3129
  %v3212 = vadd.f32 %v3210, %v3193
  %v3213 = vadd.f32 %v3211, %v3136
  %v3214 = vadd.f32 %v3212, %v3200
  %3215 = vrot.lane.b32.xlu0 %v3213, 64
  %v3216 = vpop.permute.xlu0 %3215
  %v3217 = vadd.f32 %v3213, %v3216
  %3218 = vrot.lane.b32.xlu0 %v3214, 64
  %v3219 = vpop.permute.xlu0 %3218
  %v3220 = vadd.f32 %v3214, %v3219
  %v3221 = vmul.f32 %v3217, 0.03125
  %v3222 = vmul.f32 %v3220, 0.03125
  %v3223 = vmul.f32 %v3221, %v3221
  %v3224 = vsub.f32 %v3222, %v3223
  %v3225 = vld [vmem:[%s8] sm:$0x1]
  %v3226 = vadd.f32 %v3224, 1e-05
  %v3227 = vrsqrt.pop %v3226
  %v3228 = vmul.f32 %v3225, %v3227
  %v3229 = vld [vmem:[%s9] sm:$0x1]
  %v3230 = vmul.f32 %v3221, %v3228
  %v3231 = vsub.f32 %v3229, %v3230
  %v3232 = vlaneseq
  %v3233 = vshrl.u32 %v3232, 7
  %v3234 = vsub.s32 0, %v3233
  %v3235 = vrot.slane %v3228, %v3234
  %v3236 = vmul.f32 %v2829, %v3235
  %v3237 = vmul.f32 %v2831, %v3235
  %v3238 = vmul.f32 %v2911, %v3235
  %v3239 = vmul.f32 %v2913, %v3235
  %v3240 = vmul.f32 %v2993, %v3235
  %v3241 = vmul.f32 %v2995, %v3235
  %v3242 = vmul.f32 %v3075, %v3235
  %v3243 = vmul.f32 %v3077, %v3235
  %v3244 = vlaneseq
  %v3245 = vshrl.u32 %v3244, 7
  %v3246 = vsub.s32 0, %v3245
  %v3247 = vrot.slane %v3231, %v3246
  %v3248 = vadd.f32 %v3236, %v3247
  %v3249 = vadd.f32 %v3237, %v3247
  %v3250 = vadd.f32 %v3238, %v3247
  %v3251 = vadd.f32 %v3239, %v3247
  %v3252 = vadd.f32 %v3240, %v3247
  %v3253 = vadd.f32 %v3241, %v3247
  %v3254 = vadd.f32 %v3242, %v3247
  %v3255 = vadd.f32 %v3243, %v3247
  %v3256 = vmax.f32 %v3248, 0.0
  %v3257 = vmax.f32 %v3249, 0.0
  %v3258 = vmax.f32 %v3250, 0.0
  %v3259 = vmax.f32 %v3251, 0.0
  %v3260 = vmax.f32 %v3252, 0.0
  %v3261 = vmax.f32 %v3253, 0.0
  %v3262 = vmax.f32 %v3254, 0.0
  %v3263 = vmax.f32 %v3255, 0.0
  %s3264 = smul.u32 4, 128
  %s3265 = smul.u32 %s3264, 1
  %s3266 = sshll.u32 %s3265, 4
  %3267 = dma.done %s214, %s3266
  %v3268 = vpack.c.bf16 %v3256, %v3256
  %v3269 = vpack.c.bf16 %v3257, %v3257
  %v3270 = vpack.c.bf16 %v3258, %v3258
  %v3271 = vpack.c.bf16 %v3259, %v3259
  %v3272 = vpack.c.bf16 %v3260, %v3260
  %v3273 = vpack.c.bf16 %v3261, %v3261
  %v3274 = vpack.c.bf16 %v3262, %v3262
  %v3275 = vpack.c.bf16 %v3263, %v3263
  %v3276 = vld [vmem:[#allocation5] sm:$0xf]
  %v3277 = vld [vmem:[#allocation5 + $0x4] sm:$0xf]
  %v3278 = vld [vmem:[#allocation5 + $0x8] sm:$0xf]
  %v3279 = vld [vmem:[#allocation5 + $0xc] sm:$0xf]
  %v3280 = vld [vmem:[#allocation5 + $0x10] sm:$0xf]
  %v3281 = vld [vmem:[#allocation5 + $0x14] sm:$0xf]
  %v3282 = vld [vmem:[#allocation5 + $0x18] sm:$0xf]
  %v3283 = vld [vmem:[#allocation5 + $0x1c] sm:$0xf]
  %v3284 = vld [vmem:[#allocation5 + $0x20] sm:$0xf]
  %v3285 = vld [vmem:[#allocation5 + $0x24] sm:$0xf]
  %v3286 = vld [vmem:[#allocation5 + $0x28] sm:$0xf]
  %v3287 = vld [vmem:[#allocation5 + $0x2c] sm:$0xf]
  %v3288 = vld [vmem:[#allocation5 + $0x30] sm:$0xf]
  %v3289 = vld [vmem:[#allocation5 + $0x34] sm:$0xf]
  %v3290 = vld [vmem:[#allocation5 + $0x38] sm:$0xf]
  %v3291 = vld [vmem:[#allocation5 + $0x3c] sm:$0xf]
  %v3292 = vld [vmem:[#allocation5 + $0x40] sm:$0xf]
  %v3293 = vld [vmem:[#allocation5 + $0x44] sm:$0xf]
  %v3294 = vld [vmem:[#allocation5 + $0x48] sm:$0xf]
  %v3295 = vld [vmem:[#allocation5 + $0x4c] sm:$0xf]
  %v3296 = vld [vmem:[#allocation5 + $0x50] sm:$0xf]
  %v3297 = vld [vmem:[#allocation5 + $0x54] sm:$0xf]
  %v3298 = vld [vmem:[#allocation5 + $0x58] sm:$0xf]
  %v3299 = vld [vmem:[#allocation5 + $0x5c] sm:$0xf]
  %v3300 = vld [vmem:[#allocation5 + $0x60] sm:$0xf]
  %v3301 = vld [vmem:[#allocation5 + $0x64] sm:$0xf]
  %v3302 = vld [vmem:[#allocation5 + $0x68] sm:$0xf]
  %v3303 = vld [vmem:[#allocation5 + $0x6c] sm:$0xf]
  %v3304 = vld [vmem:[#allocation5 + $0x70] sm:$0xf]
  %v3305 = vld [vmem:[#allocation5 + $0x74] sm:$0xf]
  %v3306 = vld [vmem:[#allocation5 + $0x78] sm:$0xf]
  %v3307 = vld [vmem:[#allocation5 + $0x7c] sm:$0xf]
  %v3308 = vld [vmem:[#allocation5 + $0x80] sm:$0xf]
  %v3309 = vld [vmem:[#allocation5 + $0x84] sm:$0xf]
  %v3310 = vld [vmem:[#allocation5 + $0x88] sm:$0xf]
  %v3311 = vld [vmem:[#allocation5 + $0x8c] sm:$0xf]
  %v3312 = vld [vmem:[#allocation5 + $0x90] sm:$0xf]
  %v3313 = vld [vmem:[#allocation5 + $0x94] sm:$0xf]
  %v3314 = vld [vmem:[#allocation5 + $0x98] sm:$0xf]
  %v3315 = vld [vmem:[#allocation5 + $0x9c] sm:$0xf]
  %v3316 = vld [vmem:[#allocation5 + $0xa0] sm:$0xf]
  %v3317 = vld [vmem:[#allocation5 + $0xa4] sm:$0xf]
  %v3318 = vld [vmem:[#allocation5 + $0xa8] sm:$0xf]
  %v3319 = vld [vmem:[#allocation5 + $0xac] sm:$0xf]
  %v3320 = vld [vmem:[#allocation5 + $0xb0] sm:$0xf]
  %v3321 = vld [vmem:[#allocation5 + $0xb4] sm:$0xf]
  %v3322 = vld [vmem:[#allocation5 + $0xb8] sm:$0xf]
  %v3323 = vld [vmem:[#allocation5 + $0xbc] sm:$0xf]
  %v3324 = vld [vmem:[#allocation5 + $0xc0] sm:$0xf]
  %v3325 = vld [vmem:[#allocation5 + $0xc4] sm:$0xf]
  %v3326 = vld [vmem:[#allocation5 + $0xc8] sm:$0xf]
  %v3327 = vld [vmem:[#allocation5 + $0xcc] sm:$0xf]
  %v3328 = vld [vmem:[#allocation5 + $0xd0] sm:$0xf]
  %v3329 = vld [vmem:[#allocation5 + $0xd4] sm:$0xf]
  %v3330 = vld [vmem:[#allocation5 + $0xd8] sm:$0xf]
  %v3331 = vld [vmem:[#allocation5 + $0xdc] sm:$0xf]
  %v3332 = vld [vmem:[#allocation5 + $0xe0] sm:$0xf]
  %v3333 = vld [vmem:[#allocation5 + $0xe4] sm:$0xf]
  %v3334 = vld [vmem:[#allocation5 + $0xe8] sm:$0xf]
  %v3335 = vld [vmem:[#allocation5 + $0xec] sm:$0xf]
  %v3336 = vld [vmem:[#allocation5 + $0xf0] sm:$0xf]
  %v3337 = vld [vmem:[#allocation5 + $0xf4] sm:$0xf]
  %v3338 = vld [vmem:[#allocation5 + $0xf8] sm:$0xf]
  %v3339 = vld [vmem:[#allocation5 + $0xfc] sm:$0xf]
  %v3340 = vld [vmem:[#allocation5 + $0x100] sm:$0xf]
  %v3341 = vld [vmem:[#allocation5 + $0x104] sm:$0xf]
  %v3342 = vld [vmem:[#allocation5 + $0x108] sm:$0xf]
  %v3343 = vld [vmem:[#allocation5 + $0x10c] sm:$0xf]
  %v3344 = vld [vmem:[#allocation5 + $0x110] sm:$0xf]
  %v3345 = vld [vmem:[#allocation5 + $0x114] sm:$0xf]
  %v3346 = vld [vmem:[#allocation5 + $0x118] sm:$0xf]
  %v3347 = vld [vmem:[#allocation5 + $0x11c] sm:$0xf]
  %v3348 = vld [vmem:[#allocation5 + $0x120] sm:$0xf]
  %v3349 = vld [vmem:[#allocation5 + $0x124] sm:$0xf]
  %v3350 = vld [vmem:[#allocation5 + $0x128] sm:$0xf]
  %v3351 = vld [vmem:[#allocation5 + $0x12c] sm:$0xf]
  %v3352 = vld [vmem:[#allocation5 + $0x130] sm:$0xf]
  %v3353 = vld [vmem:[#allocation5 + $0x134] sm:$0xf]
  %v3354 = vld [vmem:[#allocation5 + $0x138] sm:$0xf]
  %v3355 = vld [vmem:[#allocation5 + $0x13c] sm:$0xf]
  %v3356 = vld [vmem:[#allocation5 + $0x140] sm:$0xf]
  %v3357 = vld [vmem:[#allocation5 + $0x144] sm:$0xf]
  %v3358 = vld [vmem:[#allocation5 + $0x148] sm:$0xf]
  %v3359 = vld [vmem:[#allocation5 + $0x14c] sm:$0xf]
  %v3360 = vld [vmem:[#allocation5 + $0x150] sm:$0xf]
  %v3361 = vld [vmem:[#allocation5 + $0x154] sm:$0xf]
  %v3362 = vld [vmem:[#allocation5 + $0x158] sm:$0xf]
  %v3363 = vld [vmem:[#allocation5 + $0x15c] sm:$0xf]
  %v3364 = vld [vmem:[#allocation5 + $0x160] sm:$0xf]
  %v3365 = vld [vmem:[#allocation5 + $0x164] sm:$0xf]
  %v3366 = vld [vmem:[#allocation5 + $0x168] sm:$0xf]
  %v3367 = vld [vmem:[#allocation5 + $0x16c] sm:$0xf]
  %v3368 = vld [vmem:[#allocation5 + $0x170] sm:$0xf]
  %v3369 = vld [vmem:[#allocation5 + $0x174] sm:$0xf]
  %v3370 = vld [vmem:[#allocation5 + $0x178] sm:$0xf]
  %v3371 = vld [vmem:[#allocation5 + $0x17c] sm:$0xf]
  %v3372 = vld [vmem:[#allocation5 + $0x180] sm:$0xf]
  %v3373 = vld [vmem:[#allocation5 + $0x184] sm:$0xf]
  %v3374 = vld [vmem:[#allocation5 + $0x188] sm:$0xf]
  %v3375 = vld [vmem:[#allocation5 + $0x18c] sm:$0xf]
  %v3376 = vld [vmem:[#allocation5 + $0x190] sm:$0xf]
  %v3377 = vld [vmem:[#allocation5 + $0x194] sm:$0xf]
  %v3378 = vld [vmem:[#allocation5 + $0x198] sm:$0xf]
  %v3379 = vld [vmem:[#allocation5 + $0x19c] sm:$0xf]
  %v3380 = vld [vmem:[#allocation5 + $0x1a0] sm:$0xf]
  %v3381 = vld [vmem:[#allocation5 + $0x1a4] sm:$0xf]
  %v3382 = vld [vmem:[#allocation5 + $0x1a8] sm:$0xf]
  %v3383 = vld [vmem:[#allocation5 + $0x1ac] sm:$0xf]
  %v3384 = vld [vmem:[#allocation5 + $0x1b0] sm:$0xf]
  %v3385 = vld [vmem:[#allocation5 + $0x1b4] sm:$0xf]
  %v3386 = vld [vmem:[#allocation5 + $0x1b8] sm:$0xf]
  %v3387 = vld [vmem:[#allocation5 + $0x1bc] sm:$0xf]
  %v3388 = vld [vmem:[#allocation5 + $0x1c0] sm:$0xf]
  %v3389 = vld [vmem:[#allocation5 + $0x1c4] sm:$0xf]
  %v3390 = vld [vmem:[#allocation5 + $0x1c8] sm:$0xf]
  %v3391 = vld [vmem:[#allocation5 + $0x1cc] sm:$0xf]
  %v3392 = vld [vmem:[#allocation5 + $0x1d0] sm:$0xf]
  %v3393 = vld [vmem:[#allocation5 + $0x1d4] sm:$0xf]
  %v3394 = vld [vmem:[#allocation5 + $0x1d8] sm:$0xf]
  %v3395 = vld [vmem:[#allocation5 + $0x1dc] sm:$0xf]
  %v3396 = vld [vmem:[#allocation5 + $0x1e0] sm:$0xf]
  %v3397 = vld [vmem:[#allocation5 + $0x1e4] sm:$0xf]
  %v3398 = vld [vmem:[#allocation5 + $0x1e8] sm:$0xf]
  %v3399 = vld [vmem:[#allocation5 + $0x1ec] sm:$0xf]
  %v3400 = vld [vmem:[#allocation5 + $0x1f0] sm:$0xf]
  %v3401 = vld [vmem:[#allocation5 + $0x1f4] sm:$0xf]
  %v3402 = vld [vmem:[#allocation5 + $0x1f8] sm:$0xf]
  %v3403 = vld [vmem:[#allocation5 + $0x1fc] sm:$0xf]
  %v3532 = vunpack.c.l.b16 %v3276
  %v3533 = vunpack.c.l.b16 %v3277
  %v3534 = vunpack.c.l.b16 %v3278
  %v3535 = vunpack.c.l.b16 %v3279
  %v3536 = vunpack.c.l.b16 %v3280
  %v3537 = vunpack.c.l.b16 %v3281
  %v3538 = vunpack.c.l.b16 %v3282
  %v3539 = vunpack.c.l.b16 %v3283
  %v3540 = vunpack.c.l.b16 %v3284
  %v3541 = vunpack.c.l.b16 %v3285
  %v3542 = vunpack.c.l.b16 %v3286
  %v3543 = vunpack.c.l.b16 %v3287
  %v3544 = vunpack.c.l.b16 %v3288
  %v3545 = vunpack.c.l.b16 %v3289
  %v3546 = vunpack.c.l.b16 %v3290
  %v3547 = vunpack.c.l.b16 %v3291
  %v3548 = vunpack.c.l.b16 %v3292
  %v3549 = vunpack.c.l.b16 %v3293
  %v3550 = vunpack.c.l.b16 %v3294
  %v3551 = vunpack.c.l.b16 %v3295
  %v3552 = vunpack.c.l.b16 %v3296
  %v3553 = vunpack.c.l.b16 %v3297
  %v3554 = vunpack.c.l.b16 %v3298
  %v3555 = vunpack.c.l.b16 %v3299
  %v3556 = vunpack.c.l.b16 %v3300
  %v3557 = vunpack.c.l.b16 %v3301
  %v3558 = vunpack.c.l.b16 %v3302
  %v3559 = vunpack.c.l.b16 %v3303
  %v3560 = vunpack.c.l.b16 %v3304
  %v3561 = vunpack.c.l.b16 %v3305
  %v3562 = vunpack.c.l.b16 %v3306
  %v3563 = vunpack.c.l.b16 %v3307
  %v3564 = vunpack.c.l.b16 %v3308
  %v3565 = vunpack.c.l.b16 %v3309
  %v3566 = vunpack.c.l.b16 %v3310
  %v3567 = vunpack.c.l.b16 %v3311
  %v3568 = vunpack.c.l.b16 %v3312
  %v3569 = vunpack.c.l.b16 %v3313
  %v3570 = vunpack.c.l.b16 %v3314
  %v3571 = vunpack.c.l.b16 %v3315
  %v3572 = vunpack.c.l.b16 %v3316
  %v3573 = vunpack.c.l.b16 %v3317
  %v3574 = vunpack.c.l.b16 %v3318
  %v3575 = vunpack.c.l.b16 %v3319
  %v3576 = vunpack.c.l.b16 %v3320
  %v3577 = vunpack.c.l.b16 %v3321
  %v3578 = vunpack.c.l.b16 %v3322
  %v3579 = vunpack.c.l.b16 %v3323
  %v3580 = vunpack.c.l.b16 %v3324
  %v3581 = vunpack.c.l.b16 %v3325
  %v3582 = vunpack.c.l.b16 %v3326
  %v3583 = vunpack.c.l.b16 %v3327
  %v3584 = vunpack.c.l.b16 %v3328
  %v3585 = vunpack.c.l.b16 %v3329
  %v3586 = vunpack.c.l.b16 %v3330
  %v3587 = vunpack.c.l.b16 %v3331
  %v3588 = vunpack.c.l.b16 %v3332
  %v3589 = vunpack.c.l.b16 %v3333
  %v3590 = vunpack.c.l.b16 %v3334
  %v3591 = vunpack.c.l.b16 %v3335
  %v3592 = vunpack.c.l.b16 %v3336
  %v3593 = vunpack.c.l.b16 %v3337
  %v3594 = vunpack.c.l.b16 %v3338
  %v3595 = vunpack.c.l.b16 %v3339
  %v3596 = vunpack.c.l.b16 %v3340
  %v3597 = vunpack.c.l.b16 %v3341
  %v3598 = vunpack.c.l.b16 %v3342
  %v3599 = vunpack.c.l.b16 %v3343
  %v3600 = vunpack.c.l.b16 %v3344
  %v3601 = vunpack.c.l.b16 %v3345
  %v3602 = vunpack.c.l.b16 %v3346
  %v3603 = vunpack.c.l.b16 %v3347
  %v3604 = vunpack.c.l.b16 %v3348
  %v3605 = vunpack.c.l.b16 %v3349
  %v3606 = vunpack.c.l.b16 %v3350
  %v3607 = vunpack.c.l.b16 %v3351
  %v3608 = vunpack.c.l.b16 %v3352
  %v3609 = vunpack.c.l.b16 %v3353
  %v3610 = vunpack.c.l.b16 %v3354
  %v3611 = vunpack.c.l.b16 %v3355
  %v3612 = vunpack.c.l.b16 %v3356
  %v3613 = vunpack.c.l.b16 %v3357
  %v3614 = vunpack.c.l.b16 %v3358
  %v3615 = vunpack.c.l.b16 %v3359
  %v3616 = vunpack.c.l.b16 %v3360
  %v3617 = vunpack.c.l.b16 %v3361
  %v3618 = vunpack.c.l.b16 %v3362
  %v3619 = vunpack.c.l.b16 %v3363
  %v3620 = vunpack.c.l.b16 %v3364
  %v3621 = vunpack.c.l.b16 %v3365
  %v3622 = vunpack.c.l.b16 %v3366
  %v3623 = vunpack.c.l.b16 %v3367
  %v3624 = vunpack.c.l.b16 %v3368
  %v3625 = vunpack.c.l.b16 %v3369
  %v3626 = vunpack.c.l.b16 %v3370
  %v3627 = vunpack.c.l.b16 %v3371
  %v3628 = vunpack.c.l.b16 %v3372
  %v3629 = vunpack.c.l.b16 %v3373
  %v3630 = vunpack.c.l.b16 %v3374
  %v3631 = vunpack.c.l.b16 %v3375
  %v3632 = vunpack.c.l.b16 %v3376
  %v3633 = vunpack.c.l.b16 %v3377
  %v3634 = vunpack.c.l.b16 %v3378
  %v3635 = vunpack.c.l.b16 %v3379
  %v3636 = vunpack.c.l.b16 %v3380
  %v3637 = vunpack.c.l.b16 %v3381
  %v3638 = vunpack.c.l.b16 %v3382
  %v3639 = vunpack.c.l.b16 %v3383
  %v3640 = vunpack.c.l.b16 %v3384
  %v3641 = vunpack.c.l.b16 %v3385
  %v3642 = vunpack.c.l.b16 %v3386
  %v3643 = vunpack.c.l.b16 %v3387
  %v3644 = vunpack.c.l.b16 %v3388
  %v3645 = vunpack.c.l.b16 %v3389
  %v3646 = vunpack.c.l.b16 %v3390
  %v3647 = vunpack.c.l.b16 %v3391
  %v3648 = vunpack.c.l.b16 %v3392
  %v3649 = vunpack.c.l.b16 %v3393
  %v3650 = vunpack.c.l.b16 %v3394
  %v3651 = vunpack.c.l.b16 %v3395
  %v3652 = vunpack.c.l.b16 %v3396
  %v3653 = vunpack.c.l.b16 %v3397
  %v3654 = vunpack.c.l.b16 %v3398
  %v3655 = vunpack.c.l.b16 %v3399
  %v3656 = vunpack.c.l.b16 %v3400
  %v3657 = vunpack.c.l.b16 %v3401
  %v3658 = vunpack.c.l.b16 %v3402
  %v3659 = vunpack.c.l.b16 %v3403
  %v3660 = vpack.c.b16 %v3533, %v3532
  %v3661 = vpack.c.b16 %v3535, %v3534
  %v3662 = vpack.c.b16 %v3537, %v3536
  %v3663 = vpack.c.b16 %v3539, %v3538
  %v3664 = vpack.c.b16 %v3541, %v3540
  %v3665 = vpack.c.b16 %v3543, %v3542
  %v3666 = vpack.c.b16 %v3545, %v3544
  %v3667 = vpack.c.b16 %v3547, %v3546
  %v3668 = vpack.c.b16 %v3549, %v3548
  %v3669 = vpack.c.b16 %v3551, %v3550
  %v3670 = vpack.c.b16 %v3553, %v3552
  %v3671 = vpack.c.b16 %v3555, %v3554
  %v3672 = vpack.c.b16 %v3557, %v3556
  %v3673 = vpack.c.b16 %v3559, %v3558
  %v3674 = vpack.c.b16 %v3561, %v3560
  %v3675 = vpack.c.b16 %v3563, %v3562
  %v3676 = vpack.c.b16 %v3565, %v3564
  %v3677 = vpack.c.b16 %v3567, %v3566
  %v3678 = vpack.c.b16 %v3569, %v3568
  %v3679 = vpack.c.b16 %v3571, %v3570
  %v3680 = vpack.c.b16 %v3573, %v3572
  %v3681 = vpack.c.b16 %v3575, %v3574
  %v3682 = vpack.c.b16 %v3577, %v3576
  %v3683 = vpack.c.b16 %v3579, %v3578
  %v3684 = vpack.c.b16 %v3581, %v3580
  %v3685 = vpack.c.b16 %v3583, %v3582
  %v3686 = vpack.c.b16 %v3585, %v3584
  %v3687 = vpack.c.b16 %v3587, %v3586
  %v3688 = vpack.c.b16 %v3589, %v3588
  %v3689 = vpack.c.b16 %v3591, %v3590
  %v3690 = vpack.c.b16 %v3593, %v3592
  %v3691 = vpack.c.b16 %v3595, %v3594
  %v3692 = vpack.c.b16 %v3597, %v3596
  %v3693 = vpack.c.b16 %v3599, %v3598
  %v3694 = vpack.c.b16 %v3601, %v3600
  %v3695 = vpack.c.b16 %v3603, %v3602
  %v3696 = vpack.c.b16 %v3605, %v3604
  %v3697 = vpack.c.b16 %v3607, %v3606
  %v3698 = vpack.c.b16 %v3609, %v3608
  %v3699 = vpack.c.b16 %v3611, %v3610
  %v3700 = vpack.c.b16 %v3613, %v3612
  %v3701 = vpack.c.b16 %v3615, %v3614
  %v3702 = vpack.c.b16 %v3617, %v3616
  %v3703 = vpack.c.b16 %v3619, %v3618
  %v3704 = vpack.c.b16 %v3621, %v3620
  %v3705 = vpack.c.b16 %v3623, %v3622
  %v3706 = vpack.c.b16 %v3625, %v3624
  %v3707 = vpack.c.b16 %v3627, %v3626
  %v3708 = vpack.c.b16 %v3629, %v3628
  %v3709 = vpack.c.b16 %v3631, %v3630
  %v3710 = vpack.c.b16 %v3633, %v3632
  %v3711 = vpack.c.b16 %v3635, %v3634
  %v3712 = vpack.c.b16 %v3637, %v3636
  %v3713 = vpack.c.b16 %v3639, %v3638
  %v3714 = vpack.c.b16 %v3641, %v3640
  %v3715 = vpack.c.b16 %v3643, %v3642
  %v3716 = vpack.c.b16 %v3645, %v3644
  %v3717 = vpack.c.b16 %v3647, %v3646
  %v3718 = vpack.c.b16 %v3649, %v3648
  %v3719 = vpack.c.b16 %v3651, %v3650
  %v3720 = vpack.c.b16 %v3653, %v3652
  %v3721 = vpack.c.b16 %v3655, %v3654
  %v3722 = vpack.c.b16 %v3657, %v3656
  %v3723 = vpack.c.b16 %v3659, %v3658
  %3788 = vmatprep.subr.bf16.mxu0 0
  %3789 = vmatpush1.bf16.msra.mxu0 %v3667
  %3790 = vmatprep.subr.bf16.mxu0 0
  %3791 = vmatpush1.bf16.msra.mxu0 %v3666
  %3792 = vmatprep.subr.bf16.mxu0 0
  %3793 = vmatpush1.bf16.msra.mxu0 %v3665
  %3794 = vmatprep.subr.bf16.mxu0 0
  %3795 = vmatpush1.bf16.msra.mxu0 %v3664
  %3796 = vmatprep.subr.bf16.mxu0 0
  %3797 = vmatpush1.bf16.msra.mxu0 %v3663
  %3798 = vmatprep.subr.bf16.mxu0 0
  %3799 = vmatpush1.bf16.msra.mxu0 %v3662
  %3800 = vmatprep.subr.bf16.mxu0 0
  %3801 = vmatpush1.bf16.msra.mxu0 %v3661
  %3802 = vmatprep.subr.bf16.mxu0 0
  %3803 = vmatpush1.bf16.msra.mxu0 %v3660
  %3804 = vmatprep.subr.bf16.mxu0 0
  %3805 = vmatpush2.bf16.msra.mxu0 %v3675
  %3806 = vmatprep.subr.bf16.mxu0 0
  %3807 = vmatpush2.bf16.msra.mxu0 %v3674
  %3808 = vmatprep.subr.bf16.mxu0 0
  %3809 = vmatpush2.bf16.msra.mxu0 %v3673
  %3810 = vmatprep.subr.bf16.mxu0 0
  %3811 = vmatpush2.bf16.msra.mxu0 %v3672
  %3812 = vmatprep.subr.bf16.mxu0 0
  %3813 = vmatpush2.bf16.msra.mxu0 %v3671
  %3814 = vmatprep.subr.bf16.mxu0 0
  %3815 = vmatpush2.bf16.msra.mxu0 %v3670
  %3816 = vmatprep.subr.bf16.mxu0 0
  %3817 = vmatpush2.bf16.msra.mxu0 %v3669
  %3818 = vmatprep.subr.bf16.mxu0 0
  %3819 = vmatpush2.bf16.msra.mxu0 %v3668
  %3820 = vmatprep.mubr.bf16.mxu0 %v3269
  %3821 = vmatmul.mubr.bf16.gmra.mxu0 %v3268
  %v3822 = vpop.f32.mrf.mxu0
  %v3823 = vadd.f32 0.0, %v3822
  %v3824 = vpop.f32.mrf.mxu0
  %v3825 = vpop.f32.mrf.mxu0
  %v3826 = vpop.f32.mrf.mxu0
  %3827 = vdwg.mxu0
  %3828 = vmatprep.subr.bf16.mxu0 0
  %3829 = vmatpush1.bf16.msra.mxu0 %v3683
  %3830 = vmatprep.subr.bf16.mxu0 0
  %3831 = vmatpush1.bf16.msra.mxu0 %v3682
  %3832 = vmatprep.subr.bf16.mxu0 0
  %3833 = vmatpush1.bf16.msra.mxu0 %v3681
  %3834 = vmatprep.subr.bf16.mxu0 0
  %3835 = vmatpush1.bf16.msra.mxu0 %v3680
  %3836 = vmatprep.subr.bf16.mxu0 0
  %3837 = vmatpush1.bf16.msra.mxu0 %v3679
  %3838 = vmatprep.subr.bf16.mxu0 0
  %3839 = vmatpush1.bf16.msra.mxu0 %v3678
  %3840 = vmatprep.subr.bf16.mxu0 0
  %3841 = vmatpush1.bf16.msra.mxu0 %v3677
  %3842 = vmatprep.subr.bf16.mxu0 0
  %3843 = vmatpush1.bf16.msra.mxu0 %v3676
  %3844 = vmatprep.subr.bf16.mxu0 0
  %3845 = vmatpush2.bf16.msra.mxu0 %v3691
  %3846 = vmatprep.subr.bf16.mxu0 0
  %3847 = vmatpush2.bf16.msra.mxu0 %v3690
  %3848 = vmatprep.subr.bf16.mxu0 0
  %3849 = vmatpush2.bf16.msra.mxu0 %v3689
  %3850 = vmatprep.subr.bf16.mxu0 0
  %3851 = vmatpush2.bf16.msra.mxu0 %v3688
  %3852 = vmatprep.subr.bf16.mxu0 0
  %3853 = vmatpush2.bf16.msra.mxu0 %v3687
  %3854 = vmatprep.subr.bf16.mxu0 0
  %3855 = vmatpush2.bf16.msra.mxu0 %v3686
  %3856 = vmatprep.subr.bf16.mxu0 0
  %3857 = vmatpush2.bf16.msra.mxu0 %v3685
  %3858 = vmatprep.subr.bf16.mxu0 0
  %3859 = vmatpush2.bf16.msra.mxu0 %v3684
  %3860 = vmatprep.mubr.bf16.mxu0 %v3271
  %3861 = vmatmul.mubr.bf16.gmra.mxu0 %v3270
  %v3862 = vpop.f32.mrf.mxu0
  %v3863 = vadd.f32 %v3823, %v3862
  %v3864 = vpop.f32.mrf.mxu0
  %v3865 = vpop.f32.mrf.mxu0
  %v3866 = vpop.f32.mrf.mxu0
  %3867 = vdwg.mxu0
  %3868 = vmatprep.subr.bf16.mxu0 0
  %3869 = vmatpush1.bf16.msra.mxu0 %v3699
  %3870 = vmatprep.subr.bf16.mxu0 0
  %3871 = vmatpush1.bf16.msra.mxu0 %v3698
  %3872 = vmatprep.subr.bf16.mxu0 0
  %3873 = vmatpush1.bf16.msra.mxu0 %v3697
  %3874 = vmatprep.subr.bf16.mxu0 0
  %3875 = vmatpush1.bf16.msra.mxu0 %v3696
  %3876 = vmatprep.subr.bf16.mxu0 0
  %3877 = vmatpush1.bf16.msra.mxu0 %v3695
  %3878 = vmatprep.subr.bf16.mxu0 0
  %3879 = vmatpush1.bf16.msra.mxu0 %v3694
  %3880 = vmatprep.subr.bf16.mxu0 0
  %3881 = vmatpush1.bf16.msra.mxu0 %v3693
  %3882 = vmatprep.subr.bf16.mxu0 0
  %3883 = vmatpush1.bf16.msra.mxu0 %v3692
  %3884 = vmatprep.subr.bf16.mxu0 0
  %3885 = vmatpush2.bf16.msra.mxu0 %v3707
  %3886 = vmatprep.subr.bf16.mxu0 0
  %3887 = vmatpush2.bf16.msra.mxu0 %v3706
  %3888 = vmatprep.subr.bf16.mxu0 0
  %3889 = vmatpush2.bf16.msra.mxu0 %v3705
  %3890 = vmatprep.subr.bf16.mxu0 0
  %3891 = vmatpush2.bf16.msra.mxu0 %v3704
  %3892 = vmatprep.subr.bf16.mxu0 0
  %3893 = vmatpush2.bf16.msra.mxu0 %v3703
  %3894 = vmatprep.subr.bf16.mxu0 0
  %3895 = vmatpush2.bf16.msra.mxu0 %v3702
  %3896 = vmatprep.subr.bf16.mxu0 0
  %3897 = vmatpush2.bf16.msra.mxu0 %v3701
  %3898 = vmatprep.subr.bf16.mxu0 0
  %3899 = vmatpush2.bf16.msra.mxu0 %v3700
  %3900 = vmatprep.mubr.bf16.mxu0 %v3273
  %3901 = vmatmul.mubr.bf16.gmra.mxu0 %v3272
  %v3902 = vpop.f32.mrf.mxu0
  %v3903 = vadd.f32 %v3863, %v3902
  %v3904 = vpop.f32.mrf.mxu0
  %v3905 = vpop.f32.mrf.mxu0
  %v3906 = vpop.f32.mrf.mxu0
  %3907 = vdwg.mxu0
  %3908 = vmatprep.subr.bf16.mxu0 0
  %3909 = vmatpush1.bf16.msra.mxu0 %v3715
  %3910 = vmatprep.subr.bf16.mxu0 0
  %3911 = vmatpush1.bf16.msra.mxu0 %v3714
  %3912 = vmatprep.subr.bf16.mxu0 0
  %3913 = vmatpush1.bf16.msra.mxu0 %v3713
  %3914 = vmatprep.subr.bf16.mxu0 0
  %3915 = vmatpush1.bf16.msra.mxu0 %v3712
  %3916 = vmatprep.subr.bf16.mxu0 0
  %3917 = vmatpush1.bf16.msra.mxu0 %v3711
  %3918 = vmatprep.subr.bf16.mxu0 0
  %3919 = vmatpush1.bf16.msra.mxu0 %v3710
  %3920 = vmatprep.subr.bf16.mxu0 0
  %3921 = vmatpush1.bf16.msra.mxu0 %v3709
  %3922 = vmatprep.subr.bf16.mxu0 0
  %3923 = vmatpush1.bf16.msra.mxu0 %v3708
  %3924 = vmatprep.subr.bf16.mxu0 0
  %3925 = vmatpush2.bf16.msra.mxu0 %v3723
  %3926 = vmatprep.subr.bf16.mxu0 0
  %3927 = vmatpush2.bf16.msra.mxu0 %v3722
  %3928 = vmatprep.subr.bf16.mxu0 0
  %3929 = vmatpush2.bf16.msra.mxu0 %v3721
  %3930 = vmatprep.subr.bf16.mxu0 0
  %3931 = vmatpush2.bf16.msra.mxu0 %v3720
  %3932 = vmatprep.subr.bf16.mxu0 0
  %3933 = vmatpush2.bf16.msra.mxu0 %v3719
  %3934 = vmatprep.subr.bf16.mxu0 0
  %3935 = vmatpush2.bf16.msra.mxu0 %v3718
  %3936 = vmatprep.subr.bf16.mxu0 0
  %3937 = vmatpush2.bf16.msra.mxu0 %v3717
  %3938 = vmatprep.subr.bf16.mxu0 0
  %3939 = vmatpush2.bf16.msra.mxu0 %v3716
  %3940 = vmatprep.mubr.bf16.mxu0 %v3275
  %3941 = vmatmul.mubr.bf16.gmra.mxu0 %v3274
  %v3942 = vpop.f32.mrf.mxu0
  %v3943 = vadd.f32 %v3903, %v3942
  %v3944 = vpop.f32.mrf.mxu0
  %v3945 = vpop.f32.mrf.mxu0
  %v3946 = vpop.f32.mrf.mxu0
  %3947 = vdwg.mxu0
  %v3948 = vtanh.pop %v3943
  %vm3949 = vcmask 287744
  %3950 = vst.msk [vmem:[%s11] sm:$0x3] %vm3949, %v3948
  // Predicated region
  $region106: #{generator_forward.1} parent=0 // pred_check
    _
  $region107: #{generator_forward.1} parent=0 // pred_check_branch
    %3952 = sbr.rel (0) target = $region109
  $region108: #{generator_forward.1} parent=0 // pred_region
    _
  $region109: #{generator_forward.1} parent=0 // pred_fallthru
    _
  // Predicated region
  $region110: #{generator_forward.1} parent=0 // pred_check
    _
  $region111: #{generator_forward.1} parent=0 // pred_check_branch
    %3954 = sbr.rel (0) target = $region113
  $region112: #{generator_forward.1} parent=0 // pred_region
    _
  $region113: #{generator_forward.1} parent=0 // pred_fallthru
    _
  %3955 = vsyncmov [#allocation6]
  %s3956 = vpop.sfrf %3955
  %p3957 = scmp.eq.s32.totalorder %s3956, 0
  %p3958 = pneg %p3957
  %3960 = shalt.err (%p3958)
  %s3961 = scalar_lea.sflag [#allocation6], 1
  %3962 = vsyncmov %s3961
  %s3963 = vpop.sfrf %3962
  %p3964 = scmp.eq.s32.totalorder %s3963, 0
  %p3965 = pneg %p3964
  %3967 = shalt.err (%p3965)
  %s3968 = scalar_lea.sflag [#allocation6], 2
  %3969 = vsyncmov %s3968
  %s3970 = vpop.sfrf %3969
  %p3971 = scmp.eq.s32.totalorder %s3970, 0
  %p3972 = pneg %p3971
  %3974 = shalt.err (%p3972)

</llo_original>
